<compile_context>
chip_gen: v6e
topology: v6e:2x2x1
jax: 0.10.0
libtpu: 0.0.40
codegen_flags: <defaults>
</compile_context>

<pallas_src>
import jax
import jax.numpy as jnp
from jax.experimental import pallas as pl
from jax.experimental.pallas import tpu as pltpu

D_MODEL = 512
D_FF = 2048


def _pffn_kernel(x_ref, w1_ref, b1_ref, w2_ref, b2_ref, o_ref):
    # x_ref:  (tm, 512)  f32      w1_ref: (512, 2048) bf16   b1_ref: (1, 2048) f32
    # w2_ref: (2048, 512) bf16    b2_ref: (1, 512)    f32    o_ref:  (tm, 512)
    x = x_ref[...].astype(jnp.bfloat16)

    # First matmul: K=512 -> hidden (tm, 2048), f32 accumulation on the MXU.
    h = jnp.dot(x, w1_ref[...], preferred_element_type=jnp.float32)
    # Fused bias + ReLU + cast in a single elementwise pass.
    h = jnp.maximum(h + b1_ref[...], 0.0).astype(jnp.bfloat16)
    # Second matmul: single K=2048 dot — the MXU handles the K-accumulation,
    # no explicit accumulator read-modify-write in VMEM.
    acc = jnp.dot(h, w2_ref[...], preferred_element_type=jnp.float32)

    o_ref[...] = (acc + b2_ref[...]).astype(o_ref.dtype)


def _round_up(v, mult):
    return ((v + mult - 1) // mult) * mult


def _choose_tm(m, tm_max):
    """Pick a row-tile that minimizes padding and keeps >=2 grid steps.

    >=2 steps lets the 'parallel' grid axis shard rows across both v7x
    TensorCores (no effect on v5e/v6e, which have a single TC).
    """
    m8 = max(8, _round_up(m, 8))
    min_steps = 2 if m8 > 8 else 1
    steps = max(min_steps, pl.cdiv(m8, tm_max))
    # Smallest multiple-of-8 tile covering m in `steps` tiles -> minimal padding.
    return _round_up(pl.cdiv(m8, steps), 8)


def _vmem_limit_bytes(tm):
    # Double-buffered x/out tiles (f32) + double-buffered bf16 weights +
    # biases + in-kernel intermediates (h f32, h bf16, x bf16, acc f32).
    tile_io = 2 * 2 * tm * D_MODEL * 4
    weights = 2 * 2 * D_MODEL * D_FF * 2
    biases = 2 * 2 * (D_FF + D_MODEL) * 4
    interm = tm * D_FF * (4 + 2) + tm * D_MODEL * (2 + 4)
    need = tile_io + weights + biases + interm
    # 1.5x margin for compiler scratch/alignment; floor 32 MiB; cap 56 MiB
    # (stays under v7x's 64 MiB physical VMEM).
    return min(56 * 1024 * 1024, max(32 * 1024 * 1024, int(need * 1.5)))


def pffn(x, w1, b1, w2, b2, *, tm_max=512):
    """x: (..., 512). w1: (512, 2048), b1: (2048,), w2: (2048, 512), b2: (512,)."""
    orig_shape = x.shape
    xf = x.reshape(-1, D_MODEL)
    m = xf.shape[0]

    tm = _choose_tm(m, tm_max)
    m_pad = pl.cdiv(m, tm) * tm
    if m_pad != m:
        xf = jnp.pad(xf, ((0, m_pad - m), (0, 0)))

    # bf16 weights for the MXU; biases stay f32 for the f32 accumulators.
    w1b = w1.astype(jnp.bfloat16)
    w2b = w2.astype(jnp.bfloat16)
    b1_2d = b1.reshape(1, D_FF).astype(jnp.float32)
    b2_2d = b2.reshape(1, D_MODEL).astype(jnp.float32)

    flops = 2 * m_pad * D_MODEL * D_FF * 2          # two matmuls
    bytes_accessed = (xf.size * xf.dtype.itemsize   # x in
                      + m_pad * D_MODEL * x.dtype.itemsize   # out
                      + w1b.size * 2 + w2b.size * 2          # bf16 weights
                      + b1_2d.size * 4 + b2_2d.size * 4)

    out = pl.pallas_call(
        _pffn_kernel,
        out_shape=jax.ShapeDtypeStruct((m_pad, D_MODEL), x.dtype),
        grid_spec=pltpu.PrefetchScalarGridSpec(
            num_scalar_prefetch=0,
            grid=(m_pad // tm,),
            in_specs=[
                pl.BlockSpec((tm, D_MODEL), lambda i: (i, 0)),
                # Grid-invariant weights/biases: constant index_map keeps them
                # resident in VMEM (DMA'd once, never re-fetched).
                pl.BlockSpec((D_MODEL, D_FF), lambda i: (0, 0)),
                pl.BlockSpec((1, D_FF), lambda i: (0, 0)),
                pl.BlockSpec((D_FF, D_MODEL), lambda i: (0, 0)),
                pl.BlockSpec((1, D_MODEL), lambda i: (0, 0)),
            ],
            out_specs=pl.BlockSpec((tm, D_MODEL), lambda i: (i, 0)),
        ),
        compiler_params=pltpu.CompilerParams(
            dimension_semantics=("parallel",),
            vmem_limit_bytes=_vmem_limit_bytes(tm),
        ),
        cost_estimate=pl.CostEstimate(
            flops=flops, transcendentals=0, bytes_accessed=bytes_accessed),
    )(xf, w1b, b1_2d, w2b, b2_2d)

    return out[:m].reshape(orig_shape)


def init_params(key):
    # Deterministic init matching nn.Linear shapes (weights stored as (in, out),
    # i.e. the transpose of PyTorch's (out, in) layout).
    k1, k2, k3, k4 = jax.random.split(key, 4)
    s1 = 1.0 / (D_MODEL ** 0.5)
    s2 = 1.0 / (D_FF ** 0.5)
    w1 = jax.random.uniform(k1, (D_MODEL, D_FF), jnp.float32, -s1, s1)
    b1 = jax.random.uniform(k2, (D_FF,), jnp.float32, -s1, s1)
    w2 = jax.random.uniform(k3, (D_FF, D_MODEL), jnp.float32, -s2, s2)
    b2 = jax.random.uniform(k4, (D_MODEL,), jnp.float32, -s2, s2)
    return w1, b1, w2, b2


if __name__ == "__main__":
    key = jax.random.PRNGKey(0)
    kx, kp = jax.random.split(key)

    batch, seq = 2, 8
    x = jax.random.normal(kx, (batch, seq, D_MODEL), jnp.float32)
    w1, b1, w2, b2 = init_params(kp)

    out = jax.block_until_ready(pffn(x, w1, b1, w2, b2))

    # Pure-JAX f32 reference. The kernel runs bf16 matmuls with f32
    # accumulation, so use a tolerance appropriate for bf16 inputs.
    ref = jnp.maximum(x @ w1 + b1, 0.0) @ w2 + b2
    assert out.shape == (batch, seq, D_MODEL)
    assert out.dtype == x.dtype
    max_err = float(jnp.max(jnp.abs(out - ref)))
    assert jnp.allclose(out, ref, atol=5e-2, rtol=5e-2), (
        f"mismatch vs reference (max abs err {max_err})")

    print("KERNEL_OK")
</pallas_src>

<mosaic_0001>
module attributes {stable_mosaic.version = 11 : i64} {
  func.func @_pffn_kernel(%arg0: i32, %arg1: memref<8x512xf32, #tpu.memory_space<vmem>>, %arg2: memref<512x2048xbf16, #tpu.memory_space<vmem>>, %arg3: memref<1x2048xf32, #tpu.memory_space<vmem>>, %arg4: memref<2048x512xbf16, #tpu.memory_space<vmem>>, %arg5: memref<1x512xf32, #tpu.memory_space<vmem>>, %arg6: memref<8x512xf32, #tpu.memory_space<vmem>>) attributes {dimension_semantics = [#tpu.dimension_semantics<parallel>], iteration_bounds = array<i64: 2>, scalar_prefetch = 0 : i64, scratch_operands = 0 : i64, tpu.core_type = #tpu.core_type<tc>, window_params = [{transform_indices = @transform_0, window_bounds = array<i64: 8, 512>}, {pipeline_mode = #tpu.pipeline_mode<synchronous>, transform_indices = @transform_1, window_bounds = array<i64: 512, 2048>}, {pipeline_mode = #tpu.pipeline_mode<synchronous>, transform_indices = @transform_2, window_bounds = array<i64: 1, 2048>}, {pipeline_mode = #tpu.pipeline_mode<synchronous>, transform_indices = @transform_3, window_bounds = array<i64: 2048, 512>}, {pipeline_mode = #tpu.pipeline_mode<synchronous>, transform_indices = @transform_4, window_bounds = array<i64: 1, 512>}, {transform_indices = @transform_5, window_bounds = array<i64: 8, 512>}]} {
    %c0 = arith.constant 0 : index
    %c0_0 = arith.constant 0 : index
    %0 = vector.load %arg1[%c0, %c0_0] : memref<8x512xf32, #tpu.memory_space<vmem>>, vector<8x512xf32>
    %1 = arith.truncf %0 : vector<8x512xf32> to vector<8x512xbf16>
    %c0_1 = arith.constant 0 : index
    %c0_2 = arith.constant 0 : index
    %2 = vector.load %arg2[%c0_1, %c0_2] : memref<512x2048xbf16, #tpu.memory_space<vmem>>, vector<512x2048xbf16>
    %cst = arith.constant dense<0.000000e+00> : vector<8x2048xf32>
    %3 = tpu.matmul %1, %2, %cst {dimension_numbers = #tpu.dot_dimension_numbers<[1], [0], [0], [1], [0, 0, 1, 1], [], []>} : vector<8x512xbf16>, vector<512x2048xbf16>, vector<8x2048xf32> -> vector<8x2048xf32>
    %c0_3 = arith.constant 0 : index
    %c0_4 = arith.constant 0 : index
    %4 = vector.load %arg3[%c0_3, %c0_4] : memref<1x2048xf32, #tpu.memory_space<vmem>>, vector<1x2048xf32>
    %5 = vector.broadcast %4 : vector<1x2048xf32> to vector<8x2048xf32>
    %6 = arith.addf %3, %5 : vector<8x2048xf32>
    %cst_5 = arith.constant 0.000000e+00 : f32
    %7 = vector.broadcast %cst_5 : f32 to vector<8x2048xf32>
    %8 = arith.maximumf %6, %7 : vector<8x2048xf32>
    %9 = arith.truncf %8 : vector<8x2048xf32> to vector<8x2048xbf16>
    %c0_6 = arith.constant 0 : index
    %c0_7 = arith.constant 0 : index
    %10 = vector.load %arg4[%c0_6, %c0_7] : memref<2048x512xbf16, #tpu.memory_space<vmem>>, vector<2048x512xbf16>
    %cst_8 = arith.constant dense<0.000000e+00> : vector<8x512xf32>
    %11 = tpu.matmul %9, %10, %cst_8 {dimension_numbers = #tpu.dot_dimension_numbers<[1], [0], [0], [1], [0, 0, 1, 1], [], []>} : vector<8x2048xbf16>, vector<2048x512xbf16>, vector<8x512xf32> -> vector<8x512xf32>
    %c0_9 = arith.constant 0 : index
    %c0_10 = arith.constant 0 : index
    %12 = vector.load %arg5[%c0_9, %c0_10] : memref<1x512xf32, #tpu.memory_space<vmem>>, vector<1x512xf32>
    %13 = vector.broadcast %12 : vector<1x512xf32> to vector<8x512xf32>
    %14 = arith.addf %11, %13 : vector<8x512xf32>
    %c0_11 = arith.constant 0 : index
    %c0_12 = arith.constant 0 : index
    %15 = vector.load %arg6[%c0_11, %c0_12] : memref<8x512xf32, #tpu.memory_space<vmem>>, vector<8x512xf32>
    tpu.vector_store %arg6[%c0_11, %c0_12], %14 {strides = array<i32>} : memref<8x512xf32, #tpu.memory_space<vmem>>, vector<8x512xf32>,
    return
  }
  func.func @transform_0(%arg0: i32) -> (i32, i32) {
    %c0_i32 = arith.constant 0 : i32
    %c0_i32_0 = arith.constant 0 : i32
    return %arg0, %c0_i32 : i32, i32
  }
  func.func @transform_1(%arg0: i32) -> (i32, i32) {
    %c0_i32 = arith.constant 0 : i32
    %c0_i32_0 = arith.constant 0 : i32
    %c0_i32_1 = arith.constant 0 : i32
    return %c0_i32, %c0_i32_0 : i32, i32
  }
  func.func @transform_2(%arg0: i32) -> (i32, i32) {
    %c0_i32 = arith.constant 0 : i32
    %c0_i32_0 = arith.constant 0 : i32
    %c0_i32_1 = arith.constant 0 : i32
    return %c0_i32, %c0_i32_0 : i32, i32
  }
  func.func @transform_3(%arg0: i32) -> (i32, i32) {
    %c0_i32 = arith.constant 0 : i32
    %c0_i32_0 = arith.constant 0 : i32
    %c0_i32_1 = arith.constant 0 : i32
    return %c0_i32, %c0_i32_0 : i32, i32
  }
  func.func @transform_4(%arg0: i32) -> (i32, i32) {
    %c0_i32 = arith.constant 0 : i32
    %c0_i32_0 = arith.constant 0 : i32
    %c0_i32_1 = arith.constant 0 : i32
    return %c0_i32, %c0_i32_0 : i32, i32
  }
  func.func @transform_5(%arg0: i32) -> (i32, i32) {
    %c0_i32 = arith.constant 0 : i32
    %c0_i32_0 = arith.constant 0 : i32
    return %arg0, %c0_i32 : i32, i32
  }
}

</mosaic_0001>

<llo_original>
// kernel: tpu_custom_call.1
$region0: #{tpu_custom_call.1}
  #allocation0 [shape = 'u32[]', space=smem, size = 0x4, offset = 0x4, fixed_abs, tag = 'smem constant byte address 0x4 - core index']
  #allocation1 [shape = 'u32[144,128]{1,0:T(1,128)}', space=vmem, size = 0x12000, scoped, tag = 'internal scratch']
  %s0 = inlined_call_operand.hbm [shape: f32[16,512], index: 0, kind: input, shape index: {}]
  %s1 = inlined_call_operand.hbm [shape: bf16[512,2048], index: 1, kind: input, shape index: {}]
  %s2 = inlined_call_operand.hbm [shape: f32[1,2048], index: 2, kind: input, shape index: {}]
  %s3 = inlined_call_operand.hbm [shape: bf16[2048,512], index: 3, kind: input, shape index: {}]
  %s4 = inlined_call_operand.hbm [shape: f32[1,512], index: 4, kind: input, shape index: {}]
  %s5 = inlined_call_operand.hbm [shape: f32[16,512], index: 5, kind: output, shape index: {}]
  %s6 = sld [smem:[#allocation0]]
  $region73: #{tpu_custom_call.1} parent=0
    _
  %s8 = ssub.s32 1, %s6
  %s9 = scalar_select 0, %s8, %s6
  $region1: #{tpu_custom_call.1} parent=0
    #allocation2 [shape = 'u8[32768]{0}', space=vmem, size = 0x8000, scoped, tag = 'input window, operand 0']
    #allocation3 [shape = 's32[2]{0}', space=sflag, size = 0x8, scoped, tag = 'scoped memory for tpu_custom_call.1']
    #allocation4 [shape = 's32[2]{0}', space=sflag, size = 0x8, scoped, tag = 'scoped memory for tpu_custom_call.1']
    #allocation5 [shape = 'u8[2097152]{0}', space=vmem, size = 0x200000, scoped, tag = 'input window, operand 1, single buffered']
    #allocation6 [shape = 's32[1]{0}', space=sflag, size = 0x4, scoped, tag = 'scoped memory for tpu_custom_call.1']
    #allocation7 [shape = 'u8[8192]{0}', space=vmem, size = 0x2000, scoped, tag = 'input window, operand 2, single buffered']
    #allocation8 [shape = 'u8[2097152]{0}', space=vmem, size = 0x200000, scoped, tag = 'input window, operand 3, single buffered']
    #allocation9 [shape = 's32[1]{0}', space=sflag, size = 0x4, scoped, tag = 'scoped memory for tpu_custom_call.1']
    #allocation10 [shape = 'u8[2048]{0}', space=vmem, size = 0x800, scoped, tag = 'input window, operand 4, single buffered']
    #allocation11 [shape = 'u8[32768]{0}', space=vmem, size = 0x8000, scoped, tag = 'output window, operand 0']
    %10 = vsyncpa [#allocation3], 0
    %s11 = scalar_lea.sflag [#allocation3], 1
    %12 = vsyncpa %s11, 0
    %13 = vsyncpa [#allocation6], 0
    %14 = vsyncpa [#allocation9], 0
    %15 = vsyncpa [#allocation4], 0
    %s16 = scalar_lea.sflag [#allocation4], 1
    %17 = vsyncpa %s16, 0
    loop: start=0, step=1, limit=4
    $region2: #{tpu_custom_call.1} parent=1 // loop_pre_header
      _
    $region3: #{tpu_custom_call.1} parent=1 // loop_header
      %s19 = sphi 0, %s23
      %p20 = scmp.ge.s32.totalorder %s19, 4
      %s29 = sphi 0, %s31
      %s32 = sphi 0, %s29
      %s33 = sphi 0, %s32
      %s49 = sphi 0, %s33
      %s53 = sphi 0, %s53
      %s55 = sphi 0, %s53
      %s56 = sphi 0, %s55
      %s70 = sphi 0, %s56
      %s74 = sphi 0, %s74
      %s76 = sphi 0, %s74
      %s77 = sphi 0, %s76
      %s91 = sphi 0, %s77
      %s95 = sphi 0, %s95
      %s97 = sphi 0, %s95
      %s98 = sphi 0, %s97
      %s112 = sphi 0, %s98
      %s116 = sphi 0, %s116
      %s118 = sphi 0, %s116
      %s119 = sphi 0, %s118
      %s133 = sphi 0, %s119
      %s139 = sphi 0, %s141
      %s142 = sphi 0, %s139
      %s143 = sphi 0, %s142
      %s159 = sphi 0, %s143
    $region4: #{tpu_custom_call.1} parent=1 // loop_header_branch
      %22 = sbr.rel (%p20) target = $region8
    $region5: #{tpu_custom_call.1} parent=1 // loop_body
      %s24 = ssub.s32 %s19, 1
      %s25 = ssub.s32 %s19, 2
      %s26 = sadd.s32 %s19, 1
      %s27 = ssub.s32 %s19, %s26
      %p28 = scmp.eq.s32.totalorder %s27, 0
      %s30 = sadd.s32 %s29, 1
      %s31 = scalar_select %p28, %s29, %s30
      %p34 = pneg %p28
      %p35 = scmp.eq.s32.totalorder %s19, 1
      %p36 = por %p34, %p35
      %p37 = scmp.ne.s32.totalorder %s29, %s32
      %p38 = scmp.eq.s32.totalorder %s19, 0
      %p39 = por %p37, %p38
      %p40 = scmp.ne.s32.totalorder %s29, %s32
      %p41 = scmp.eq.s32.totalorder %s24, 1
      %p42 = por %p40, %p41
      %p43 = scmp.ne.s32.totalorder %s32, %s33
      %p44 = scmp.eq.s32.totalorder %s24, 0
      %p45 = por %p43, %p44
      %p46 = scmp.ne.s32.totalorder %s32, %s33
      %p47 = scmp.eq.s32.totalorder %s25, 1
      %p48 = por %p46, %p47
      %p50 = scmp.ne.s32.totalorder %s33, %s49
      %p51 = scmp.eq.s32.totalorder %s25, 0
      %p52 = por %p50, %p51
      %s54 = sadd.s32 %s53, 1
      %p57 = scmp.eq.s32.totalorder %s19, 1
      %p58 = scmp.ne.s32.totalorder %s53, %s55
      %p59 = scmp.eq.s32.totalorder %s19, 0
      %p60 = por %p58, %p59
      %p61 = scmp.ne.s32.totalorder %s53, %s55
      %p62 = scmp.eq.s32.totalorder %s24, 1
      %p63 = por %p61, %p62
      %p64 = scmp.ne.s32.totalorder %s55, %s56
      %p65 = scmp.eq.s32.totalorder %s24, 0
      %p66 = por %p64, %p65
      %p67 = scmp.ne.s32.totalorder %s55, %s56
      %p68 = scmp.eq.s32.totalorder %s25, 1
      %p69 = por %p67, %p68
      %p71 = scmp.ne.s32.totalorder %s56, %s70
      %p72 = scmp.eq.s32.totalorder %s25, 0
      %p73 = por %p71, %p72
      %s75 = sadd.s32 %s74, 1
      %p78 = scmp.eq.s32.totalorder %s19, 1
      %p79 = scmp.ne.s32.totalorder %s74, %s76
      %p80 = scmp.eq.s32.totalorder %s19, 0
      %p81 = por %p79, %p80
      %p82 = scmp.ne.s32.totalorder %s74, %s76
      %p83 = scmp.eq.s32.totalorder %s24, 1
      %p84 = por %p82, %p83
      %p85 = scmp.ne.s32.totalorder %s76, %s77
      %p86 = scmp.eq.s32.totalorder %s24, 0
      %p87 = por %p85, %p86
      %p88 = scmp.ne.s32.totalorder %s76, %s77
      %p89 = scmp.eq.s32.totalorder %s25, 1
      %p90 = por %p88, %p89
      %p92 = scmp.ne.s32.totalorder %s77, %s91
      %p93 = scmp.eq.s32.totalorder %s25, 0
      %p94 = por %p92, %p93
      %s96 = sadd.s32 %s95, 1
      %p99 = scmp.eq.s32.totalorder %s19, 1
      %p100 = scmp.ne.s32.totalorder %s95, %s97
      %p101 = scmp.eq.s32.totalorder %s19, 0
      %p102 = por %p100, %p101
      %p103 = scmp.ne.s32.totalorder %s95, %s97
      %p104 = scmp.eq.s32.totalorder %s24, 1
      %p105 = por %p103, %p104
      %p106 = scmp.ne.s32.totalorder %s97, %s98
      %p107 = scmp.eq.s32.totalorder %s24, 0
      %p108 = por %p106, %p107
      %p109 = scmp.ne.s32.totalorder %s97, %s98
      %p110 = scmp.eq.s32.totalorder %s25, 1
      %p111 = por %p109, %p110
      %p113 = scmp.ne.s32.totalorder %s98, %s112
      %p114 = scmp.eq.s32.totalorder %s25, 0
      %p115 = por %p113, %p114
      %s117 = sadd.s32 %s116, 1
      %p120 = scmp.eq.s32.totalorder %s19, 1
      %p121 = scmp.ne.s32.totalorder %s116, %s118
      %p122 = scmp.eq.s32.totalorder %s19, 0
      %p123 = por %p121, %p122
      %p124 = scmp.ne.s32.totalorder %s116, %s118
      %p125 = scmp.eq.s32.totalorder %s24, 1
      %p126 = por %p124, %p125
      %p127 = scmp.ne.s32.totalorder %s118, %s119
      %p128 = scmp.eq.s32.totalorder %s24, 0
      %p129 = por %p127, %p128
      %p130 = scmp.ne.s32.totalorder %s118, %s119
      %p131 = scmp.eq.s32.totalorder %s25, 1
      %p132 = por %p130, %p131
      %p134 = scmp.ne.s32.totalorder %s119, %s133
      %p135 = scmp.eq.s32.totalorder %s25, 0
      %p136 = por %p134, %p135
      %s137 = ssub.s32 %s19, %s26
      %p138 = scmp.eq.s32.totalorder %s137, 0
      %s140 = sadd.s32 %s139, 1
      %s141 = scalar_select %p138, %s139, %s140
      %p144 = pneg %p138
      %p145 = scmp.eq.s32.totalorder %s19, 1
      %p146 = por %p144, %p145
      %p147 = scmp.ne.s32.totalorder %s139, %s142
      %p148 = scmp.eq.s32.totalorder %s19, 0
      %p149 = por %p147, %p148
      %p150 = scmp.ne.s32.totalorder %s139, %s142
      %p151 = scmp.eq.s32.totalorder %s24, 1
      %p152 = por %p150, %p151
      %p153 = scmp.ne.s32.totalorder %s142, %s143
      %p154 = scmp.eq.s32.totalorder %s24, 0
      %p155 = por %p153, %p154
      %p156 = scmp.ne.s32.totalorder %s142, %s143
      %p157 = scmp.eq.s32.totalorder %s25, 1
      %p158 = por %p156, %p157
      %p160 = scmp.ne.s32.totalorder %s143, %s159
      %p161 = scmp.eq.s32.totalorder %s25, 0
      %p162 = por %p160, %p161
      %p163 = scmp.le.s32.totalorder 1, %s19
      %p164 = scmp.lt.s32.totalorder %s19, 3
      %p165 = pnand %p163, %p164
      %p166 = pneg %p165
      // Predicated region
      $region9: #{tpu_custom_call.1} parent=5 // pred_check
        _
      $region10: #{tpu_custom_call.1} parent=5 // pred_check_branch
        %168 = sbr.rel (%p165) target = $region12
      $region11: #{tpu_custom_call.1} parent=5 // pred_region
        %s169 = ssub.s32 %s19, 1
        // Predicated region
        $region13: #{tpu_custom_call.1} parent=11 // pred_check
          %p170 = pneg %p66
        $region14: #{tpu_custom_call.1} parent=11 // pred_check_branch
          %172 = sbr.rel (%p170) target = $region16
        $region15: #{tpu_custom_call.1} parent=11 // pred_region
          %s174 = ssub.s32 65536, 65536
          %175 = vsyncadd [#allocation6], %s174
          %s176 = sshll.u32 [#allocation5], 4
          %s177 = int_to_ptr.vmem [resolvable:$true] %s176
          %182 = dma.hbm_to_vmem [thread:$0]  %s1, 65536, %s177, [#allocation6], 1024, 1024, 64
        $region16: #{tpu_custom_call.1} parent=11 // pred_fallthru
          _
        // Predicated region
        $region17: #{tpu_custom_call.1} parent=11 // pred_check
          %p183 = pneg %p87
        $region18: #{tpu_custom_call.1} parent=11 // pred_check_branch
          %185 = sbr.rel (%p183) target = $region20
        $region19: #{tpu_custom_call.1} parent=11 // pred_region
          %s187 = ssub.s32 256, 256
          %188 = vsyncadd [#allocation6], %s187
          %s190 = sshll.u32 [#allocation7], 4
          %s191 = int_to_ptr.vmem [resolvable:$true] %s190
          %193 = dma.hbm_to_vmem [thread:$0]  %s2, 256, %s191, [#allocation6]
        $region20: #{tpu_custom_call.1} parent=11 // pred_fallthru
          _
        // Predicated region
        $region21: #{tpu_custom_call.1} parent=11 // pred_check
          %p194 = pneg %p108
        $region22: #{tpu_custom_call.1} parent=11 // pred_check_branch
          %196 = sbr.rel (%p194) target = $region24
        $region23: #{tpu_custom_call.1} parent=11 // pred_region
          %s198 = ssub.s32 65536, 65536
          %199 = vsyncadd [#allocation9], %s198
          %s200 = sshll.u32 [#allocation8], 4
          %s201 = int_to_ptr.vmem [resolvable:$true] %s200
          %206 = dma.hbm_to_vmem [thread:$0]  %s3, 65536, %s201, [#allocation9], 256, 256, 16
        $region24: #{tpu_custom_call.1} parent=11 // pred_fallthru
          _
        // Predicated region
        $region25: #{tpu_custom_call.1} parent=11 // pred_check
          %p207 = pneg %p129
        $region26: #{tpu_custom_call.1} parent=11 // pred_check_branch
          %209 = sbr.rel (%p207) target = $region28
        $region27: #{tpu_custom_call.1} parent=11 // pred_region
          %s211 = ssub.s32 64, 64
          %212 = vsyncadd [#allocation9], %s211
          %s214 = sshll.u32 [#allocation10], 4
          %s215 = int_to_ptr.vmem [resolvable:$true] %s214
          %217 = dma.hbm_to_vmem [thread:$0]  %s4, 64, %s215, [#allocation9]
        $region28: #{tpu_custom_call.1} parent=11 // pred_fallthru
          _
      $region12: #{tpu_custom_call.1} parent=5 // pred_fallthru
        _
      %p218 = scmp.lt.s32.totalorder %s19, 2
      // Predicated region
      $region29: #{tpu_custom_call.1} parent=5 // pred_check
        %p219 = pneg %p218
      $region30: #{tpu_custom_call.1} parent=5 // pred_check_branch
        %221 = sbr.rel (%p219) target = $region32
      $region31: #{tpu_custom_call.1} parent=5 // pred_region
        // Predicated region
        $region33: #{tpu_custom_call.1} parent=31 // pred_check
          %p222 = pneg %p39
        $region34: #{tpu_custom_call.1} parent=31 // pred_check_branch
          %224 = sbr.rel (%p222) target = $region36
        $region35: #{tpu_custom_call.1} parent=31 // pred_region
          %s225 = sand.u32 %s29, 1
          %s226 = scalar_lea.sflag [#allocation3], %s225
          %s227 = sand.u32 %s29, 1
          %s228 = smul.addr %s227, 32
          %s229 = scalar_lea.vmem [#allocation2], %s228
          %s231 = ssub.s32 512, 512
          %232 = vsyncadd %s226, %s231
          %s233 = smul.addr %s19, 4
          %s234 = smul.addr %s233, 128
          %s235 = scalar_lea.hbm %s0, %s234
          %s237 = sshll.u32 %s229, 4
          %s238 = int_to_ptr.vmem [resolvable:$true] %s237
          %240 = dma.hbm_to_vmem [thread:$0]  %s235, 512, %s238, %s226
        $region36: #{tpu_custom_call.1} parent=31 // pred_fallthru
          _
      $region32: #{tpu_custom_call.1} parent=5 // pred_fallthru
        _
      %p241 = scmp.le.s32.totalorder 1, %s19
      %p242 = scmp.lt.s32.totalorder %s19, 3
      %p243 = pnand %p241, %p242
      %p244 = pneg %p243
      // Predicated region
      $region37: #{tpu_custom_call.1} parent=5 // pred_check
        _
      $region38: #{tpu_custom_call.1} parent=5 // pred_check_branch
        %246 = sbr.rel (%p243) target = $region40
      $region39: #{tpu_custom_call.1} parent=5 // pred_region
        %s247 = ssub.s32 %s19, 1
        %s248 = sand.u32 %s32, 1
        %s249 = scalar_lea.sflag [#allocation3], %s248
        %s250 = sand.u32 %s32, 1
        %s251 = smul.addr %s250, 32
        %s252 = scalar_lea.vmem [#allocation2], %s251
        // Predicated region
        $region41: #{tpu_custom_call.1} parent=39 // pred_check
          %p253 = pneg %p45
        $region42: #{tpu_custom_call.1} parent=39 // pred_check_branch
          %255 = sbr.rel (%p253) target = $region44
        $region43: #{tpu_custom_call.1} parent=39 // pred_region
          %256 = dma.done %s249, 512
        $region44: #{tpu_custom_call.1} parent=39 // pred_fallthru
          _
        // Predicated region
        $region45: #{tpu_custom_call.1} parent=39 // pred_check
          %p257 = pneg %p66
        $region46: #{tpu_custom_call.1} parent=39 // pred_check_branch
          %259 = sbr.rel (%p257) target = $region48
        $region47: #{tpu_custom_call.1} parent=39 // pred_region
          %260 = dma.done [#allocation6], 65536
        $region48: #{tpu_custom_call.1} parent=39 // pred_fallthru
          _
        // Predicated region
        $region49: #{tpu_custom_call.1} parent=39 // pred_check
          %p261 = pneg %p87
        $region50: #{tpu_custom_call.1} parent=39 // pred_check_branch
          %263 = sbr.rel (%p261) target = $region52
        $region51: #{tpu_custom_call.1} parent=39 // pred_region
          %264 = dma.done [#allocation6], 256
        $region52: #{tpu_custom_call.1} parent=39 // pred_fallthru
          _
        // Predicated region
        $region53: #{tpu_custom_call.1} parent=39 // pred_check
          %p265 = pneg %p108
        $region54: #{tpu_custom_call.1} parent=39 // pred_check_branch
          %267 = sbr.rel (%p265) target = $region56
        $region55: #{tpu_custom_call.1} parent=39 // pred_region
          %268 = dma.done [#allocation9], 65536
        $region56: #{tpu_custom_call.1} parent=39 // pred_fallthru
          _
        // Predicated region
        $region57: #{tpu_custom_call.1} parent=39 // pred_check
          %p269 = pneg %p129
        $region58: #{tpu_custom_call.1} parent=39 // pred_check_branch
          %271 = sbr.rel (%p269) target = $region60
        $region59: #{tpu_custom_call.1} parent=39 // pred_region
          %272 = dma.done [#allocation9], 64
        $region60: #{tpu_custom_call.1} parent=39 // pred_fallthru
          _
        %s273 = sand.u32 %s32, 1
        %s274 = scalar_lea.sflag [#allocation3], %s273
        %s275 = sand.u32 %s32, 1
        %s276 = smul.addr %s275, 32
        %s277 = scalar_lea.vmem [#allocation2], %s276
        %p278 = pneg %p45
        %p279 = pneg %p42
        %p280 = pneg %p66
        %p281 = pneg %p63
        %p282 = pneg %p87
        %p283 = pneg %p84
        %p284 = pneg %p108
        %p285 = pneg %p105
        %p286 = pneg %p129
        %p287 = pneg %p126
        %p288 = pneg %p155
        %p289 = pneg %p152
        %s290 = sand.u32 %s142, 1
        %s291 = scalar_lea.sflag [#allocation4], %s290
        %s292 = sand.u32 %s142, 1
        %s293 = smul.addr %s292, 32
        %s294 = scalar_lea.vmem [#allocation11], %s293
        %v295 = vld [vmem:[%s252] sm:$0xff]
        %v296 = vld [vmem:[%s252 + $0x8] sm:$0xff]
        %v297 = vld [vmem:[%s252 + $0x10] sm:$0xff]
        %v298 = vld [vmem:[%s252 + $0x18] sm:$0xff]
        %v299 = vpack.c.bf16 %v295, %v295
        %v300 = vpack.c.bf16 %v296, %v296
        %v301 = vpack.c.bf16 %v297, %v297
        %v302 = vpack.c.bf16 %v298, %v298
        %v303 = vld [vmem:[#allocation5] sm:$0xff]
        %v304 = vld [vmem:[#allocation5 + $0x8] sm:$0xff]
        %v305 = vld [vmem:[#allocation5 + $0x10] sm:$0xff]
        %v306 = vld [vmem:[#allocation5 + $0x18] sm:$0xff]
        %v307 = vld [vmem:[#allocation5 + $0x20] sm:$0xff]
        %v308 = vld [vmem:[#allocation5 + $0x28] sm:$0xff]
        %v309 = vld [vmem:[#allocation5 + $0x30] sm:$0xff]
        %v310 = vld [vmem:[#allocation5 + $0x38] sm:$0xff]
        %v311 = vld [vmem:[#allocation5 + $0x40] sm:$0xff]
        %v312 = vld [vmem:[#allocation5 + $0x48] sm:$0xff]
        %v313 = vld [vmem:[#allocation5 + $0x50] sm:$0xff]
        %v314 = vld [vmem:[#allocation5 + $0x58] sm:$0xff]
        %v315 = vld [vmem:[#allocation5 + $0x60] sm:$0xff]
        %v316 = vld [vmem:[#allocation5 + $0x68] sm:$0xff]
        %v317 = vld [vmem:[#allocation5 + $0x70] sm:$0xff]
        %v318 = vld [vmem:[#allocation5 + $0x78] sm:$0xff]
        %v319 = vld [vmem:[#allocation5 + $0x80] sm:$0xff]
        %v320 = vld [vmem:[#allocation5 + $0x88] sm:$0xff]
        %v321 = vld [vmem:[#allocation5 + $0x90] sm:$0xff]
        %v322 = vld [vmem:[#allocation5 + $0x98] sm:$0xff]
        %v323 = vld [vmem:[#allocation5 + $0xa0] sm:$0xff]
        %v324 = vld [vmem:[#allocation5 + $0xa8] sm:$0xff]
        %v325 = vld [vmem:[#allocation5 + $0xb0] sm:$0xff]
        %v326 = vld [vmem:[#allocation5 + $0xb8] sm:$0xff]
        %v327 = vld [vmem:[#allocation5 + $0xc0] sm:$0xff]
        %v328 = vld [vmem:[#allocation5 + $0xc8] sm:$0xff]
        %v329 = vld [vmem:[#allocation5 + $0xd0] sm:$0xff]
        %v330 = vld [vmem:[#allocation5 + $0xd8] sm:$0xff]
        %v331 = vld [vmem:[#allocation5 + $0xe0] sm:$0xff]
        %v332 = vld [vmem:[#allocation5 + $0xe8] sm:$0xff]
        %v333 = vld [vmem:[#allocation5 + $0xf0] sm:$0xff]
        %v334 = vld [vmem:[#allocation5 + $0xf8] sm:$0xff]
        %v335 = vld [vmem:[#allocation5 + $0x100] sm:$0xff]
        %v336 = vld [vmem:[#allocation5 + $0x108] sm:$0xff]
        %v337 = vld [vmem:[#allocation5 + $0x110] sm:$0xff]
        %v338 = vld [vmem:[#allocation5 + $0x118] sm:$0xff]
        %v339 = vld [vmem:[#allocation5 + $0x120] sm:$0xff]
        %v340 = vld [vmem:[#allocation5 + $0x128] sm:$0xff]
        %v341 = vld [vmem:[#allocation5 + $0x130] sm:$0xff]
        %v342 = vld [vmem:[#allocation5 + $0x138] sm:$0xff]
        %v343 = vld [vmem:[#allocation5 + $0x140] sm:$0xff]
        %v344 = vld [vmem:[#allocation5 + $0x148] sm:$0xff]
        %v345 = vld [vmem:[#allocation5 + $0x150] sm:$0xff]
        %v346 = vld [vmem:[#allocation5 + $0x158] sm:$0xff]
        %v347 = vld [vmem:[#allocation5 + $0x160] sm:$0xff]
        %v348 = vld [vmem:[#allocation5 + $0x168] sm:$0xff]
        %v349 = vld [vmem:[#allocation5 + $0x170] sm:$0xff]
        %v350 = vld [vmem:[#allocation5 + $0x178] sm:$0xff]
        %v351 = vld [vmem:[#allocation5 + $0x180] sm:$0xff]
        %v352 = vld [vmem:[#allocation5 + $0x188] sm:$0xff]
        %v353 = vld [vmem:[#allocation5 + $0x190] sm:$0xff]
        %v354 = vld [vmem:[#allocation5 + $0x198] sm:$0xff]
        %v355 = vld [vmem:[#allocation5 + $0x1a0] sm:$0xff]
        %v356 = vld [vmem:[#allocation5 + $0x1a8] sm:$0xff]
        %v357 = vld [vmem:[#allocation5 + $0x1b0] sm:$0xff]
        %v358 = vld [vmem:[#allocation5 + $0x1b8] sm:$0xff]
        %v359 = vld [vmem:[#allocation5 + $0x1c0] sm:$0xff]
        %v360 = vld [vmem:[#allocation5 + $0x1c8] sm:$0xff]
        %v361 = vld [vmem:[#allocation5 + $0x1d0] sm:$0xff]
        %v362 = vld [vmem:[#allocation5 + $0x1d8] sm:$0xff]
        %v363 = vld [vmem:[#allocation5 + $0x1e0] sm:$0xff]
        %v364 = vld [vmem:[#allocation5 + $0x1e8] sm:$0xff]
        %v365 = vld [vmem:[#allocation5 + $0x1f0] sm:$0xff]
        %v366 = vld [vmem:[#allocation5 + $0x1f8] sm:$0xff]
        %v367 = vld [vmem:[#allocation5 + $0x200] sm:$0xff]
        %v368 = vld [vmem:[#allocation5 + $0x208] sm:$0xff]
        %v369 = vld [vmem:[#allocation5 + $0x210] sm:$0xff]
        %v370 = vld [vmem:[#allocation5 + $0x218] sm:$0xff]
        %v371 = vld [vmem:[#allocation5 + $0x220] sm:$0xff]
        %v372 = vld [vmem:[#allocation5 + $0x228] sm:$0xff]
        %v373 = vld [vmem:[#allocation5 + $0x230] sm:$0xff]
        %v374 = vld [vmem:[#allocation5 + $0x238] sm:$0xff]
        %v375 = vld [vmem:[#allocation5 + $0x240] sm:$0xff]
        %v376 = vld [vmem:[#allocation5 + $0x248] sm:$0xff]
        %v377 = vld [vmem:[#allocation5 + $0x250] sm:$0xff]
        %v378 = vld [vmem:[#allocation5 + $0x258] sm:$0xff]
        %v379 = vld [vmem:[#allocation5 + $0x260] sm:$0xff]
        %v380 = vld [vmem:[#allocation5 + $0x268] sm:$0xff]
        %v381 = vld [vmem:[#allocation5 + $0x270] sm:$0xff]
        %v382 = vld [vmem:[#allocation5 + $0x278] sm:$0xff]
        %v383 = vld [vmem:[#allocation5 + $0x280] sm:$0xff]
        %v384 = vld [vmem:[#allocation5 + $0x288] sm:$0xff]
        %v385 = vld [vmem:[#allocation5 + $0x290] sm:$0xff]
        %v386 = vld [vmem:[#allocation5 + $0x298] sm:$0xff]
        %v387 = vld [vmem:[#allocation5 + $0x2a0] sm:$0xff]
        %v388 = vld [vmem:[#allocation5 + $0x2a8] sm:$0xff]
        %v389 = vld [vmem:[#allocation5 + $0x2b0] sm:$0xff]
        %v390 = vld [vmem:[#allocation5 + $0x2b8] sm:$0xff]
        %v391 = vld [vmem:[#allocation5 + $0x2c0] sm:$0xff]
        %v392 = vld [vmem:[#allocation5 + $0x2c8] sm:$0xff]
        %v393 = vld [vmem:[#allocation5 + $0x2d0] sm:$0xff]
        %v394 = vld [vmem:[#allocation5 + $0x2d8] sm:$0xff]
        %v395 = vld [vmem:[#allocation5 + $0x2e0] sm:$0xff]
        %v396 = vld [vmem:[#allocation5 + $0x2e8] sm:$0xff]
        %v397 = vld [vmem:[#allocation5 + $0x2f0] sm:$0xff]
        %v398 = vld [vmem:[#allocation5 + $0x2f8] sm:$0xff]
        %v399 = vld [vmem:[#allocation5 + $0x300] sm:$0xff]
        %v400 = vld [vmem:[#allocation5 + $0x308] sm:$0xff]
        %v401 = vld [vmem:[#allocation5 + $0x310] sm:$0xff]
        %v402 = vld [vmem:[#allocation5 + $0x318] sm:$0xff]
        %v403 = vld [vmem:[#allocation5 + $0x320] sm:$0xff]
        %v404 = vld [vmem:[#allocation5 + $0x328] sm:$0xff]
        %v405 = vld [vmem:[#allocation5 + $0x330] sm:$0xff]
        %v406 = vld [vmem:[#allocation5 + $0x338] sm:$0xff]
        %v407 = vld [vmem:[#allocation5 + $0x340] sm:$0xff]
        %v408 = vld [vmem:[#allocation5 + $0x348] sm:$0xff]
        %v409 = vld [vmem:[#allocation5 + $0x350] sm:$0xff]
        %v410 = vld [vmem:[#allocation5 + $0x358] sm:$0xff]
        %v411 = vld [vmem:[#allocation5 + $0x360] sm:$0xff]
        %v412 = vld [vmem:[#allocation5 + $0x368] sm:$0xff]
        %v413 = vld [vmem:[#allocation5 + $0x370] sm:$0xff]
        %v414 = vld [vmem:[#allocation5 + $0x378] sm:$0xff]
        %v415 = vld [vmem:[#allocation5 + $0x380] sm:$0xff]
        %v416 = vld [vmem:[#allocation5 + $0x388] sm:$0xff]
        %v417 = vld [vmem:[#allocation5 + $0x390] sm:$0xff]
        %v418 = vld [vmem:[#allocation5 + $0x398] sm:$0xff]
        %v419 = vld [vmem:[#allocation5 + $0x3a0] sm:$0xff]
        %v420 = vld [vmem:[#allocation5 + $0x3a8] sm:$0xff]
        %v421 = vld [vmem:[#allocation5 + $0x3b0] sm:$0xff]
        %v422 = vld [vmem:[#allocation5 + $0x3b8] sm:$0xff]
        %v423 = vld [vmem:[#allocation5 + $0x3c0] sm:$0xff]
        %v424 = vld [vmem:[#allocation5 + $0x3c8] sm:$0xff]
        %v425 = vld [vmem:[#allocation5 + $0x3d0] sm:$0xff]
        %v426 = vld [vmem:[#allocation5 + $0x3d8] sm:$0xff]
        %v427 = vld [vmem:[#allocation5 + $0x3e0] sm:$0xff]
        %v428 = vld [vmem:[#allocation5 + $0x3e8] sm:$0xff]
        %v429 = vld [vmem:[#allocation5 + $0x3f0] sm:$0xff]
        %v430 = vld [vmem:[#allocation5 + $0x3f8] sm:$0xff]
        %v431 = vld [vmem:[#allocation5 + $0x400] sm:$0xff]
        %v432 = vld [vmem:[#allocation5 + $0x408] sm:$0xff]
        %v433 = vld [vmem:[#allocation5 + $0x410] sm:$0xff]
        %v434 = vld [vmem:[#allocation5 + $0x418] sm:$0xff]
        %v435 = vld [vmem:[#allocation5 + $0x420] sm:$0xff]
        %v436 = vld [vmem:[#allocation5 + $0x428] sm:$0xff]
        %v437 = vld [vmem:[#allocation5 + $0x430] sm:$0xff]
        %v438 = vld [vmem:[#allocation5 + $0x438] sm:$0xff]
        %v439 = vld [vmem:[#allocation5 + $0x440] sm:$0xff]
        %v440 = vld [vmem:[#allocation5 + $0x448] sm:$0xff]
        %v441 = vld [vmem:[#allocation5 + $0x450] sm:$0xff]
        %v442 = vld [vmem:[#allocation5 + $0x458] sm:$0xff]
        %v443 = vld [vmem:[#allocation5 + $0x460] sm:$0xff]
        %v444 = vld [vmem:[#allocation5 + $0x468] sm:$0xff]
        %v445 = vld [vmem:[#allocation5 + $0x470] sm:$0xff]
        %v446 = vld [vmem:[#allocation5 + $0x478] sm:$0xff]
        %v447 = vld [vmem:[#allocation5 + $0x480] sm:$0xff]
        %v448 = vld [vmem:[#allocation5 + $0x488] sm:$0xff]
        %v449 = vld [vmem:[#allocation5 + $0x490] sm:$0xff]
        %v450 = vld [vmem:[#allocation5 + $0x498] sm:$0xff]
        %v451 = vld [vmem:[#allocation5 + $0x4a0] sm:$0xff]
        %v452 = vld [vmem:[#allocation5 + $0x4a8] sm:$0xff]
        %v453 = vld [vmem:[#allocation5 + $0x4b0] sm:$0xff]
        %v454 = vld [vmem:[#allocation5 + $0x4b8] sm:$0xff]
        %v455 = vld [vmem:[#allocation5 + $0x4c0] sm:$0xff]
        %v456 = vld [vmem:[#allocation5 + $0x4c8] sm:$0xff]
        %v457 = vld [vmem:[#allocation5 + $0x4d0] sm:$0xff]
        %v458 = vld [vmem:[#allocation5 + $0x4d8] sm:$0xff]
        %v459 = vld [vmem:[#allocation5 + $0x4e0] sm:$0xff]
        %v460 = vld [vmem:[#allocation5 + $0x4e8] sm:$0xff]
        %v461 = vld [vmem:[#allocation5 + $0x4f0] sm:$0xff]
        %v462 = vld [vmem:[#allocation5 + $0x4f8] sm:$0xff]
        %v463 = vld [vmem:[#allocation5 + $0x500] sm:$0xff]
        %v464 = vld [vmem:[#allocation5 + $0x508] sm:$0xff]
        %v465 = vld [vmem:[#allocation5 + $0x510] sm:$0xff]
        %v466 = vld [vmem:[#allocation5 + $0x518] sm:$0xff]
        %v467 = vld [vmem:[#allocation5 + $0x520] sm:$0xff]
        %v468 = vld [vmem:[#allocation5 + $0x528] sm:$0xff]
        %v469 = vld [vmem:[#allocation5 + $0x530] sm:$0xff]
        %v470 = vld [vmem:[#allocation5 + $0x538] sm:$0xff]
        %v471 = vld [vmem:[#allocation5 + $0x540] sm:$0xff]
        %v472 = vld [vmem:[#allocation5 + $0x548] sm:$0xff]
        %v473 = vld [vmem:[#allocation5 + $0x550] sm:$0xff]
        %v474 = vld [vmem:[#allocation5 + $0x558] sm:$0xff]
        %v475 = vld [vmem:[#allocation5 + $0x560] sm:$0xff]
        %v476 = vld [vmem:[#allocation5 + $0x568] sm:$0xff]
        %v477 = vld [vmem:[#allocation5 + $0x570] sm:$0xff]
        %v478 = vld [vmem:[#allocation5 + $0x578] sm:$0xff]
        %v479 = vld [vmem:[#allocation5 + $0x580] sm:$0xff]
        %v480 = vld [vmem:[#allocation5 + $0x588] sm:$0xff]
        %v481 = vld [vmem:[#allocation5 + $0x590] sm:$0xff]
        %v482 = vld [vmem:[#allocation5 + $0x598] sm:$0xff]
        %v483 = vld [vmem:[#allocation5 + $0x5a0] sm:$0xff]
        %v484 = vld [vmem:[#allocation5 + $0x5a8] sm:$0xff]
        %v485 = vld [vmem:[#allocation5 + $0x5b0] sm:$0xff]
        %v486 = vld [vmem:[#allocation5 + $0x5b8] sm:$0xff]
        %v487 = vld [vmem:[#allocation5 + $0x5c0] sm:$0xff]
        %v488 = vld [vmem:[#allocation5 + $0x5c8] sm:$0xff]
        %v489 = vld [vmem:[#allocation5 + $0x5d0] sm:$0xff]
        %v490 = vld [vmem:[#allocation5 + $0x5d8] sm:$0xff]
        %v491 = vld [vmem:[#allocation5 + $0x5e0] sm:$0xff]
        %v492 = vld [vmem:[#allocation5 + $0x5e8] sm:$0xff]
        %v493 = vld [vmem:[#allocation5 + $0x5f0] sm:$0xff]
        %v494 = vld [vmem:[#allocation5 + $0x5f8] sm:$0xff]
        %v495 = vld [vmem:[#allocation5 + $0x600] sm:$0xff]
        %v496 = vld [vmem:[#allocation5 + $0x608] sm:$0xff]
        %v497 = vld [vmem:[#allocation5 + $0x610] sm:$0xff]
        %v498 = vld [vmem:[#allocation5 + $0x618] sm:$0xff]
        %v499 = vld [vmem:[#allocation5 + $0x620] sm:$0xff]
        %v500 = vld [vmem:[#allocation5 + $0x628] sm:$0xff]
        %v501 = vld [vmem:[#allocation5 + $0x630] sm:$0xff]
        %v502 = vld [vmem:[#allocation5 + $0x638] sm:$0xff]
        %v503 = vld [vmem:[#allocation5 + $0x640] sm:$0xff]
        %v504 = vld [vmem:[#allocation5 + $0x648] sm:$0xff]
        %v505 = vld [vmem:[#allocation5 + $0x650] sm:$0xff]
        %v506 = vld [vmem:[#allocation5 + $0x658] sm:$0xff]
        %v507 = vld [vmem:[#allocation5 + $0x660] sm:$0xff]
        %v508 = vld [vmem:[#allocation5 + $0x668] sm:$0xff]
        %v509 = vld [vmem:[#allocation5 + $0x670] sm:$0xff]
        %v510 = vld [vmem:[#allocation5 + $0x678] sm:$0xff]
        %v511 = vld [vmem:[#allocation5 + $0x680] sm:$0xff]
        %v512 = vld [vmem:[#allocation5 + $0x688] sm:$0xff]
        %v513 = vld [vmem:[#allocation5 + $0x690] sm:$0xff]
        %v514 = vld [vmem:[#allocation5 + $0x698] sm:$0xff]
        %v515 = vld [vmem:[#allocation5 + $0x6a0] sm:$0xff]
        %v516 = vld [vmem:[#allocation5 + $0x6a8] sm:$0xff]
        %v517 = vld [vmem:[#allocation5 + $0x6b0] sm:$0xff]
        %v518 = vld [vmem:[#allocation5 + $0x6b8] sm:$0xff]
        %v519 = vld [vmem:[#allocation5 + $0x6c0] sm:$0xff]
        %v520 = vld [vmem:[#allocation5 + $0x6c8] sm:$0xff]
        %v521 = vld [vmem:[#allocation5 + $0x6d0] sm:$0xff]
        %v522 = vld [vmem:[#allocation5 + $0x6d8] sm:$0xff]
        %v523 = vld [vmem:[#allocation5 + $0x6e0] sm:$0xff]
        %v524 = vld [vmem:[#allocation5 + $0x6e8] sm:$0xff]
        %v525 = vld [vmem:[#allocation5 + $0x6f0] sm:$0xff]
        %v526 = vld [vmem:[#allocation5 + $0x6f8] sm:$0xff]
        %v527 = vld [vmem:[#allocation5 + $0x700] sm:$0xff]
        %v528 = vld [vmem:[#allocation5 + $0x708] sm:$0xff]
        %v529 = vld [vmem:[#allocation5 + $0x710] sm:$0xff]
        %v530 = vld [vmem:[#allocation5 + $0x718] sm:$0xff]
        %v531 = vld [vmem:[#allocation5 + $0x720] sm:$0xff]
        %v532 = vld [vmem:[#allocation5 + $0x728] sm:$0xff]
        %v533 = vld [vmem:[#allocation5 + $0x730] sm:$0xff]
        %v534 = vld [vmem:[#allocation5 + $0x738] sm:$0xff]
        %v535 = vld [vmem:[#allocation5 + $0x740] sm:$0xff]
        %v536 = vld [vmem:[#allocation5 + $0x748] sm:$0xff]
        %v537 = vld [vmem:[#allocation5 + $0x750] sm:$0xff]
        %v538 = vld [vmem:[#allocation5 + $0x758] sm:$0xff]
        %v539 = vld [vmem:[#allocation5 + $0x760] sm:$0xff]
        %v540 = vld [vmem:[#allocation5 + $0x768] sm:$0xff]
        %v541 = vld [vmem:[#allocation5 + $0x770] sm:$0xff]
        %v542 = vld [vmem:[#allocation5 + $0x778] sm:$0xff]
        %v543 = vld [vmem:[#allocation5 + $0x780] sm:$0xff]
        %v544 = vld [vmem:[#allocation5 + $0x788] sm:$0xff]
        %v545 = vld [vmem:[#allocation5 + $0x790] sm:$0xff]
        %v546 = vld [vmem:[#allocation5 + $0x798] sm:$0xff]
        %v547 = vld [vmem:[#allocation5 + $0x7a0] sm:$0xff]
        %v548 = vld [vmem:[#allocation5 + $0x7a8] sm:$0xff]
        %v549 = vld [vmem:[#allocation5 + $0x7b0] sm:$0xff]
        %v550 = vld [vmem:[#allocation5 + $0x7b8] sm:$0xff]
        %v551 = vld [vmem:[#allocation5 + $0x7c0] sm:$0xff]
        %v552 = vld [vmem:[#allocation5 + $0x7c8] sm:$0xff]
        %v553 = vld [vmem:[#allocation5 + $0x7d0] sm:$0xff]
        %v554 = vld [vmem:[#allocation5 + $0x7d8] sm:$0xff]
        %v555 = vld [vmem:[#allocation5 + $0x7e0] sm:$0xff]
        %v556 = vld [vmem:[#allocation5 + $0x7e8] sm:$0xff]
        %v557 = vld [vmem:[#allocation5 + $0x7f0] sm:$0xff]
        %v558 = vld [vmem:[#allocation5 + $0x7f8] sm:$0xff]
        %v559 = vld [vmem:[#allocation5 + $0x800] sm:$0xff]
        %v560 = vld [vmem:[#allocation5 + $0x808] sm:$0xff]
        %v561 = vld [vmem:[#allocation5 + $0x810] sm:$0xff]
        %v562 = vld [vmem:[#allocation5 + $0x818] sm:$0xff]
        %v563 = vld [vmem:[#allocation5 + $0x820] sm:$0xff]
        %v564 = vld [vmem:[#allocation5 + $0x828] sm:$0xff]
        %v565 = vld [vmem:[#allocation5 + $0x830] sm:$0xff]
        %v566 = vld [vmem:[#allocation5 + $0x838] sm:$0xff]
        %v567 = vld [vmem:[#allocation5 + $0x840] sm:$0xff]
        %v568 = vld [vmem:[#allocation5 + $0x848] sm:$0xff]
        %v569 = vld [vmem:[#allocation5 + $0x850] sm:$0xff]
        %v570 = vld [vmem:[#allocation5 + $0x858] sm:$0xff]
        %v571 = vld [vmem:[#allocation5 + $0x860] sm:$0xff]
        %v572 = vld [vmem:[#allocation5 + $0x868] sm:$0xff]
        %v573 = vld [vmem:[#allocation5 + $0x870] sm:$0xff]
        %v574 = vld [vmem:[#allocation5 + $0x878] sm:$0xff]
        %v575 = vld [vmem:[#allocation5 + $0x880] sm:$0xff]
        %v576 = vld [vmem:[#allocation5 + $0x888] sm:$0xff]
        %v577 = vld [vmem:[#allocation5 + $0x890] sm:$0xff]
        %v578 = vld [vmem:[#allocation5 + $0x898] sm:$0xff]
        %v579 = vld [vmem:[#allocation5 + $0x8a0] sm:$0xff]
        %v580 = vld [vmem:[#allocation5 + $0x8a8] sm:$0xff]
        %v581 = vld [vmem:[#allocation5 + $0x8b0] sm:$0xff]
        %v582 = vld [vmem:[#allocation5 + $0x8b8] sm:$0xff]
        %v583 = vld [vmem:[#allocation5 + $0x8c0] sm:$0xff]
        %v584 = vld [vmem:[#allocation5 + $0x8c8] sm:$0xff]
        %v585 = vld [vmem:[#allocation5 + $0x8d0] sm:$0xff]
        %v586 = vld [vmem:[#allocation5 + $0x8d8] sm:$0xff]
        %v587 = vld [vmem:[#allocation5 + $0x8e0] sm:$0xff]
        %v588 = vld [vmem:[#allocation5 + $0x8e8] sm:$0xff]
        %v589 = vld [vmem:[#allocation5 + $0x8f0] sm:$0xff]
        %v590 = vld [vmem:[#allocation5 + $0x8f8] sm:$0xff]
        %v591 = vld [vmem:[#allocation5 + $0x900] sm:$0xff]
        %v592 = vld [vmem:[#allocation5 + $0x908] sm:$0xff]
        %v593 = vld [vmem:[#allocation5 + $0x910] sm:$0xff]
        %v594 = vld [vmem:[#allocation5 + $0x918] sm:$0xff]
        %v595 = vld [vmem:[#allocation5 + $0x920] sm:$0xff]
        %v596 = vld [vmem:[#allocation5 + $0x928] sm:$0xff]
        %v597 = vld [vmem:[#allocation5 + $0x930] sm:$0xff]
        %v598 = vld [vmem:[#allocation5 + $0x938] sm:$0xff]
        %v599 = vld [vmem:[#allocation5 + $0x940] sm:$0xff]
        %v600 = vld [vmem:[#allocation5 + $0x948] sm:$0xff]
        %v601 = vld [vmem:[#allocation5 + $0x950] sm:$0xff]
        %v602 = vld [vmem:[#allocation5 + $0x958] sm:$0xff]
        %v603 = vld [vmem:[#allocation5 + $0x960] sm:$0xff]
        %v604 = vld [vmem:[#allocation5 + $0x968] sm:$0xff]
        %v605 = vld [vmem:[#allocation5 + $0x970] sm:$0xff]
        %v606 = vld [vmem:[#allocation5 + $0x978] sm:$0xff]
        %v607 = vld [vmem:[#allocation5 + $0x980] sm:$0xff]
        %v608 = vld [vmem:[#allocation5 + $0x988] sm:$0xff]
        %v609 = vld [vmem:[#allocation5 + $0x990] sm:$0xff]
        %v610 = vld [vmem:[#allocation5 + $0x998] sm:$0xff]
        %v611 = vld [vmem:[#allocation5 + $0x9a0] sm:$0xff]
        %v612 = vld [vmem:[#allocation5 + $0x9a8] sm:$0xff]
        %v613 = vld [vmem:[#allocation5 + $0x9b0] sm:$0xff]
        %v614 = vld [vmem:[#allocation5 + $0x9b8] sm:$0xff]
        %v615 = vld [vmem:[#allocation5 + $0x9c0] sm:$0xff]
        %v616 = vld [vmem:[#allocation5 + $0x9c8] sm:$0xff]
        %v617 = vld [vmem:[#allocation5 + $0x9d0] sm:$0xff]
        %v618 = vld [vmem:[#allocation5 + $0x9d8] sm:$0xff]
        %v619 = vld [vmem:[#allocation5 + $0x9e0] sm:$0xff]
        %v620 = vld [vmem:[#allocation5 + $0x9e8] sm:$0xff]
        %v621 = vld [vmem:[#allocation5 + $0x9f0] sm:$0xff]
        %v622 = vld [vmem:[#allocation5 + $0x9f8] sm:$0xff]
        %v623 = vld [vmem:[#allocation5 + $0xa00] sm:$0xff]
        %v624 = vld [vmem:[#allocation5 + $0xa08] sm:$0xff]
        %v625 = vld [vmem:[#allocation5 + $0xa10] sm:$0xff]
        %v626 = vld [vmem:[#allocation5 + $0xa18] sm:$0xff]
        %v627 = vld [vmem:[#allocation5 + $0xa20] sm:$0xff]
        %v628 = vld [vmem:[#allocation5 + $0xa28] sm:$0xff]
        %v629 = vld [vmem:[#allocation5 + $0xa30] sm:$0xff]
        %v630 = vld [vmem:[#allocation5 + $0xa38] sm:$0xff]
        %v631 = vld [vmem:[#allocation5 + $0xa40] sm:$0xff]
        %v632 = vld [vmem:[#allocation5 + $0xa48] sm:$0xff]
        %v633 = vld [vmem:[#allocation5 + $0xa50] sm:$0xff]
        %v634 = vld [vmem:[#allocation5 + $0xa58] sm:$0xff]
        %v635 = vld [vmem:[#allocation5 + $0xa60] sm:$0xff]
        %v636 = vld [vmem:[#allocation5 + $0xa68] sm:$0xff]
        %v637 = vld [vmem:[#allocation5 + $0xa70] sm:$0xff]
        %v638 = vld [vmem:[#allocation5 + $0xa78] sm:$0xff]
        %v639 = vld [vmem:[#allocation5 + $0xa80] sm:$0xff]
        %v640 = vld [vmem:[#allocation5 + $0xa88] sm:$0xff]
        %v641 = vld [vmem:[#allocation5 + $0xa90] sm:$0xff]
        %v642 = vld [vmem:[#allocation5 + $0xa98] sm:$0xff]
        %v643 = vld [vmem:[#allocation5 + $0xaa0] sm:$0xff]
        %v644 = vld [vmem:[#allocation5 + $0xaa8] sm:$0xff]
        %v645 = vld [vmem:[#allocation5 + $0xab0] sm:$0xff]
        %v646 = vld [vmem:[#allocation5 + $0xab8] sm:$0xff]
        %v647 = vld [vmem:[#allocation5 + $0xac0] sm:$0xff]
        %v648 = vld [vmem:[#allocation5 + $0xac8] sm:$0xff]
        %v649 = vld [vmem:[#allocation5 + $0xad0] sm:$0xff]
        %v650 = vld [vmem:[#allocation5 + $0xad8] sm:$0xff]
        %v651 = vld [vmem:[#allocation5 + $0xae0] sm:$0xff]
        %v652 = vld [vmem:[#allocation5 + $0xae8] sm:$0xff]
        %v653 = vld [vmem:[#allocation5 + $0xaf0] sm:$0xff]
        %v654 = vld [vmem:[#allocation5 + $0xaf8] sm:$0xff]
        %v655 = vld [vmem:[#allocation5 + $0xb00] sm:$0xff]
        %v656 = vld [vmem:[#allocation5 + $0xb08] sm:$0xff]
        %v657 = vld [vmem:[#allocation5 + $0xb10] sm:$0xff]
        %v658 = vld [vmem:[#allocation5 + $0xb18] sm:$0xff]
        %v659 = vld [vmem:[#allocation5 + $0xb20] sm:$0xff]
        %v660 = vld [vmem:[#allocation5 + $0xb28] sm:$0xff]
        %v661 = vld [vmem:[#allocation5 + $0xb30] sm:$0xff]
        %v662 = vld [vmem:[#allocation5 + $0xb38] sm:$0xff]
        %v663 = vld [vmem:[#allocation5 + $0xb40] sm:$0xff]
        %v664 = vld [vmem:[#allocation5 + $0xb48] sm:$0xff]
        %v665 = vld [vmem:[#allocation5 + $0xb50] sm:$0xff]
        %v666 = vld [vmem:[#allocation5 + $0xb58] sm:$0xff]
        %v667 = vld [vmem:[#allocation5 + $0xb60] sm:$0xff]
        %v668 = vld [vmem:[#allocation5 + $0xb68] sm:$0xff]
        %v669 = vld [vmem:[#allocation5 + $0xb70] sm:$0xff]
        %v670 = vld [vmem:[#allocation5 + $0xb78] sm:$0xff]
        %v671 = vld [vmem:[#allocation5 + $0xb80] sm:$0xff]
        %v672 = vld [vmem:[#allocation5 + $0xb88] sm:$0xff]
        %v673 = vld [vmem:[#allocation5 + $0xb90] sm:$0xff]
        %v674 = vld [vmem:[#allocation5 + $0xb98] sm:$0xff]
        %v675 = vld [vmem:[#allocation5 + $0xba0] sm:$0xff]
        %v676 = vld [vmem:[#allocation5 + $0xba8] sm:$0xff]
        %v677 = vld [vmem:[#allocation5 + $0xbb0] sm:$0xff]
        %v678 = vld [vmem:[#allocation5 + $0xbb8] sm:$0xff]
        %v679 = vld [vmem:[#allocation5 + $0xbc0] sm:$0xff]
        %v680 = vld [vmem:[#allocation5 + $0xbc8] sm:$0xff]
        %v681 = vld [vmem:[#allocation5 + $0xbd0] sm:$0xff]
        %v682 = vld [vmem:[#allocation5 + $0xbd8] sm:$0xff]
        %v683 = vld [vmem:[#allocation5 + $0xbe0] sm:$0xff]
        %v684 = vld [vmem:[#allocation5 + $0xbe8] sm:$0xff]
        %v685 = vld [vmem:[#allocation5 + $0xbf0] sm:$0xff]
        %v686 = vld [vmem:[#allocation5 + $0xbf8] sm:$0xff]
        %v687 = vld [vmem:[#allocation5 + $0xc00] sm:$0xff]
        %v688 = vld [vmem:[#allocation5 + $0xc08] sm:$0xff]
        %v689 = vld [vmem:[#allocation5 + $0xc10] sm:$0xff]
        %v690 = vld [vmem:[#allocation5 + $0xc18] sm:$0xff]
        %v691 = vld [vmem:[#allocation5 + $0xc20] sm:$0xff]
        %v692 = vld [vmem:[#allocation5 + $0xc28] sm:$0xff]
        %v693 = vld [vmem:[#allocation5 + $0xc30] sm:$0xff]
        %v694 = vld [vmem:[#allocation5 + $0xc38] sm:$0xff]
        %v695 = vld [vmem:[#allocation5 + $0xc40] sm:$0xff]
        %v696 = vld [vmem:[#allocation5 + $0xc48] sm:$0xff]
        %v697 = vld [vmem:[#allocation5 + $0xc50] sm:$0xff]
        %v698 = vld [vmem:[#allocation5 + $0xc58] sm:$0xff]
        %v699 = vld [vmem:[#allocation5 + $0xc60] sm:$0xff]
        %v700 = vld [vmem:[#allocation5 + $0xc68] sm:$0xff]
        %v701 = vld [vmem:[#allocation5 + $0xc70] sm:$0xff]
        %v702 = vld [vmem:[#allocation5 + $0xc78] sm:$0xff]
        %v703 = vld [vmem:[#allocation5 + $0xc80] sm:$0xff]
        %v704 = vld [vmem:[#allocation5 + $0xc88] sm:$0xff]
        %v705 = vld [vmem:[#allocation5 + $0xc90] sm:$0xff]
        %v706 = vld [vmem:[#allocation5 + $0xc98] sm:$0xff]
        %v707 = vld [vmem:[#allocation5 + $0xca0] sm:$0xff]
        %v708 = vld [vmem:[#allocation5 + $0xca8] sm:$0xff]
        %v709 = vld [vmem:[#allocation5 + $0xcb0] sm:$0xff]
        %v710 = vld [vmem:[#allocation5 + $0xcb8] sm:$0xff]
        %v711 = vld [vmem:[#allocation5 + $0xcc0] sm:$0xff]
        %v712 = vld [vmem:[#allocation5 + $0xcc8] sm:$0xff]
        %v713 = vld [vmem:[#allocation5 + $0xcd0] sm:$0xff]
        %v714 = vld [vmem:[#allocation5 + $0xcd8] sm:$0xff]
        %v715 = vld [vmem:[#allocation5 + $0xce0] sm:$0xff]
        %v716 = vld [vmem:[#allocation5 + $0xce8] sm:$0xff]
        %v717 = vld [vmem:[#allocation5 + $0xcf0] sm:$0xff]
        %v718 = vld [vmem:[#allocation5 + $0xcf8] sm:$0xff]
        %v719 = vld [vmem:[#allocation5 + $0xd00] sm:$0xff]
        %v720 = vld [vmem:[#allocation5 + $0xd08] sm:$0xff]
        %v721 = vld [vmem:[#allocation5 + $0xd10] sm:$0xff]
        %v722 = vld [vmem:[#allocation5 + $0xd18] sm:$0xff]
        %v723 = vld [vmem:[#allocation5 + $0xd20] sm:$0xff]
        %v724 = vld [vmem:[#allocation5 + $0xd28] sm:$0xff]
        %v725 = vld [vmem:[#allocation5 + $0xd30] sm:$0xff]
        %v726 = vld [vmem:[#allocation5 + $0xd38] sm:$0xff]
        %v727 = vld [vmem:[#allocation5 + $0xd40] sm:$0xff]
        %v728 = vld [vmem:[#allocation5 + $0xd48] sm:$0xff]
        %v729 = vld [vmem:[#allocation5 + $0xd50] sm:$0xff]
        %v730 = vld [vmem:[#allocation5 + $0xd58] sm:$0xff]
        %v731 = vld [vmem:[#allocation5 + $0xd60] sm:$0xff]
        %v732 = vld [vmem:[#allocation5 + $0xd68] sm:$0xff]
        %v733 = vld [vmem:[#allocation5 + $0xd70] sm:$0xff]
        %v734 = vld [vmem:[#allocation5 + $0xd78] sm:$0xff]
        %v735 = vld [vmem:[#allocation5 + $0xd80] sm:$0xff]
        %v736 = vld [vmem:[#allocation5 + $0xd88] sm:$0xff]
        %v737 = vld [vmem:[#allocation5 + $0xd90] sm:$0xff]
        %v738 = vld [vmem:[#allocation5 + $0xd98] sm:$0xff]
        %v739 = vld [vmem:[#allocation5 + $0xda0] sm:$0xff]
        %v740 = vld [vmem:[#allocation5 + $0xda8] sm:$0xff]
        %v741 = vld [vmem:[#allocation5 + $0xdb0] sm:$0xff]
        %v742 = vld [vmem:[#allocation5 + $0xdb8] sm:$0xff]
        %v743 = vld [vmem:[#allocation5 + $0xdc0] sm:$0xff]
        %v744 = vld [vmem:[#allocation5 + $0xdc8] sm:$0xff]
        %v745 = vld [vmem:[#allocation5 + $0xdd0] sm:$0xff]
        %v746 = vld [vmem:[#allocation5 + $0xdd8] sm:$0xff]
        %v747 = vld [vmem:[#allocation5 + $0xde0] sm:$0xff]
        %v748 = vld [vmem:[#allocation5 + $0xde8] sm:$0xff]
        %v749 = vld [vmem:[#allocation5 + $0xdf0] sm:$0xff]
        %v750 = vld [vmem:[#allocation5 + $0xdf8] sm:$0xff]
        %v751 = vld [vmem:[#allocation5 + $0xe00] sm:$0xff]
        %v752 = vld [vmem:[#allocation5 + $0xe08] sm:$0xff]
        %v753 = vld [vmem:[#allocation5 + $0xe10] sm:$0xff]
        %v754 = vld [vmem:[#allocation5 + $0xe18] sm:$0xff]
        %v755 = vld [vmem:[#allocation5 + $0xe20] sm:$0xff]
        %v756 = vld [vmem:[#allocation5 + $0xe28] sm:$0xff]
        %v757 = vld [vmem:[#allocation5 + $0xe30] sm:$0xff]
        %v758 = vld [vmem:[#allocation5 + $0xe38] sm:$0xff]
        %v759 = vld [vmem:[#allocation5 + $0xe40] sm:$0xff]
        %v760 = vld [vmem:[#allocation5 + $0xe48] sm:$0xff]
        %v761 = vld [vmem:[#allocation5 + $0xe50] sm:$0xff]
        %v762 = vld [vmem:[#allocation5 + $0xe58] sm:$0xff]
        %v763 = vld [vmem:[#allocation5 + $0xe60] sm:$0xff]
        %v764 = vld [vmem:[#allocation5 + $0xe68] sm:$0xff]
        %v765 = vld [vmem:[#allocation5 + $0xe70] sm:$0xff]
        %v766 = vld [vmem:[#allocation5 + $0xe78] sm:$0xff]
        %v767 = vld [vmem:[#allocation5 + $0xe80] sm:$0xff]
        %v768 = vld [vmem:[#allocation5 + $0xe88] sm:$0xff]
        %v769 = vld [vmem:[#allocation5 + $0xe90] sm:$0xff]
        %v770 = vld [vmem:[#allocation5 + $0xe98] sm:$0xff]
        %v771 = vld [vmem:[#allocation5 + $0xea0] sm:$0xff]
        %v772 = vld [vmem:[#allocation5 + $0xea8] sm:$0xff]
        %v773 = vld [vmem:[#allocation5 + $0xeb0] sm:$0xff]
        %v774 = vld [vmem:[#allocation5 + $0xeb8] sm:$0xff]
        %v775 = vld [vmem:[#allocation5 + $0xec0] sm:$0xff]
        %v776 = vld [vmem:[#allocation5 + $0xec8] sm:$0xff]
        %v777 = vld [vmem:[#allocation5 + $0xed0] sm:$0xff]
        %v778 = vld [vmem:[#allocation5 + $0xed8] sm:$0xff]
        %v779 = vld [vmem:[#allocation5 + $0xee0] sm:$0xff]
        %v780 = vld [vmem:[#allocation5 + $0xee8] sm:$0xff]
        %v781 = vld [vmem:[#allocation5 + $0xef0] sm:$0xff]
        %v782 = vld [vmem:[#allocation5 + $0xef8] sm:$0xff]
        %v783 = vld [vmem:[#allocation5 + $0xf00] sm:$0xff]
        %v784 = vld [vmem:[#allocation5 + $0xf08] sm:$0xff]
        %v785 = vld [vmem:[#allocation5 + $0xf10] sm:$0xff]
        %v786 = vld [vmem:[#allocation5 + $0xf18] sm:$0xff]
        %v787 = vld [vmem:[#allocation5 + $0xf20] sm:$0xff]
        %v788 = vld [vmem:[#allocation5 + $0xf28] sm:$0xff]
        %v789 = vld [vmem:[#allocation5 + $0xf30] sm:$0xff]
        %v790 = vld [vmem:[#allocation5 + $0xf38] sm:$0xff]
        %v791 = vld [vmem:[#allocation5 + $0xf40] sm:$0xff]
        %v792 = vld [vmem:[#allocation5 + $0xf48] sm:$0xff]
        %v793 = vld [vmem:[#allocation5 + $0xf50] sm:$0xff]
        %v794 = vld [vmem:[#allocation5 + $0xf58] sm:$0xff]
        %v795 = vld [vmem:[#allocation5 + $0xf60] sm:$0xff]
        %v796 = vld [vmem:[#allocation5 + $0xf68] sm:$0xff]
        %v797 = vld [vmem:[#allocation5 + $0xf70] sm:$0xff]
        %v798 = vld [vmem:[#allocation5 + $0xf78] sm:$0xff]
        %v799 = vld [vmem:[#allocation5 + $0xf80] sm:$0xff]
        %v800 = vld [vmem:[#allocation5 + $0xf88] sm:$0xff]
        %v801 = vld [vmem:[#allocation5 + $0xf90] sm:$0xff]
        %v802 = vld [vmem:[#allocation5 + $0xf98] sm:$0xff]
        %v803 = vld [vmem:[#allocation5 + $0xfa0] sm:$0xff]
        %v804 = vld [vmem:[#allocation5 + $0xfa8] sm:$0xff]
        %v805 = vld [vmem:[#allocation5 + $0xfb0] sm:$0xff]
        %v806 = vld [vmem:[#allocation5 + $0xfb8] sm:$0xff]
        %v807 = vld [vmem:[#allocation5 + $0xfc0] sm:$0xff]
        %v808 = vld [vmem:[#allocation5 + $0xfc8] sm:$0xff]
        %v809 = vld [vmem:[#allocation5 + $0xfd0] sm:$0xff]
        %v810 = vld [vmem:[#allocation5 + $0xfd8] sm:$0xff]
        %v811 = vld [vmem:[#allocation5 + $0xfe0] sm:$0xff]
        %v812 = vld [vmem:[#allocation5 + $0xfe8] sm:$0xff]
        %v813 = vld [vmem:[#allocation5 + $0xff0] sm:$0xff]
        %v814 = vld [vmem:[#allocation5 + $0xff8] sm:$0xff]
        %v815 = vld [vmem:[#allocation7] sm:$0xff]
        %v816 = vld [vmem:[#allocation7 + $0x8] sm:$0xff]
        %v819 = vlaneseq
        %v820 = vshrl.u32 %v819, 7
        %v821 = vsub.s32 0, %v820
        %v822 = vrot.slane %v815, %v821
        %v823 = vlaneseq
        %v824 = vshrl.u32 %v823, 7
        %v825 = vsub.s32 1, %v824
        %v826 = vrot.slane %v815, %v825
        %v827 = vlaneseq
        %v828 = vshrl.u32 %v827, 7
        %v829 = vsub.s32 2, %v828
        %v830 = vrot.slane %v815, %v829
        %v831 = vlaneseq
        %v832 = vshrl.u32 %v831, 7
        %v833 = vsub.s32 3, %v832
        %v834 = vrot.slane %v815, %v833
        %v835 = vlaneseq
        %v836 = vshrl.u32 %v835, 7
        %v837 = vsub.s32 4, %v836
        %v838 = vrot.slane %v815, %v837
        %v839 = vlaneseq
        %v840 = vshrl.u32 %v839, 7
        %v841 = vsub.s32 5, %v840
        %v842 = vrot.slane %v815, %v841
        %v843 = vlaneseq
        %v844 = vshrl.u32 %v843, 7
        %v845 = vsub.s32 6, %v844
        %v846 = vrot.slane %v815, %v845
        %v847 = vlaneseq
        %v848 = vshrl.u32 %v847, 7
        %v849 = vsub.s32 7, %v848
        %v850 = vrot.slane %v815, %v849
        %v851 = vlaneseq
        %v852 = vshrl.u32 %v851, 7
        %v853 = vsub.s32 0, %v852
        %v854 = vrot.slane %v816, %v853
        %v855 = vlaneseq
        %v856 = vshrl.u32 %v855, 7
        %v857 = vsub.s32 1, %v856
        %v858 = vrot.slane %v816, %v857
        %v859 = vlaneseq
        %v860 = vshrl.u32 %v859, 7
        %v861 = vsub.s32 2, %v860
        %v862 = vrot.slane %v816, %v861
        %v863 = vlaneseq
        %v864 = vshrl.u32 %v863, 7
        %v865 = vsub.s32 3, %v864
        %v866 = vrot.slane %v816, %v865
        %v867 = vlaneseq
        %v868 = vshrl.u32 %v867, 7
        %v869 = vsub.s32 4, %v868
        %v870 = vrot.slane %v816, %v869
        %v871 = vlaneseq
        %v872 = vshrl.u32 %v871, 7
        %v873 = vsub.s32 5, %v872
        %v874 = vrot.slane %v816, %v873
        %v875 = vlaneseq
        %v876 = vshrl.u32 %v875, 7
        %v877 = vsub.s32 6, %v876
        %v878 = vrot.slane %v816, %v877
        %v879 = vlaneseq
        %v880 = vshrl.u32 %v879, 7
        %v881 = vsub.s32 7, %v880
        %v882 = vrot.slane %v816, %v881
        %v1411 = vunpack.c.l.b16 %v303
        %v1412 = vunpack.c.h.b16 %v303
        %v1413 = vunpack.c.l.b16 %v304
        %v1414 = vunpack.c.h.b16 %v304
        %v1415 = vunpack.c.l.b16 %v305
        %v1416 = vunpack.c.h.b16 %v305
        %v1417 = vunpack.c.l.b16 %v306
        %v1418 = vunpack.c.h.b16 %v306
        %v1419 = vunpack.c.l.b16 %v307
        %v1420 = vunpack.c.h.b16 %v307
        %v1421 = vunpack.c.l.b16 %v308
        %v1422 = vunpack.c.h.b16 %v308
        %v1423 = vunpack.c.l.b16 %v309
        %v1424 = vunpack.c.h.b16 %v309
        %v1425 = vunpack.c.l.b16 %v310
        %v1426 = vunpack.c.h.b16 %v310
        %v1427 = vunpack.c.l.b16 %v311
        %v1428 = vunpack.c.h.b16 %v311
        %v1429 = vunpack.c.l.b16 %v312
        %v1430 = vunpack.c.h.b16 %v312
        %v1431 = vunpack.c.l.b16 %v313
        %v1432 = vunpack.c.h.b16 %v313
        %v1433 = vunpack.c.l.b16 %v314
        %v1434 = vunpack.c.h.b16 %v314
        %v1435 = vunpack.c.l.b16 %v315
        %v1436 = vunpack.c.h.b16 %v315
        %v1437 = vunpack.c.l.b16 %v316
        %v1438 = vunpack.c.h.b16 %v316
        %v1439 = vunpack.c.l.b16 %v317
        %v1440 = vunpack.c.h.b16 %v317
        %v1441 = vunpack.c.l.b16 %v318
        %v1442 = vunpack.c.h.b16 %v318
        %v1443 = vunpack.c.l.b16 %v319
        %v1444 = vunpack.c.h.b16 %v319
        %v1445 = vunpack.c.l.b16 %v320
        %v1446 = vunpack.c.h.b16 %v320
        %v1447 = vunpack.c.l.b16 %v321
        %v1448 = vunpack.c.h.b16 %v321
        %v1449 = vunpack.c.l.b16 %v322
        %v1450 = vunpack.c.h.b16 %v322
        %v1451 = vunpack.c.l.b16 %v323
        %v1452 = vunpack.c.h.b16 %v323
        %v1453 = vunpack.c.l.b16 %v324
        %v1454 = vunpack.c.h.b16 %v324
        %v1455 = vunpack.c.l.b16 %v325
        %v1456 = vunpack.c.h.b16 %v325
        %v1457 = vunpack.c.l.b16 %v326
        %v1458 = vunpack.c.h.b16 %v326
        %v1459 = vunpack.c.l.b16 %v327
        %v1460 = vunpack.c.h.b16 %v327
        %v1461 = vunpack.c.l.b16 %v328
        %v1462 = vunpack.c.h.b16 %v328
        %v1463 = vunpack.c.l.b16 %v329
        %v1464 = vunpack.c.h.b16 %v329
        %v1465 = vunpack.c.l.b16 %v330
        %v1466 = vunpack.c.h.b16 %v330
        %v1467 = vunpack.c.l.b16 %v331
        %v1468 = vunpack.c.h.b16 %v331
        %v1469 = vunpack.c.l.b16 %v332
        %v1470 = vunpack.c.h.b16 %v332
        %v1471 = vunpack.c.l.b16 %v333
        %v1472 = vunpack.c.h.b16 %v333
        %v1473 = vunpack.c.l.b16 %v334
        %v1474 = vunpack.c.h.b16 %v334
        %v1475 = vunpack.c.l.b16 %v335
        %v1476 = vunpack.c.h.b16 %v335
        %v1477 = vunpack.c.l.b16 %v336
        %v1478 = vunpack.c.h.b16 %v336
        %v1479 = vunpack.c.l.b16 %v337
        %v1480 = vunpack.c.h.b16 %v337
        %v1481 = vunpack.c.l.b16 %v338
        %v1482 = vunpack.c.h.b16 %v338
        %v1483 = vunpack.c.l.b16 %v339
        %v1484 = vunpack.c.h.b16 %v339
        %v1485 = vunpack.c.l.b16 %v340
        %v1486 = vunpack.c.h.b16 %v340
        %v1487 = vunpack.c.l.b16 %v341
        %v1488 = vunpack.c.h.b16 %v341
        %v1489 = vunpack.c.l.b16 %v342
        %v1490 = vunpack.c.h.b16 %v342
        %v1491 = vunpack.c.l.b16 %v343
        %v1492 = vunpack.c.h.b16 %v343
        %v1493 = vunpack.c.l.b16 %v344
        %v1494 = vunpack.c.h.b16 %v344
        %v1495 = vunpack.c.l.b16 %v345
        %v1496 = vunpack.c.h.b16 %v345
        %v1497 = vunpack.c.l.b16 %v346
        %v1498 = vunpack.c.h.b16 %v346
        %v1499 = vunpack.c.l.b16 %v347
        %v1500 = vunpack.c.h.b16 %v347
        %v1501 = vunpack.c.l.b16 %v348
        %v1502 = vunpack.c.h.b16 %v348
        %v1503 = vunpack.c.l.b16 %v349
        %v1504 = vunpack.c.h.b16 %v349
        %v1505 = vunpack.c.l.b16 %v350
        %v1506 = vunpack.c.h.b16 %v350
        %v1507 = vunpack.c.l.b16 %v351
        %v1508 = vunpack.c.h.b16 %v351
        %v1509 = vunpack.c.l.b16 %v352
        %v1510 = vunpack.c.h.b16 %v352
        %v1511 = vunpack.c.l.b16 %v353
        %v1512 = vunpack.c.h.b16 %v353
        %v1513 = vunpack.c.l.b16 %v354
        %v1514 = vunpack.c.h.b16 %v354
        %v1515 = vunpack.c.l.b16 %v355
        %v1516 = vunpack.c.h.b16 %v355
        %v1517 = vunpack.c.l.b16 %v356
        %v1518 = vunpack.c.h.b16 %v356
        %v1519 = vunpack.c.l.b16 %v357
        %v1520 = vunpack.c.h.b16 %v357
        %v1521 = vunpack.c.l.b16 %v358
        %v1522 = vunpack.c.h.b16 %v358
        %v1523 = vunpack.c.l.b16 %v359
        %v1524 = vunpack.c.h.b16 %v359
        %v1525 = vunpack.c.l.b16 %v360
        %v1526 = vunpack.c.h.b16 %v360
        %v1527 = vunpack.c.l.b16 %v361
        %v1528 = vunpack.c.h.b16 %v361
        %v1529 = vunpack.c.l.b16 %v362
        %v1530 = vunpack.c.h.b16 %v362
        %v1531 = vunpack.c.l.b16 %v363
        %v1532 = vunpack.c.h.b16 %v363
        %v1533 = vunpack.c.l.b16 %v364
        %v1534 = vunpack.c.h.b16 %v364
        %v1535 = vunpack.c.l.b16 %v365
        %v1536 = vunpack.c.h.b16 %v365
        %v1537 = vunpack.c.l.b16 %v366
        %v1538 = vunpack.c.h.b16 %v366
        %v1539 = vunpack.c.l.b16 %v367
        %v1540 = vunpack.c.h.b16 %v367
        %v1541 = vunpack.c.l.b16 %v368
        %v1542 = vunpack.c.h.b16 %v368
        %v1543 = vunpack.c.l.b16 %v369
        %v1544 = vunpack.c.h.b16 %v369
        %v1545 = vunpack.c.l.b16 %v370
        %v1546 = vunpack.c.h.b16 %v370
        %v1547 = vunpack.c.l.b16 %v371
        %v1548 = vunpack.c.h.b16 %v371
        %v1549 = vunpack.c.l.b16 %v372
        %v1550 = vunpack.c.h.b16 %v372
        %v1551 = vunpack.c.l.b16 %v373
        %v1552 = vunpack.c.h.b16 %v373
        %v1553 = vunpack.c.l.b16 %v374
        %v1554 = vunpack.c.h.b16 %v374
        %v1555 = vunpack.c.l.b16 %v375
        %v1556 = vunpack.c.h.b16 %v375
        %v1557 = vunpack.c.l.b16 %v376
        %v1558 = vunpack.c.h.b16 %v376
        %v1559 = vunpack.c.l.b16 %v377
        %v1560 = vunpack.c.h.b16 %v377
        %v1561 = vunpack.c.l.b16 %v378
        %v1562 = vunpack.c.h.b16 %v378
        %v1563 = vunpack.c.l.b16 %v379
        %v1564 = vunpack.c.h.b16 %v379
        %v1565 = vunpack.c.l.b16 %v380
        %v1566 = vunpack.c.h.b16 %v380
        %v1567 = vunpack.c.l.b16 %v381
        %v1568 = vunpack.c.h.b16 %v381
        %v1569 = vunpack.c.l.b16 %v382
        %v1570 = vunpack.c.h.b16 %v382
        %v1571 = vunpack.c.l.b16 %v383
        %v1572 = vunpack.c.h.b16 %v383
        %v1573 = vunpack.c.l.b16 %v384
        %v1574 = vunpack.c.h.b16 %v384
        %v1575 = vunpack.c.l.b16 %v385
        %v1576 = vunpack.c.h.b16 %v385
        %v1577 = vunpack.c.l.b16 %v386
        %v1578 = vunpack.c.h.b16 %v386
        %v1579 = vunpack.c.l.b16 %v387
        %v1580 = vunpack.c.h.b16 %v387
        %v1581 = vunpack.c.l.b16 %v388
        %v1582 = vunpack.c.h.b16 %v388
        %v1583 = vunpack.c.l.b16 %v389
        %v1584 = vunpack.c.h.b16 %v389
        %v1585 = vunpack.c.l.b16 %v390
        %v1586 = vunpack.c.h.b16 %v390
        %v1587 = vunpack.c.l.b16 %v391
        %v1588 = vunpack.c.h.b16 %v391
        %v1589 = vunpack.c.l.b16 %v392
        %v1590 = vunpack.c.h.b16 %v392
        %v1591 = vunpack.c.l.b16 %v393
        %v1592 = vunpack.c.h.b16 %v393
        %v1593 = vunpack.c.l.b16 %v394
        %v1594 = vunpack.c.h.b16 %v394
        %v1595 = vunpack.c.l.b16 %v395
        %v1596 = vunpack.c.h.b16 %v395
        %v1597 = vunpack.c.l.b16 %v396
        %v1598 = vunpack.c.h.b16 %v396
        %v1599 = vunpack.c.l.b16 %v397
        %v1600 = vunpack.c.h.b16 %v397
        %v1601 = vunpack.c.l.b16 %v398
        %v1602 = vunpack.c.h.b16 %v398
        %v1603 = vunpack.c.l.b16 %v399
        %v1604 = vunpack.c.h.b16 %v399
        %v1605 = vunpack.c.l.b16 %v400
        %v1606 = vunpack.c.h.b16 %v400
        %v1607 = vunpack.c.l.b16 %v401
        %v1608 = vunpack.c.h.b16 %v401
        %v1609 = vunpack.c.l.b16 %v402
        %v1610 = vunpack.c.h.b16 %v402
        %v1611 = vunpack.c.l.b16 %v403
        %v1612 = vunpack.c.h.b16 %v403
        %v1613 = vunpack.c.l.b16 %v404
        %v1614 = vunpack.c.h.b16 %v404
        %v1615 = vunpack.c.l.b16 %v405
        %v1616 = vunpack.c.h.b16 %v405
        %v1617 = vunpack.c.l.b16 %v406
        %v1618 = vunpack.c.h.b16 %v406
        %v1619 = vunpack.c.l.b16 %v407
        %v1620 = vunpack.c.h.b16 %v407
        %v1621 = vunpack.c.l.b16 %v408
        %v1622 = vunpack.c.h.b16 %v408
        %v1623 = vunpack.c.l.b16 %v409
        %v1624 = vunpack.c.h.b16 %v409
        %v1625 = vunpack.c.l.b16 %v410
        %v1626 = vunpack.c.h.b16 %v410
        %v1627 = vunpack.c.l.b16 %v411
        %v1628 = vunpack.c.h.b16 %v411
        %v1629 = vunpack.c.l.b16 %v412
        %v1630 = vunpack.c.h.b16 %v412
        %v1631 = vunpack.c.l.b16 %v413
        %v1632 = vunpack.c.h.b16 %v413
        %v1633 = vunpack.c.l.b16 %v414
        %v1634 = vunpack.c.h.b16 %v414
        %v1635 = vunpack.c.l.b16 %v415
        %v1636 = vunpack.c.h.b16 %v415
        %v1637 = vunpack.c.l.b16 %v416
        %v1638 = vunpack.c.h.b16 %v416
        %v1639 = vunpack.c.l.b16 %v417
        %v1640 = vunpack.c.h.b16 %v417
        %v1641 = vunpack.c.l.b16 %v418
        %v1642 = vunpack.c.h.b16 %v418
        %v1643 = vunpack.c.l.b16 %v419
        %v1644 = vunpack.c.h.b16 %v419
        %v1645 = vunpack.c.l.b16 %v420
        %v1646 = vunpack.c.h.b16 %v420
        %v1647 = vunpack.c.l.b16 %v421
        %v1648 = vunpack.c.h.b16 %v421
        %v1649 = vunpack.c.l.b16 %v422
        %v1650 = vunpack.c.h.b16 %v422
        %v1651 = vunpack.c.l.b16 %v423
        %v1652 = vunpack.c.h.b16 %v423
        %v1653 = vunpack.c.l.b16 %v424
        %v1654 = vunpack.c.h.b16 %v424
        %v1655 = vunpack.c.l.b16 %v425
        %v1656 = vunpack.c.h.b16 %v425
        %v1657 = vunpack.c.l.b16 %v426
        %v1658 = vunpack.c.h.b16 %v426
        %v1659 = vunpack.c.l.b16 %v427
        %v1660 = vunpack.c.h.b16 %v427
        %v1661 = vunpack.c.l.b16 %v428
        %v1662 = vunpack.c.h.b16 %v428
        %v1663 = vunpack.c.l.b16 %v429
        %v1664 = vunpack.c.h.b16 %v429
        %v1665 = vunpack.c.l.b16 %v430
        %v1666 = vunpack.c.h.b16 %v430
        %v1667 = vunpack.c.l.b16 %v431
        %v1668 = vunpack.c.h.b16 %v431
        %v1669 = vunpack.c.l.b16 %v432
        %v1670 = vunpack.c.h.b16 %v432
        %v1671 = vunpack.c.l.b16 %v433
        %v1672 = vunpack.c.h.b16 %v433
        %v1673 = vunpack.c.l.b16 %v434
        %v1674 = vunpack.c.h.b16 %v434
        %v1675 = vunpack.c.l.b16 %v435
        %v1676 = vunpack.c.h.b16 %v435
        %v1677 = vunpack.c.l.b16 %v436
        %v1678 = vunpack.c.h.b16 %v436
        %v1679 = vunpack.c.l.b16 %v437
        %v1680 = vunpack.c.h.b16 %v437
        %v1681 = vunpack.c.l.b16 %v438
        %v1682 = vunpack.c.h.b16 %v438
        %v1683 = vunpack.c.l.b16 %v439
        %v1684 = vunpack.c.h.b16 %v439
        %v1685 = vunpack.c.l.b16 %v440
        %v1686 = vunpack.c.h.b16 %v440
        %v1687 = vunpack.c.l.b16 %v441
        %v1688 = vunpack.c.h.b16 %v441
        %v1689 = vunpack.c.l.b16 %v442
        %v1690 = vunpack.c.h.b16 %v442
        %v1691 = vunpack.c.l.b16 %v443
        %v1692 = vunpack.c.h.b16 %v443
        %v1693 = vunpack.c.l.b16 %v444
        %v1694 = vunpack.c.h.b16 %v444
        %v1695 = vunpack.c.l.b16 %v445
        %v1696 = vunpack.c.h.b16 %v445
        %v1697 = vunpack.c.l.b16 %v446
        %v1698 = vunpack.c.h.b16 %v446
        %v1699 = vunpack.c.l.b16 %v447
        %v1700 = vunpack.c.h.b16 %v447
        %v1701 = vunpack.c.l.b16 %v448
        %v1702 = vunpack.c.h.b16 %v448
        %v1703 = vunpack.c.l.b16 %v449
        %v1704 = vunpack.c.h.b16 %v449
        %v1705 = vunpack.c.l.b16 %v450
        %v1706 = vunpack.c.h.b16 %v450
        %v1707 = vunpack.c.l.b16 %v451
        %v1708 = vunpack.c.h.b16 %v451
        %v1709 = vunpack.c.l.b16 %v452
        %v1710 = vunpack.c.h.b16 %v452
        %v1711 = vunpack.c.l.b16 %v453
        %v1712 = vunpack.c.h.b16 %v453
        %v1713 = vunpack.c.l.b16 %v454
        %v1714 = vunpack.c.h.b16 %v454
        %v1715 = vunpack.c.l.b16 %v455
        %v1716 = vunpack.c.h.b16 %v455
        %v1717 = vunpack.c.l.b16 %v456
        %v1718 = vunpack.c.h.b16 %v456
        %v1719 = vunpack.c.l.b16 %v457
        %v1720 = vunpack.c.h.b16 %v457
        %v1721 = vunpack.c.l.b16 %v458
        %v1722 = vunpack.c.h.b16 %v458
        %v1723 = vunpack.c.l.b16 %v459
        %v1724 = vunpack.c.h.b16 %v459
        %v1725 = vunpack.c.l.b16 %v460
        %v1726 = vunpack.c.h.b16 %v460
        %v1727 = vunpack.c.l.b16 %v461
        %v1728 = vunpack.c.h.b16 %v461
        %v1729 = vunpack.c.l.b16 %v462
        %v1730 = vunpack.c.h.b16 %v462
        %v1731 = vunpack.c.l.b16 %v463
        %v1732 = vunpack.c.h.b16 %v463
        %v1733 = vunpack.c.l.b16 %v464
        %v1734 = vunpack.c.h.b16 %v464
        %v1735 = vunpack.c.l.b16 %v465
        %v1736 = vunpack.c.h.b16 %v465
        %v1737 = vunpack.c.l.b16 %v466
        %v1738 = vunpack.c.h.b16 %v466
        %v1739 = vunpack.c.l.b16 %v467
        %v1740 = vunpack.c.h.b16 %v467
        %v1741 = vunpack.c.l.b16 %v468
        %v1742 = vunpack.c.h.b16 %v468
        %v1743 = vunpack.c.l.b16 %v469
        %v1744 = vunpack.c.h.b16 %v469
        %v1745 = vunpack.c.l.b16 %v470
        %v1746 = vunpack.c.h.b16 %v470
        %v1747 = vunpack.c.l.b16 %v471
        %v1748 = vunpack.c.h.b16 %v471
        %v1749 = vunpack.c.l.b16 %v472
        %v1750 = vunpack.c.h.b16 %v472
        %v1751 = vunpack.c.l.b16 %v473
        %v1752 = vunpack.c.h.b16 %v473
        %v1753 = vunpack.c.l.b16 %v474
        %v1754 = vunpack.c.h.b16 %v474
        %v1755 = vunpack.c.l.b16 %v475
        %v1756 = vunpack.c.h.b16 %v475
        %v1757 = vunpack.c.l.b16 %v476
        %v1758 = vunpack.c.h.b16 %v476
        %v1759 = vunpack.c.l.b16 %v477
        %v1760 = vunpack.c.h.b16 %v477
        %v1761 = vunpack.c.l.b16 %v478
        %v1762 = vunpack.c.h.b16 %v478
        %v1763 = vunpack.c.l.b16 %v479
        %v1764 = vunpack.c.h.b16 %v479
        %v1765 = vunpack.c.l.b16 %v480
        %v1766 = vunpack.c.h.b16 %v480
        %v1767 = vunpack.c.l.b16 %v481
        %v1768 = vunpack.c.h.b16 %v481
        %v1769 = vunpack.c.l.b16 %v482
        %v1770 = vunpack.c.h.b16 %v482
        %v1771 = vunpack.c.l.b16 %v483
        %v1772 = vunpack.c.h.b16 %v483
        %v1773 = vunpack.c.l.b16 %v484
        %v1774 = vunpack.c.h.b16 %v484
        %v1775 = vunpack.c.l.b16 %v485
        %v1776 = vunpack.c.h.b16 %v485
        %v1777 = vunpack.c.l.b16 %v486
        %v1778 = vunpack.c.h.b16 %v486
        %v1779 = vunpack.c.l.b16 %v487
        %v1780 = vunpack.c.h.b16 %v487
        %v1781 = vunpack.c.l.b16 %v488
        %v1782 = vunpack.c.h.b16 %v488
        %v1783 = vunpack.c.l.b16 %v489
        %v1784 = vunpack.c.h.b16 %v489
        %v1785 = vunpack.c.l.b16 %v490
        %v1786 = vunpack.c.h.b16 %v490
        %v1787 = vunpack.c.l.b16 %v491
        %v1788 = vunpack.c.h.b16 %v491
        %v1789 = vunpack.c.l.b16 %v492
        %v1790 = vunpack.c.h.b16 %v492
        %v1791 = vunpack.c.l.b16 %v493
        %v1792 = vunpack.c.h.b16 %v493
        %v1793 = vunpack.c.l.b16 %v494
        %v1794 = vunpack.c.h.b16 %v494
        %v1795 = vunpack.c.l.b16 %v495
        %v1796 = vunpack.c.h.b16 %v495
        %v1797 = vunpack.c.l.b16 %v496
        %v1798 = vunpack.c.h.b16 %v496
        %v1799 = vunpack.c.l.b16 %v497
        %v1800 = vunpack.c.h.b16 %v497
        %v1801 = vunpack.c.l.b16 %v498
        %v1802 = vunpack.c.h.b16 %v498
        %v1803 = vunpack.c.l.b16 %v499
        %v1804 = vunpack.c.h.b16 %v499
        %v1805 = vunpack.c.l.b16 %v500
        %v1806 = vunpack.c.h.b16 %v500
        %v1807 = vunpack.c.l.b16 %v501
        %v1808 = vunpack.c.h.b16 %v501
        %v1809 = vunpack.c.l.b16 %v502
        %v1810 = vunpack.c.h.b16 %v502
        %v1811 = vunpack.c.l.b16 %v503
        %v1812 = vunpack.c.h.b16 %v503
        %v1813 = vunpack.c.l.b16 %v504
        %v1814 = vunpack.c.h.b16 %v504
        %v1815 = vunpack.c.l.b16 %v505
        %v1816 = vunpack.c.h.b16 %v505
        %v1817 = vunpack.c.l.b16 %v506
        %v1818 = vunpack.c.h.b16 %v506
        %v1819 = vunpack.c.l.b16 %v507
        %v1820 = vunpack.c.h.b16 %v507
        %v1821 = vunpack.c.l.b16 %v508
        %v1822 = vunpack.c.h.b16 %v508
        %v1823 = vunpack.c.l.b16 %v509
        %v1824 = vunpack.c.h.b16 %v509
        %v1825 = vunpack.c.l.b16 %v510
        %v1826 = vunpack.c.h.b16 %v510
        %v1827 = vunpack.c.l.b16 %v511
        %v1828 = vunpack.c.h.b16 %v511
        %v1829 = vunpack.c.l.b16 %v512
        %v1830 = vunpack.c.h.b16 %v512
        %v1831 = vunpack.c.l.b16 %v513
        %v1832 = vunpack.c.h.b16 %v513
        %v1833 = vunpack.c.l.b16 %v514
        %v1834 = vunpack.c.h.b16 %v514
        %v1835 = vunpack.c.l.b16 %v515
        %v1836 = vunpack.c.h.b16 %v515
        %v1837 = vunpack.c.l.b16 %v516
        %v1838 = vunpack.c.h.b16 %v516
        %v1839 = vunpack.c.l.b16 %v517
        %v1840 = vunpack.c.h.b16 %v517
        %v1841 = vunpack.c.l.b16 %v518
        %v1842 = vunpack.c.h.b16 %v518
        %v1843 = vunpack.c.l.b16 %v519
        %v1844 = vunpack.c.h.b16 %v519
        %v1845 = vunpack.c.l.b16 %v520
        %v1846 = vunpack.c.h.b16 %v520
        %v1847 = vunpack.c.l.b16 %v521
        %v1848 = vunpack.c.h.b16 %v521
        %v1849 = vunpack.c.l.b16 %v522
        %v1850 = vunpack.c.h.b16 %v522
        %v1851 = vunpack.c.l.b16 %v523
        %v1852 = vunpack.c.h.b16 %v523
        %v1853 = vunpack.c.l.b16 %v524
        %v1854 = vunpack.c.h.b16 %v524
        %v1855 = vunpack.c.l.b16 %v525
        %v1856 = vunpack.c.h.b16 %v525
        %v1857 = vunpack.c.l.b16 %v526
        %v1858 = vunpack.c.h.b16 %v526
        %v1859 = vunpack.c.l.b16 %v527
        %v1860 = vunpack.c.h.b16 %v527
        %v1861 = vunpack.c.l.b16 %v528
        %v1862 = vunpack.c.h.b16 %v528
        %v1863 = vunpack.c.l.b16 %v529
        %v1864 = vunpack.c.h.b16 %v529
        %v1865 = vunpack.c.l.b16 %v530
        %v1866 = vunpack.c.h.b16 %v530
        %v1867 = vunpack.c.l.b16 %v531
        %v1868 = vunpack.c.h.b16 %v531
        %v1869 = vunpack.c.l.b16 %v532
        %v1870 = vunpack.c.h.b16 %v532
        %v1871 = vunpack.c.l.b16 %v533
        %v1872 = vunpack.c.h.b16 %v533
        %v1873 = vunpack.c.l.b16 %v534
        %v1874 = vunpack.c.h.b16 %v534
        %v1875 = vunpack.c.l.b16 %v535
        %v1876 = vunpack.c.h.b16 %v535
        %v1877 = vunpack.c.l.b16 %v536
        %v1878 = vunpack.c.h.b16 %v536
        %v1879 = vunpack.c.l.b16 %v537
        %v1880 = vunpack.c.h.b16 %v537
        %v1881 = vunpack.c.l.b16 %v538
        %v1882 = vunpack.c.h.b16 %v538
        %v1883 = vunpack.c.l.b16 %v539
        %v1884 = vunpack.c.h.b16 %v539
        %v1885 = vunpack.c.l.b16 %v540
        %v1886 = vunpack.c.h.b16 %v540
        %v1887 = vunpack.c.l.b16 %v541
        %v1888 = vunpack.c.h.b16 %v541
        %v1889 = vunpack.c.l.b16 %v542
        %v1890 = vunpack.c.h.b16 %v542
        %v1891 = vunpack.c.l.b16 %v543
        %v1892 = vunpack.c.h.b16 %v543
        %v1893 = vunpack.c.l.b16 %v544
        %v1894 = vunpack.c.h.b16 %v544
        %v1895 = vunpack.c.l.b16 %v545
        %v1896 = vunpack.c.h.b16 %v545
        %v1897 = vunpack.c.l.b16 %v546
        %v1898 = vunpack.c.h.b16 %v546
        %v1899 = vunpack.c.l.b16 %v547
        %v1900 = vunpack.c.h.b16 %v547
        %v1901 = vunpack.c.l.b16 %v548
        %v1902 = vunpack.c.h.b16 %v548
        %v1903 = vunpack.c.l.b16 %v549
        %v1904 = vunpack.c.h.b16 %v549
        %v1905 = vunpack.c.l.b16 %v550
        %v1906 = vunpack.c.h.b16 %v550
        %v1907 = vunpack.c.l.b16 %v551
        %v1908 = vunpack.c.h.b16 %v551
        %v1909 = vunpack.c.l.b16 %v552
        %v1910 = vunpack.c.h.b16 %v552
        %v1911 = vunpack.c.l.b16 %v553
        %v1912 = vunpack.c.h.b16 %v553
        %v1913 = vunpack.c.l.b16 %v554
        %v1914 = vunpack.c.h.b16 %v554
        %v1915 = vunpack.c.l.b16 %v555
        %v1916 = vunpack.c.h.b16 %v555
        %v1917 = vunpack.c.l.b16 %v556
        %v1918 = vunpack.c.h.b16 %v556
        %v1919 = vunpack.c.l.b16 %v557
        %v1920 = vunpack.c.h.b16 %v557
        %v1921 = vunpack.c.l.b16 %v558
        %v1922 = vunpack.c.h.b16 %v558
        %v1923 = vunpack.c.l.b16 %v559
        %v1924 = vunpack.c.h.b16 %v559
        %v1925 = vunpack.c.l.b16 %v560
        %v1926 = vunpack.c.h.b16 %v560
        %v1927 = vunpack.c.l.b16 %v561
        %v1928 = vunpack.c.h.b16 %v561
        %v1929 = vunpack.c.l.b16 %v562
        %v1930 = vunpack.c.h.b16 %v562
        %v1931 = vunpack.c.l.b16 %v563
        %v1932 = vunpack.c.h.b16 %v563
        %v1933 = vunpack.c.l.b16 %v564
        %v1934 = vunpack.c.h.b16 %v564
        %v1935 = vunpack.c.l.b16 %v565
        %v1936 = vunpack.c.h.b16 %v565
        %v1937 = vunpack.c.l.b16 %v566
        %v1938 = vunpack.c.h.b16 %v566
        %v1939 = vunpack.c.l.b16 %v567
        %v1940 = vunpack.c.h.b16 %v567
        %v1941 = vunpack.c.l.b16 %v568
        %v1942 = vunpack.c.h.b16 %v568
        %v1943 = vunpack.c.l.b16 %v569
        %v1944 = vunpack.c.h.b16 %v569
        %v1945 = vunpack.c.l.b16 %v570
        %v1946 = vunpack.c.h.b16 %v570
        %v1947 = vunpack.c.l.b16 %v571
        %v1948 = vunpack.c.h.b16 %v571
        %v1949 = vunpack.c.l.b16 %v572
        %v1950 = vunpack.c.h.b16 %v572
        %v1951 = vunpack.c.l.b16 %v573
        %v1952 = vunpack.c.h.b16 %v573
        %v1953 = vunpack.c.l.b16 %v574
        %v1954 = vunpack.c.h.b16 %v574
        %v1955 = vunpack.c.l.b16 %v575
        %v1956 = vunpack.c.h.b16 %v575
        %v1957 = vunpack.c.l.b16 %v576
        %v1958 = vunpack.c.h.b16 %v576
        %v1959 = vunpack.c.l.b16 %v577
        %v1960 = vunpack.c.h.b16 %v577
        %v1961 = vunpack.c.l.b16 %v578
        %v1962 = vunpack.c.h.b16 %v578
        %v1963 = vunpack.c.l.b16 %v579
        %v1964 = vunpack.c.h.b16 %v579
        %v1965 = vunpack.c.l.b16 %v580
        %v1966 = vunpack.c.h.b16 %v580
        %v1967 = vunpack.c.l.b16 %v581
        %v1968 = vunpack.c.h.b16 %v581
        %v1969 = vunpack.c.l.b16 %v582
        %v1970 = vunpack.c.h.b16 %v582
        %v1971 = vunpack.c.l.b16 %v583
        %v1972 = vunpack.c.h.b16 %v583
        %v1973 = vunpack.c.l.b16 %v584
        %v1974 = vunpack.c.h.b16 %v584
        %v1975 = vunpack.c.l.b16 %v585
        %v1976 = vunpack.c.h.b16 %v585
        %v1977 = vunpack.c.l.b16 %v586
        %v1978 = vunpack.c.h.b16 %v586
        %v1979 = vunpack.c.l.b16 %v587
        %v1980 = vunpack.c.h.b16 %v587
        %v1981 = vunpack.c.l.b16 %v588
        %v1982 = vunpack.c.h.b16 %v588
        %v1983 = vunpack.c.l.b16 %v589
        %v1984 = vunpack.c.h.b16 %v589
        %v1985 = vunpack.c.l.b16 %v590
        %v1986 = vunpack.c.h.b16 %v590
        %v1987 = vunpack.c.l.b16 %v591
        %v1988 = vunpack.c.h.b16 %v591
        %v1989 = vunpack.c.l.b16 %v592
        %v1990 = vunpack.c.h.b16 %v592
        %v1991 = vunpack.c.l.b16 %v593
        %v1992 = vunpack.c.h.b16 %v593
        %v1993 = vunpack.c.l.b16 %v594
        %v1994 = vunpack.c.h.b16 %v594
        %v1995 = vunpack.c.l.b16 %v595
        %v1996 = vunpack.c.h.b16 %v595
        %v1997 = vunpack.c.l.b16 %v596
        %v1998 = vunpack.c.h.b16 %v596
        %v1999 = vunpack.c.l.b16 %v597
        %v2000 = vunpack.c.h.b16 %v597
        %v2001 = vunpack.c.l.b16 %v598
        %v2002 = vunpack.c.h.b16 %v598
        %v2003 = vunpack.c.l.b16 %v599
        %v2004 = vunpack.c.h.b16 %v599
        %v2005 = vunpack.c.l.b16 %v600
        %v2006 = vunpack.c.h.b16 %v600
        %v2007 = vunpack.c.l.b16 %v601
        %v2008 = vunpack.c.h.b16 %v601
        %v2009 = vunpack.c.l.b16 %v602
        %v2010 = vunpack.c.h.b16 %v602
        %v2011 = vunpack.c.l.b16 %v603
        %v2012 = vunpack.c.h.b16 %v603
        %v2013 = vunpack.c.l.b16 %v604
        %v2014 = vunpack.c.h.b16 %v604
        %v2015 = vunpack.c.l.b16 %v605
        %v2016 = vunpack.c.h.b16 %v605
        %v2017 = vunpack.c.l.b16 %v606
        %v2018 = vunpack.c.h.b16 %v606
        %v2019 = vunpack.c.l.b16 %v607
        %v2020 = vunpack.c.h.b16 %v607
        %v2021 = vunpack.c.l.b16 %v608
        %v2022 = vunpack.c.h.b16 %v608
        %v2023 = vunpack.c.l.b16 %v609
        %v2024 = vunpack.c.h.b16 %v609
        %v2025 = vunpack.c.l.b16 %v610
        %v2026 = vunpack.c.h.b16 %v610
        %v2027 = vunpack.c.l.b16 %v611
        %v2028 = vunpack.c.h.b16 %v611
        %v2029 = vunpack.c.l.b16 %v612
        %v2030 = vunpack.c.h.b16 %v612
        %v2031 = vunpack.c.l.b16 %v613
        %v2032 = vunpack.c.h.b16 %v613
        %v2033 = vunpack.c.l.b16 %v614
        %v2034 = vunpack.c.h.b16 %v614
        %v2035 = vunpack.c.l.b16 %v615
        %v2036 = vunpack.c.h.b16 %v615
        %v2037 = vunpack.c.l.b16 %v616
        %v2038 = vunpack.c.h.b16 %v616
        %v2039 = vunpack.c.l.b16 %v617
        %v2040 = vunpack.c.h.b16 %v617
        %v2041 = vunpack.c.l.b16 %v618
        %v2042 = vunpack.c.h.b16 %v618
        %v2043 = vunpack.c.l.b16 %v619
        %v2044 = vunpack.c.h.b16 %v619
        %v2045 = vunpack.c.l.b16 %v620
        %v2046 = vunpack.c.h.b16 %v620
        %v2047 = vunpack.c.l.b16 %v621
        %v2048 = vunpack.c.h.b16 %v621
        %v2049 = vunpack.c.l.b16 %v622
        %v2050 = vunpack.c.h.b16 %v622
        %v2051 = vunpack.c.l.b16 %v623
        %v2052 = vunpack.c.h.b16 %v623
        %v2053 = vunpack.c.l.b16 %v624
        %v2054 = vunpack.c.h.b16 %v624
        %v2055 = vunpack.c.l.b16 %v625
        %v2056 = vunpack.c.h.b16 %v625
        %v2057 = vunpack.c.l.b16 %v626
        %v2058 = vunpack.c.h.b16 %v626
        %v2059 = vunpack.c.l.b16 %v627
        %v2060 = vunpack.c.h.b16 %v627
        %v2061 = vunpack.c.l.b16 %v628
        %v2062 = vunpack.c.h.b16 %v628
        %v2063 = vunpack.c.l.b16 %v629
        %v2064 = vunpack.c.h.b16 %v629
        %v2065 = vunpack.c.l.b16 %v630
        %v2066 = vunpack.c.h.b16 %v630
        %v2067 = vunpack.c.l.b16 %v631
        %v2068 = vunpack.c.h.b16 %v631
        %v2069 = vunpack.c.l.b16 %v632
        %v2070 = vunpack.c.h.b16 %v632
        %v2071 = vunpack.c.l.b16 %v633
        %v2072 = vunpack.c.h.b16 %v633
        %v2073 = vunpack.c.l.b16 %v634
        %v2074 = vunpack.c.h.b16 %v634
        %v2075 = vunpack.c.l.b16 %v635
        %v2076 = vunpack.c.h.b16 %v635
        %v2077 = vunpack.c.l.b16 %v636
        %v2078 = vunpack.c.h.b16 %v636
        %v2079 = vunpack.c.l.b16 %v637
        %v2080 = vunpack.c.h.b16 %v637
        %v2081 = vunpack.c.l.b16 %v638
        %v2082 = vunpack.c.h.b16 %v638
        %v2083 = vunpack.c.l.b16 %v639
        %v2084 = vunpack.c.h.b16 %v639
        %v2085 = vunpack.c.l.b16 %v640
        %v2086 = vunpack.c.h.b16 %v640
        %v2087 = vunpack.c.l.b16 %v641
        %v2088 = vunpack.c.h.b16 %v641
        %v2089 = vunpack.c.l.b16 %v642
        %v2090 = vunpack.c.h.b16 %v642
        %v2091 = vunpack.c.l.b16 %v643
        %v2092 = vunpack.c.h.b16 %v643
        %v2093 = vunpack.c.l.b16 %v644
        %v2094 = vunpack.c.h.b16 %v644
        %v2095 = vunpack.c.l.b16 %v645
        %v2096 = vunpack.c.h.b16 %v645
        %v2097 = vunpack.c.l.b16 %v646
        %v2098 = vunpack.c.h.b16 %v646
        %v2099 = vunpack.c.l.b16 %v647
        %v2100 = vunpack.c.h.b16 %v647
        %v2101 = vunpack.c.l.b16 %v648
        %v2102 = vunpack.c.h.b16 %v648
        %v2103 = vunpack.c.l.b16 %v649
        %v2104 = vunpack.c.h.b16 %v649
        %v2105 = vunpack.c.l.b16 %v650
        %v2106 = vunpack.c.h.b16 %v650
        %v2107 = vunpack.c.l.b16 %v651
        %v2108 = vunpack.c.h.b16 %v651
        %v2109 = vunpack.c.l.b16 %v652
        %v2110 = vunpack.c.h.b16 %v652
        %v2111 = vunpack.c.l.b16 %v653
        %v2112 = vunpack.c.h.b16 %v653
        %v2113 = vunpack.c.l.b16 %v654
        %v2114 = vunpack.c.h.b16 %v654
        %v2115 = vunpack.c.l.b16 %v655
        %v2116 = vunpack.c.h.b16 %v655
        %v2117 = vunpack.c.l.b16 %v656
        %v2118 = vunpack.c.h.b16 %v656
        %v2119 = vunpack.c.l.b16 %v657
        %v2120 = vunpack.c.h.b16 %v657
        %v2121 = vunpack.c.l.b16 %v658
        %v2122 = vunpack.c.h.b16 %v658
        %v2123 = vunpack.c.l.b16 %v659
        %v2124 = vunpack.c.h.b16 %v659
        %v2125 = vunpack.c.l.b16 %v660
        %v2126 = vunpack.c.h.b16 %v660
        %v2127 = vunpack.c.l.b16 %v661
        %v2128 = vunpack.c.h.b16 %v661
        %v2129 = vunpack.c.l.b16 %v662
        %v2130 = vunpack.c.h.b16 %v662
        %v2131 = vunpack.c.l.b16 %v663
        %v2132 = vunpack.c.h.b16 %v663
        %v2133 = vunpack.c.l.b16 %v664
        %v2134 = vunpack.c.h.b16 %v664
        %v2135 = vunpack.c.l.b16 %v665
        %v2136 = vunpack.c.h.b16 %v665
        %v2137 = vunpack.c.l.b16 %v666
        %v2138 = vunpack.c.h.b16 %v666
        %v2139 = vunpack.c.l.b16 %v667
        %v2140 = vunpack.c.h.b16 %v667
        %v2141 = vunpack.c.l.b16 %v668
        %v2142 = vunpack.c.h.b16 %v668
        %v2143 = vunpack.c.l.b16 %v669
        %v2144 = vunpack.c.h.b16 %v669
        %v2145 = vunpack.c.l.b16 %v670
        %v2146 = vunpack.c.h.b16 %v670
        %v2147 = vunpack.c.l.b16 %v671
        %v2148 = vunpack.c.h.b16 %v671
        %v2149 = vunpack.c.l.b16 %v672
        %v2150 = vunpack.c.h.b16 %v672
        %v2151 = vunpack.c.l.b16 %v673
        %v2152 = vunpack.c.h.b16 %v673
        %v2153 = vunpack.c.l.b16 %v674
        %v2154 = vunpack.c.h.b16 %v674
        %v2155 = vunpack.c.l.b16 %v675
        %v2156 = vunpack.c.h.b16 %v675
        %v2157 = vunpack.c.l.b16 %v676
        %v2158 = vunpack.c.h.b16 %v676
        %v2159 = vunpack.c.l.b16 %v677
        %v2160 = vunpack.c.h.b16 %v677
        %v2161 = vunpack.c.l.b16 %v678
        %v2162 = vunpack.c.h.b16 %v678
        %v2163 = vunpack.c.l.b16 %v679
        %v2164 = vunpack.c.h.b16 %v679
        %v2165 = vunpack.c.l.b16 %v680
        %v2166 = vunpack.c.h.b16 %v680
        %v2167 = vunpack.c.l.b16 %v681
        %v2168 = vunpack.c.h.b16 %v681
        %v2169 = vunpack.c.l.b16 %v682
        %v2170 = vunpack.c.h.b16 %v682
        %v2171 = vunpack.c.l.b16 %v683
        %v2172 = vunpack.c.h.b16 %v683
        %v2173 = vunpack.c.l.b16 %v684
        %v2174 = vunpack.c.h.b16 %v684
        %v2175 = vunpack.c.l.b16 %v685
        %v2176 = vunpack.c.h.b16 %v685
        %v2177 = vunpack.c.l.b16 %v686
        %v2178 = vunpack.c.h.b16 %v686
        %v2179 = vunpack.c.l.b16 %v687
        %v2180 = vunpack.c.h.b16 %v687
        %v2181 = vunpack.c.l.b16 %v688
        %v2182 = vunpack.c.h.b16 %v688
        %v2183 = vunpack.c.l.b16 %v689
        %v2184 = vunpack.c.h.b16 %v689
        %v2185 = vunpack.c.l.b16 %v690
        %v2186 = vunpack.c.h.b16 %v690
        %v2187 = vunpack.c.l.b16 %v691
        %v2188 = vunpack.c.h.b16 %v691
        %v2189 = vunpack.c.l.b16 %v692
        %v2190 = vunpack.c.h.b16 %v692
        %v2191 = vunpack.c.l.b16 %v693
        %v2192 = vunpack.c.h.b16 %v693
        %v2193 = vunpack.c.l.b16 %v694
        %v2194 = vunpack.c.h.b16 %v694
        %v2195 = vunpack.c.l.b16 %v695
        %v2196 = vunpack.c.h.b16 %v695
        %v2197 = vunpack.c.l.b16 %v696
        %v2198 = vunpack.c.h.b16 %v696
        %v2199 = vunpack.c.l.b16 %v697
        %v2200 = vunpack.c.h.b16 %v697
        %v2201 = vunpack.c.l.b16 %v698
        %v2202 = vunpack.c.h.b16 %v698
        %v2203 = vunpack.c.l.b16 %v699
        %v2204 = vunpack.c.h.b16 %v699
        %v2205 = vunpack.c.l.b16 %v700
        %v2206 = vunpack.c.h.b16 %v700
        %v2207 = vunpack.c.l.b16 %v701
        %v2208 = vunpack.c.h.b16 %v701
        %v2209 = vunpack.c.l.b16 %v702
        %v2210 = vunpack.c.h.b16 %v702
        %v2211 = vunpack.c.l.b16 %v703
        %v2212 = vunpack.c.h.b16 %v703
        %v2213 = vunpack.c.l.b16 %v704
        %v2214 = vunpack.c.h.b16 %v704
        %v2215 = vunpack.c.l.b16 %v705
        %v2216 = vunpack.c.h.b16 %v705
        %v2217 = vunpack.c.l.b16 %v706
        %v2218 = vunpack.c.h.b16 %v706
        %v2219 = vunpack.c.l.b16 %v707
        %v2220 = vunpack.c.h.b16 %v707
        %v2221 = vunpack.c.l.b16 %v708
        %v2222 = vunpack.c.h.b16 %v708
        %v2223 = vunpack.c.l.b16 %v709
        %v2224 = vunpack.c.h.b16 %v709
        %v2225 = vunpack.c.l.b16 %v710
        %v2226 = vunpack.c.h.b16 %v710
        %v2227 = vunpack.c.l.b16 %v711
        %v2228 = vunpack.c.h.b16 %v711
        %v2229 = vunpack.c.l.b16 %v712
        %v2230 = vunpack.c.h.b16 %v712
        %v2231 = vunpack.c.l.b16 %v713
        %v2232 = vunpack.c.h.b16 %v713
        %v2233 = vunpack.c.l.b16 %v714
        %v2234 = vunpack.c.h.b16 %v714
        %v2235 = vunpack.c.l.b16 %v715
        %v2236 = vunpack.c.h.b16 %v715
        %v2237 = vunpack.c.l.b16 %v716
        %v2238 = vunpack.c.h.b16 %v716
        %v2239 = vunpack.c.l.b16 %v717
        %v2240 = vunpack.c.h.b16 %v717
        %v2241 = vunpack.c.l.b16 %v718
        %v2242 = vunpack.c.h.b16 %v718
        %v2243 = vunpack.c.l.b16 %v719
        %v2244 = vunpack.c.h.b16 %v719
        %v2245 = vunpack.c.l.b16 %v720
        %v2246 = vunpack.c.h.b16 %v720
        %v2247 = vunpack.c.l.b16 %v721
        %v2248 = vunpack.c.h.b16 %v721
        %v2249 = vunpack.c.l.b16 %v722
        %v2250 = vunpack.c.h.b16 %v722
        %v2251 = vunpack.c.l.b16 %v723
        %v2252 = vunpack.c.h.b16 %v723
        %v2253 = vunpack.c.l.b16 %v724
        %v2254 = vunpack.c.h.b16 %v724
        %v2255 = vunpack.c.l.b16 %v725
        %v2256 = vunpack.c.h.b16 %v725
        %v2257 = vunpack.c.l.b16 %v726
        %v2258 = vunpack.c.h.b16 %v726
        %v2259 = vunpack.c.l.b16 %v727
        %v2260 = vunpack.c.h.b16 %v727
        %v2261 = vunpack.c.l.b16 %v728
        %v2262 = vunpack.c.h.b16 %v728
        %v2263 = vunpack.c.l.b16 %v729
        %v2264 = vunpack.c.h.b16 %v729
        %v2265 = vunpack.c.l.b16 %v730
        %v2266 = vunpack.c.h.b16 %v730
        %v2267 = vunpack.c.l.b16 %v731
        %v2268 = vunpack.c.h.b16 %v731
        %v2269 = vunpack.c.l.b16 %v732
        %v2270 = vunpack.c.h.b16 %v732
        %v2271 = vunpack.c.l.b16 %v733
        %v2272 = vunpack.c.h.b16 %v733
        %v2273 = vunpack.c.l.b16 %v734
        %v2274 = vunpack.c.h.b16 %v734
        %v2275 = vunpack.c.l.b16 %v735
        %v2276 = vunpack.c.h.b16 %v735
        %v2277 = vunpack.c.l.b16 %v736
        %v2278 = vunpack.c.h.b16 %v736
        %v2279 = vunpack.c.l.b16 %v737
        %v2280 = vunpack.c.h.b16 %v737
        %v2281 = vunpack.c.l.b16 %v738
        %v2282 = vunpack.c.h.b16 %v738
        %v2283 = vunpack.c.l.b16 %v739
        %v2284 = vunpack.c.h.b16 %v739
        %v2285 = vunpack.c.l.b16 %v740
        %v2286 = vunpack.c.h.b16 %v740
        %v2287 = vunpack.c.l.b16 %v741
        %v2288 = vunpack.c.h.b16 %v741
        %v2289 = vunpack.c.l.b16 %v742
        %v2290 = vunpack.c.h.b16 %v742
        %v2291 = vunpack.c.l.b16 %v743
        %v2292 = vunpack.c.h.b16 %v743
        %v2293 = vunpack.c.l.b16 %v744
        %v2294 = vunpack.c.h.b16 %v744
        %v2295 = vunpack.c.l.b16 %v745
        %v2296 = vunpack.c.h.b16 %v745
        %v2297 = vunpack.c.l.b16 %v746
        %v2298 = vunpack.c.h.b16 %v746
        %v2299 = vunpack.c.l.b16 %v747
        %v2300 = vunpack.c.h.b16 %v747
        %v2301 = vunpack.c.l.b16 %v748
        %v2302 = vunpack.c.h.b16 %v748
        %v2303 = vunpack.c.l.b16 %v749
        %v2304 = vunpack.c.h.b16 %v749
        %v2305 = vunpack.c.l.b16 %v750
        %v2306 = vunpack.c.h.b16 %v750
        %v2307 = vunpack.c.l.b16 %v751
        %v2308 = vunpack.c.h.b16 %v751
        %v2309 = vunpack.c.l.b16 %v752
        %v2310 = vunpack.c.h.b16 %v752
        %v2311 = vunpack.c.l.b16 %v753
        %v2312 = vunpack.c.h.b16 %v753
        %v2313 = vunpack.c.l.b16 %v754
        %v2314 = vunpack.c.h.b16 %v754
        %v2315 = vunpack.c.l.b16 %v755
        %v2316 = vunpack.c.h.b16 %v755
        %v2317 = vunpack.c.l.b16 %v756
        %v2318 = vunpack.c.h.b16 %v756
        %v2319 = vunpack.c.l.b16 %v757
        %v2320 = vunpack.c.h.b16 %v757
        %v2321 = vunpack.c.l.b16 %v758
        %v2322 = vunpack.c.h.b16 %v758
        %v2323 = vunpack.c.l.b16 %v759
        %v2324 = vunpack.c.h.b16 %v759
        %v2325 = vunpack.c.l.b16 %v760
        %v2326 = vunpack.c.h.b16 %v760
        %v2327 = vunpack.c.l.b16 %v761
        %v2328 = vunpack.c.h.b16 %v761
        %v2329 = vunpack.c.l.b16 %v762
        %v2330 = vunpack.c.h.b16 %v762
        %v2331 = vunpack.c.l.b16 %v763
        %v2332 = vunpack.c.h.b16 %v763
        %v2333 = vunpack.c.l.b16 %v764
        %v2334 = vunpack.c.h.b16 %v764
        %v2335 = vunpack.c.l.b16 %v765
        %v2336 = vunpack.c.h.b16 %v765
        %v2337 = vunpack.c.l.b16 %v766
        %v2338 = vunpack.c.h.b16 %v766
        %v2339 = vunpack.c.l.b16 %v767
        %v2340 = vunpack.c.h.b16 %v767
        %v2341 = vunpack.c.l.b16 %v768
        %v2342 = vunpack.c.h.b16 %v768
        %v2343 = vunpack.c.l.b16 %v769
        %v2344 = vunpack.c.h.b16 %v769
        %v2345 = vunpack.c.l.b16 %v770
        %v2346 = vunpack.c.h.b16 %v770
        %v2347 = vunpack.c.l.b16 %v771
        %v2348 = vunpack.c.h.b16 %v771
        %v2349 = vunpack.c.l.b16 %v772
        %v2350 = vunpack.c.h.b16 %v772
        %v2351 = vunpack.c.l.b16 %v773
        %v2352 = vunpack.c.h.b16 %v773
        %v2353 = vunpack.c.l.b16 %v774
        %v2354 = vunpack.c.h.b16 %v774
        %v2355 = vunpack.c.l.b16 %v775
        %v2356 = vunpack.c.h.b16 %v775
        %v2357 = vunpack.c.l.b16 %v776
        %v2358 = vunpack.c.h.b16 %v776
        %v2359 = vunpack.c.l.b16 %v777
        %v2360 = vunpack.c.h.b16 %v777
        %v2361 = vunpack.c.l.b16 %v778
        %v2362 = vunpack.c.h.b16 %v778
        %v2363 = vunpack.c.l.b16 %v779
        %v2364 = vunpack.c.h.b16 %v779
        %v2365 = vunpack.c.l.b16 %v780
        %v2366 = vunpack.c.h.b16 %v780
        %v2367 = vunpack.c.l.b16 %v781
        %v2368 = vunpack.c.h.b16 %v781
        %v2369 = vunpack.c.l.b16 %v782
        %v2370 = vunpack.c.h.b16 %v782
        %v2371 = vunpack.c.l.b16 %v783
        %v2372 = vunpack.c.h.b16 %v783
        %v2373 = vunpack.c.l.b16 %v784
        %v2374 = vunpack.c.h.b16 %v784
        %v2375 = vunpack.c.l.b16 %v785
        %v2376 = vunpack.c.h.b16 %v785
        %v2377 = vunpack.c.l.b16 %v786
        %v2378 = vunpack.c.h.b16 %v786
        %v2379 = vunpack.c.l.b16 %v787
        %v2380 = vunpack.c.h.b16 %v787
        %v2381 = vunpack.c.l.b16 %v788
        %v2382 = vunpack.c.h.b16 %v788
        %v2383 = vunpack.c.l.b16 %v789
        %v2384 = vunpack.c.h.b16 %v789
        %v2385 = vunpack.c.l.b16 %v790
        %v2386 = vunpack.c.h.b16 %v790
        %v2387 = vunpack.c.l.b16 %v791
        %v2388 = vunpack.c.h.b16 %v791
        %v2389 = vunpack.c.l.b16 %v792
        %v2390 = vunpack.c.h.b16 %v792
        %v2391 = vunpack.c.l.b16 %v793
        %v2392 = vunpack.c.h.b16 %v793
        %v2393 = vunpack.c.l.b16 %v794
        %v2394 = vunpack.c.h.b16 %v794
        %v2395 = vunpack.c.l.b16 %v795
        %v2396 = vunpack.c.h.b16 %v795
        %v2397 = vunpack.c.l.b16 %v796
        %v2398 = vunpack.c.h.b16 %v796
        %v2399 = vunpack.c.l.b16 %v797
        %v2400 = vunpack.c.h.b16 %v797
        %v2401 = vunpack.c.l.b16 %v798
        %v2402 = vunpack.c.h.b16 %v798
        %v2403 = vunpack.c.l.b16 %v799
        %v2404 = vunpack.c.h.b16 %v799
        %v2405 = vunpack.c.l.b16 %v800
        %v2406 = vunpack.c.h.b16 %v800
        %v2407 = vunpack.c.l.b16 %v801
        %v2408 = vunpack.c.h.b16 %v801
        %v2409 = vunpack.c.l.b16 %v802
        %v2410 = vunpack.c.h.b16 %v802
        %v2411 = vunpack.c.l.b16 %v803
        %v2412 = vunpack.c.h.b16 %v803
        %v2413 = vunpack.c.l.b16 %v804
        %v2414 = vunpack.c.h.b16 %v804
        %v2415 = vunpack.c.l.b16 %v805
        %v2416 = vunpack.c.h.b16 %v805
        %v2417 = vunpack.c.l.b16 %v806
        %v2418 = vunpack.c.h.b16 %v806
        %v2419 = vunpack.c.l.b16 %v807
        %v2420 = vunpack.c.h.b16 %v807
        %v2421 = vunpack.c.l.b16 %v808
        %v2422 = vunpack.c.h.b16 %v808
        %v2423 = vunpack.c.l.b16 %v809
        %v2424 = vunpack.c.h.b16 %v809
        %v2425 = vunpack.c.l.b16 %v810
        %v2426 = vunpack.c.h.b16 %v810
        %v2427 = vunpack.c.l.b16 %v811
        %v2428 = vunpack.c.h.b16 %v811
        %v2429 = vunpack.c.l.b16 %v812
        %v2430 = vunpack.c.h.b16 %v812
        %v2431 = vunpack.c.l.b16 %v813
        %v2432 = vunpack.c.h.b16 %v813
        %v2433 = vunpack.c.l.b16 %v814
        %v2434 = vunpack.c.h.b16 %v814
        %v2435 = vpack.c.b16 %v1427, %v1411
        %v2436 = vpack.c.b16 %v1428, %v1412
        %v2437 = vpack.c.b16 %v1429, %v1413
        %v2438 = vpack.c.b16 %v1430, %v1414
        %v2439 = vpack.c.b16 %v1431, %v1415
        %v2440 = vpack.c.b16 %v1432, %v1416
        %v2441 = vpack.c.b16 %v1433, %v1417
        %v2442 = vpack.c.b16 %v1434, %v1418
        %v2443 = vpack.c.b16 %v1435, %v1419
        %v2444 = vpack.c.b16 %v1436, %v1420
        %v2445 = vpack.c.b16 %v1437, %v1421
        %v2446 = vpack.c.b16 %v1438, %v1422
        %v2447 = vpack.c.b16 %v1439, %v1423
        %v2448 = vpack.c.b16 %v1440, %v1424
        %v2449 = vpack.c.b16 %v1441, %v1425
        %v2450 = vpack.c.b16 %v1442, %v1426
        %v2451 = vpack.c.b16 %v1459, %v1443
        %v2452 = vpack.c.b16 %v1460, %v1444
        %v2453 = vpack.c.b16 %v1461, %v1445
        %v2454 = vpack.c.b16 %v1462, %v1446
        %v2455 = vpack.c.b16 %v1463, %v1447
        %v2456 = vpack.c.b16 %v1464, %v1448
        %v2457 = vpack.c.b16 %v1465, %v1449
        %v2458 = vpack.c.b16 %v1466, %v1450
        %v2459 = vpack.c.b16 %v1467, %v1451
        %v2460 = vpack.c.b16 %v1468, %v1452
        %v2461 = vpack.c.b16 %v1469, %v1453
        %v2462 = vpack.c.b16 %v1470, %v1454
        %v2463 = vpack.c.b16 %v1471, %v1455
        %v2464 = vpack.c.b16 %v1472, %v1456
        %v2465 = vpack.c.b16 %v1473, %v1457
        %v2466 = vpack.c.b16 %v1474, %v1458
        %v2467 = vpack.c.b16 %v1491, %v1475
        %v2468 = vpack.c.b16 %v1492, %v1476
        %v2469 = vpack.c.b16 %v1493, %v1477
        %v2470 = vpack.c.b16 %v1494, %v1478
        %v2471 = vpack.c.b16 %v1495, %v1479
        %v2472 = vpack.c.b16 %v1496, %v1480
        %v2473 = vpack.c.b16 %v1497, %v1481
        %v2474 = vpack.c.b16 %v1498, %v1482
        %v2475 = vpack.c.b16 %v1499, %v1483
        %v2476 = vpack.c.b16 %v1500, %v1484
        %v2477 = vpack.c.b16 %v1501, %v1485
        %v2478 = vpack.c.b16 %v1502, %v1486
        %v2479 = vpack.c.b16 %v1503, %v1487
        %v2480 = vpack.c.b16 %v1504, %v1488
        %v2481 = vpack.c.b16 %v1505, %v1489
        %v2482 = vpack.c.b16 %v1506, %v1490
        %v2483 = vpack.c.b16 %v1523, %v1507
        %v2484 = vpack.c.b16 %v1524, %v1508
        %v2485 = vpack.c.b16 %v1525, %v1509
        %v2486 = vpack.c.b16 %v1526, %v1510
        %v2487 = vpack.c.b16 %v1527, %v1511
        %v2488 = vpack.c.b16 %v1528, %v1512
        %v2489 = vpack.c.b16 %v1529, %v1513
        %v2490 = vpack.c.b16 %v1530, %v1514
        %v2491 = vpack.c.b16 %v1531, %v1515
        %v2492 = vpack.c.b16 %v1532, %v1516
        %v2493 = vpack.c.b16 %v1533, %v1517
        %v2494 = vpack.c.b16 %v1534, %v1518
        %v2495 = vpack.c.b16 %v1535, %v1519
        %v2496 = vpack.c.b16 %v1536, %v1520
        %v2497 = vpack.c.b16 %v1537, %v1521
        %v2498 = vpack.c.b16 %v1538, %v1522
        %v2499 = vpack.c.b16 %v1555, %v1539
        %v2500 = vpack.c.b16 %v1556, %v1540
        %v2501 = vpack.c.b16 %v1557, %v1541
        %v2502 = vpack.c.b16 %v1558, %v1542
        %v2503 = vpack.c.b16 %v1559, %v1543
        %v2504 = vpack.c.b16 %v1560, %v1544
        %v2505 = vpack.c.b16 %v1561, %v1545
        %v2506 = vpack.c.b16 %v1562, %v1546
        %v2507 = vpack.c.b16 %v1563, %v1547
        %v2508 = vpack.c.b16 %v1564, %v1548
        %v2509 = vpack.c.b16 %v1565, %v1549
        %v2510 = vpack.c.b16 %v1566, %v1550
        %v2511 = vpack.c.b16 %v1567, %v1551
        %v2512 = vpack.c.b16 %v1568, %v1552
        %v2513 = vpack.c.b16 %v1569, %v1553
        %v2514 = vpack.c.b16 %v1570, %v1554
        %v2515 = vpack.c.b16 %v1587, %v1571
        %v2516 = vpack.c.b16 %v1588, %v1572
        %v2517 = vpack.c.b16 %v1589, %v1573
        %v2518 = vpack.c.b16 %v1590, %v1574
        %v2519 = vpack.c.b16 %v1591, %v1575
        %v2520 = vpack.c.b16 %v1592, %v1576
        %v2521 = vpack.c.b16 %v1593, %v1577
        %v2522 = vpack.c.b16 %v1594, %v1578
        %v2523 = vpack.c.b16 %v1595, %v1579
        %v2524 = vpack.c.b16 %v1596, %v1580
        %v2525 = vpack.c.b16 %v1597, %v1581
        %v2526 = vpack.c.b16 %v1598, %v1582
        %v2527 = vpack.c.b16 %v1599, %v1583
        %v2528 = vpack.c.b16 %v1600, %v1584
        %v2529 = vpack.c.b16 %v1601, %v1585
        %v2530 = vpack.c.b16 %v1602, %v1586
        %v2531 = vpack.c.b16 %v1619, %v1603
        %v2532 = vpack.c.b16 %v1620, %v1604
        %v2533 = vpack.c.b16 %v1621, %v1605
        %v2534 = vpack.c.b16 %v1622, %v1606
        %v2535 = vpack.c.b16 %v1623, %v1607
        %v2536 = vpack.c.b16 %v1624, %v1608
        %v2537 = vpack.c.b16 %v1625, %v1609
        %v2538 = vpack.c.b16 %v1626, %v1610
        %v2539 = vpack.c.b16 %v1627, %v1611
        %v2540 = vpack.c.b16 %v1628, %v1612
        %v2541 = vpack.c.b16 %v1629, %v1613
        %v2542 = vpack.c.b16 %v1630, %v1614
        %v2543 = vpack.c.b16 %v1631, %v1615
        %v2544 = vpack.c.b16 %v1632, %v1616
        %v2545 = vpack.c.b16 %v1633, %v1617
        %v2546 = vpack.c.b16 %v1634, %v1618
        %v2547 = vpack.c.b16 %v1651, %v1635
        %v2548 = vpack.c.b16 %v1652, %v1636
        %v2549 = vpack.c.b16 %v1653, %v1637
        %v2550 = vpack.c.b16 %v1654, %v1638
        %v2551 = vpack.c.b16 %v1655, %v1639
        %v2552 = vpack.c.b16 %v1656, %v1640
        %v2553 = vpack.c.b16 %v1657, %v1641
        %v2554 = vpack.c.b16 %v1658, %v1642
        %v2555 = vpack.c.b16 %v1659, %v1643
        %v2556 = vpack.c.b16 %v1660, %v1644
        %v2557 = vpack.c.b16 %v1661, %v1645
        %v2558 = vpack.c.b16 %v1662, %v1646
        %v2559 = vpack.c.b16 %v1663, %v1647
        %v2560 = vpack.c.b16 %v1664, %v1648
        %v2561 = vpack.c.b16 %v1665, %v1649
        %v2562 = vpack.c.b16 %v1666, %v1650
        %v2563 = vpack.c.b16 %v1683, %v1667
        %v2564 = vpack.c.b16 %v1684, %v1668
        %v2565 = vpack.c.b16 %v1685, %v1669
        %v2566 = vpack.c.b16 %v1686, %v1670
        %v2567 = vpack.c.b16 %v1687, %v1671
        %v2568 = vpack.c.b16 %v1688, %v1672
        %v2569 = vpack.c.b16 %v1689, %v1673
        %v2570 = vpack.c.b16 %v1690, %v1674
        %v2571 = vpack.c.b16 %v1691, %v1675
        %v2572 = vpack.c.b16 %v1692, %v1676
        %v2573 = vpack.c.b16 %v1693, %v1677
        %v2574 = vpack.c.b16 %v1694, %v1678
        %v2575 = vpack.c.b16 %v1695, %v1679
        %v2576 = vpack.c.b16 %v1696, %v1680
        %v2577 = vpack.c.b16 %v1697, %v1681
        %v2578 = vpack.c.b16 %v1698, %v1682
        %v2579 = vpack.c.b16 %v1715, %v1699
        %v2580 = vpack.c.b16 %v1716, %v1700
        %v2581 = vpack.c.b16 %v1717, %v1701
        %v2582 = vpack.c.b16 %v1718, %v1702
        %v2583 = vpack.c.b16 %v1719, %v1703
        %v2584 = vpack.c.b16 %v1720, %v1704
        %v2585 = vpack.c.b16 %v1721, %v1705
        %v2586 = vpack.c.b16 %v1722, %v1706
        %v2587 = vpack.c.b16 %v1723, %v1707
        %v2588 = vpack.c.b16 %v1724, %v1708
        %v2589 = vpack.c.b16 %v1725, %v1709
        %v2590 = vpack.c.b16 %v1726, %v1710
        %v2591 = vpack.c.b16 %v1727, %v1711
        %v2592 = vpack.c.b16 %v1728, %v1712
        %v2593 = vpack.c.b16 %v1729, %v1713
        %v2594 = vpack.c.b16 %v1730, %v1714
        %v2595 = vpack.c.b16 %v1747, %v1731
        %v2596 = vpack.c.b16 %v1748, %v1732
        %v2597 = vpack.c.b16 %v1749, %v1733
        %v2598 = vpack.c.b16 %v1750, %v1734
        %v2599 = vpack.c.b16 %v1751, %v1735
        %v2600 = vpack.c.b16 %v1752, %v1736
        %v2601 = vpack.c.b16 %v1753, %v1737
        %v2602 = vpack.c.b16 %v1754, %v1738
        %v2603 = vpack.c.b16 %v1755, %v1739
        %v2604 = vpack.c.b16 %v1756, %v1740
        %v2605 = vpack.c.b16 %v1757, %v1741
        %v2606 = vpack.c.b16 %v1758, %v1742
        %v2607 = vpack.c.b16 %v1759, %v1743
        %v2608 = vpack.c.b16 %v1760, %v1744
        %v2609 = vpack.c.b16 %v1761, %v1745
        %v2610 = vpack.c.b16 %v1762, %v1746
        %v2611 = vpack.c.b16 %v1779, %v1763
        %v2612 = vpack.c.b16 %v1780, %v1764
        %v2613 = vpack.c.b16 %v1781, %v1765
        %v2614 = vpack.c.b16 %v1782, %v1766
        %v2615 = vpack.c.b16 %v1783, %v1767
        %v2616 = vpack.c.b16 %v1784, %v1768
        %v2617 = vpack.c.b16 %v1785, %v1769
        %v2618 = vpack.c.b16 %v1786, %v1770
        %v2619 = vpack.c.b16 %v1787, %v1771
        %v2620 = vpack.c.b16 %v1788, %v1772
        %v2621 = vpack.c.b16 %v1789, %v1773
        %v2622 = vpack.c.b16 %v1790, %v1774
        %v2623 = vpack.c.b16 %v1791, %v1775
        %v2624 = vpack.c.b16 %v1792, %v1776
        %v2625 = vpack.c.b16 %v1793, %v1777
        %v2626 = vpack.c.b16 %v1794, %v1778
        %v2627 = vpack.c.b16 %v1811, %v1795
        %v2628 = vpack.c.b16 %v1812, %v1796
        %v2629 = vpack.c.b16 %v1813, %v1797
        %v2630 = vpack.c.b16 %v1814, %v1798
        %v2631 = vpack.c.b16 %v1815, %v1799
        %v2632 = vpack.c.b16 %v1816, %v1800
        %v2633 = vpack.c.b16 %v1817, %v1801
        %v2634 = vpack.c.b16 %v1818, %v1802
        %v2635 = vpack.c.b16 %v1819, %v1803
        %v2636 = vpack.c.b16 %v1820, %v1804
        %v2637 = vpack.c.b16 %v1821, %v1805
        %v2638 = vpack.c.b16 %v1822, %v1806
        %v2639 = vpack.c.b16 %v1823, %v1807
        %v2640 = vpack.c.b16 %v1824, %v1808
        %v2641 = vpack.c.b16 %v1825, %v1809
        %v2642 = vpack.c.b16 %v1826, %v1810
        %v2643 = vpack.c.b16 %v1843, %v1827
        %v2644 = vpack.c.b16 %v1844, %v1828
        %v2645 = vpack.c.b16 %v1845, %v1829
        %v2646 = vpack.c.b16 %v1846, %v1830
        %v2647 = vpack.c.b16 %v1847, %v1831
        %v2648 = vpack.c.b16 %v1848, %v1832
        %v2649 = vpack.c.b16 %v1849, %v1833
        %v2650 = vpack.c.b16 %v1850, %v1834
        %v2651 = vpack.c.b16 %v1851, %v1835
        %v2652 = vpack.c.b16 %v1852, %v1836
        %v2653 = vpack.c.b16 %v1853, %v1837
        %v2654 = vpack.c.b16 %v1854, %v1838
        %v2655 = vpack.c.b16 %v1855, %v1839
        %v2656 = vpack.c.b16 %v1856, %v1840
        %v2657 = vpack.c.b16 %v1857, %v1841
        %v2658 = vpack.c.b16 %v1858, %v1842
        %v2659 = vpack.c.b16 %v1875, %v1859
        %v2660 = vpack.c.b16 %v1876, %v1860
        %v2661 = vpack.c.b16 %v1877, %v1861
        %v2662 = vpack.c.b16 %v1878, %v1862
        %v2663 = vpack.c.b16 %v1879, %v1863
        %v2664 = vpack.c.b16 %v1880, %v1864
        %v2665 = vpack.c.b16 %v1881, %v1865
        %v2666 = vpack.c.b16 %v1882, %v1866
        %v2667 = vpack.c.b16 %v1883, %v1867
        %v2668 = vpack.c.b16 %v1884, %v1868
        %v2669 = vpack.c.b16 %v1885, %v1869
        %v2670 = vpack.c.b16 %v1886, %v1870
        %v2671 = vpack.c.b16 %v1887, %v1871
        %v2672 = vpack.c.b16 %v1888, %v1872
        %v2673 = vpack.c.b16 %v1889, %v1873
        %v2674 = vpack.c.b16 %v1890, %v1874
        %v2675 = vpack.c.b16 %v1907, %v1891
        %v2676 = vpack.c.b16 %v1908, %v1892
        %v2677 = vpack.c.b16 %v1909, %v1893
        %v2678 = vpack.c.b16 %v1910, %v1894
        %v2679 = vpack.c.b16 %v1911, %v1895
        %v2680 = vpack.c.b16 %v1912, %v1896
        %v2681 = vpack.c.b16 %v1913, %v1897
        %v2682 = vpack.c.b16 %v1914, %v1898
        %v2683 = vpack.c.b16 %v1915, %v1899
        %v2684 = vpack.c.b16 %v1916, %v1900
        %v2685 = vpack.c.b16 %v1917, %v1901
        %v2686 = vpack.c.b16 %v1918, %v1902
        %v2687 = vpack.c.b16 %v1919, %v1903
        %v2688 = vpack.c.b16 %v1920, %v1904
        %v2689 = vpack.c.b16 %v1921, %v1905
        %v2690 = vpack.c.b16 %v1922, %v1906
        %v2691 = vpack.c.b16 %v1939, %v1923
        %v2692 = vpack.c.b16 %v1940, %v1924
        %v2693 = vpack.c.b16 %v1941, %v1925
        %v2694 = vpack.c.b16 %v1942, %v1926
        %v2695 = vpack.c.b16 %v1943, %v1927
        %v2696 = vpack.c.b16 %v1944, %v1928
        %v2697 = vpack.c.b16 %v1945, %v1929
        %v2698 = vpack.c.b16 %v1946, %v1930
        %v2699 = vpack.c.b16 %v1947, %v1931
        %v2700 = vpack.c.b16 %v1948, %v1932
        %v2701 = vpack.c.b16 %v1949, %v1933
        %v2702 = vpack.c.b16 %v1950, %v1934
        %v2703 = vpack.c.b16 %v1951, %v1935
        %v2704 = vpack.c.b16 %v1952, %v1936
        %v2705 = vpack.c.b16 %v1953, %v1937
        %v2706 = vpack.c.b16 %v1954, %v1938
        %v2707 = vpack.c.b16 %v1971, %v1955
        %v2708 = vpack.c.b16 %v1972, %v1956
        %v2709 = vpack.c.b16 %v1973, %v1957
        %v2710 = vpack.c.b16 %v1974, %v1958
        %v2711 = vpack.c.b16 %v1975, %v1959
        %v2712 = vpack.c.b16 %v1976, %v1960
        %v2713 = vpack.c.b16 %v1977, %v1961
        %v2714 = vpack.c.b16 %v1978, %v1962
        %v2715 = vpack.c.b16 %v1979, %v1963
        %v2716 = vpack.c.b16 %v1980, %v1964
        %v2717 = vpack.c.b16 %v1981, %v1965
        %v2718 = vpack.c.b16 %v1982, %v1966
        %v2719 = vpack.c.b16 %v1983, %v1967
        %v2720 = vpack.c.b16 %v1984, %v1968
        %v2721 = vpack.c.b16 %v1985, %v1969
        %v2722 = vpack.c.b16 %v1986, %v1970
        %v2723 = vpack.c.b16 %v2003, %v1987
        %v2724 = vpack.c.b16 %v2004, %v1988
        %v2725 = vpack.c.b16 %v2005, %v1989
        %v2726 = vpack.c.b16 %v2006, %v1990
        %v2727 = vpack.c.b16 %v2007, %v1991
        %v2728 = vpack.c.b16 %v2008, %v1992
        %v2729 = vpack.c.b16 %v2009, %v1993
        %v2730 = vpack.c.b16 %v2010, %v1994
        %v2731 = vpack.c.b16 %v2011, %v1995
        %v2732 = vpack.c.b16 %v2012, %v1996
        %v2733 = vpack.c.b16 %v2013, %v1997
        %v2734 = vpack.c.b16 %v2014, %v1998
        %v2735 = vpack.c.b16 %v2015, %v1999
        %v2736 = vpack.c.b16 %v2016, %v2000
        %v2737 = vpack.c.b16 %v2017, %v2001
        %v2738 = vpack.c.b16 %v2018, %v2002
        %v2739 = vpack.c.b16 %v2035, %v2019
        %v2740 = vpack.c.b16 %v2036, %v2020
        %v2741 = vpack.c.b16 %v2037, %v2021
        %v2742 = vpack.c.b16 %v2038, %v2022
        %v2743 = vpack.c.b16 %v2039, %v2023
        %v2744 = vpack.c.b16 %v2040, %v2024
        %v2745 = vpack.c.b16 %v2041, %v2025
        %v2746 = vpack.c.b16 %v2042, %v2026
        %v2747 = vpack.c.b16 %v2043, %v2027
        %v2748 = vpack.c.b16 %v2044, %v2028
        %v2749 = vpack.c.b16 %v2045, %v2029
        %v2750 = vpack.c.b16 %v2046, %v2030
        %v2751 = vpack.c.b16 %v2047, %v2031
        %v2752 = vpack.c.b16 %v2048, %v2032
        %v2753 = vpack.c.b16 %v2049, %v2033
        %v2754 = vpack.c.b16 %v2050, %v2034
        %v2755 = vpack.c.b16 %v2067, %v2051
        %v2756 = vpack.c.b16 %v2068, %v2052
        %v2757 = vpack.c.b16 %v2069, %v2053
        %v2758 = vpack.c.b16 %v2070, %v2054
        %v2759 = vpack.c.b16 %v2071, %v2055
        %v2760 = vpack.c.b16 %v2072, %v2056
        %v2761 = vpack.c.b16 %v2073, %v2057
        %v2762 = vpack.c.b16 %v2074, %v2058
        %v2763 = vpack.c.b16 %v2075, %v2059
        %v2764 = vpack.c.b16 %v2076, %v2060
        %v2765 = vpack.c.b16 %v2077, %v2061
        %v2766 = vpack.c.b16 %v2078, %v2062
        %v2767 = vpack.c.b16 %v2079, %v2063
        %v2768 = vpack.c.b16 %v2080, %v2064
        %v2769 = vpack.c.b16 %v2081, %v2065
        %v2770 = vpack.c.b16 %v2082, %v2066
        %v2771 = vpack.c.b16 %v2099, %v2083
        %v2772 = vpack.c.b16 %v2100, %v2084
        %v2773 = vpack.c.b16 %v2101, %v2085
        %v2774 = vpack.c.b16 %v2102, %v2086
        %v2775 = vpack.c.b16 %v2103, %v2087
        %v2776 = vpack.c.b16 %v2104, %v2088
        %v2777 = vpack.c.b16 %v2105, %v2089
        %v2778 = vpack.c.b16 %v2106, %v2090
        %v2779 = vpack.c.b16 %v2107, %v2091
        %v2780 = vpack.c.b16 %v2108, %v2092
        %v2781 = vpack.c.b16 %v2109, %v2093
        %v2782 = vpack.c.b16 %v2110, %v2094
        %v2783 = vpack.c.b16 %v2111, %v2095
        %v2784 = vpack.c.b16 %v2112, %v2096
        %v2785 = vpack.c.b16 %v2113, %v2097
        %v2786 = vpack.c.b16 %v2114, %v2098
        %v2787 = vpack.c.b16 %v2131, %v2115
        %v2788 = vpack.c.b16 %v2132, %v2116
        %v2789 = vpack.c.b16 %v2133, %v2117
        %v2790 = vpack.c.b16 %v2134, %v2118
        %v2791 = vpack.c.b16 %v2135, %v2119
        %v2792 = vpack.c.b16 %v2136, %v2120
        %v2793 = vpack.c.b16 %v2137, %v2121
        %v2794 = vpack.c.b16 %v2138, %v2122
        %v2795 = vpack.c.b16 %v2139, %v2123
        %v2796 = vpack.c.b16 %v2140, %v2124
        %v2797 = vpack.c.b16 %v2141, %v2125
        %v2798 = vpack.c.b16 %v2142, %v2126
        %v2799 = vpack.c.b16 %v2143, %v2127
        %v2800 = vpack.c.b16 %v2144, %v2128
        %v2801 = vpack.c.b16 %v2145, %v2129
        %v2802 = vpack.c.b16 %v2146, %v2130
        %v2803 = vpack.c.b16 %v2163, %v2147
        %v2804 = vpack.c.b16 %v2164, %v2148
        %v2805 = vpack.c.b16 %v2165, %v2149
        %v2806 = vpack.c.b16 %v2166, %v2150
        %v2807 = vpack.c.b16 %v2167, %v2151
        %v2808 = vpack.c.b16 %v2168, %v2152
        %v2809 = vpack.c.b16 %v2169, %v2153
        %v2810 = vpack.c.b16 %v2170, %v2154
        %v2811 = vpack.c.b16 %v2171, %v2155
        %v2812 = vpack.c.b16 %v2172, %v2156
        %v2813 = vpack.c.b16 %v2173, %v2157
        %v2814 = vpack.c.b16 %v2174, %v2158
        %v2815 = vpack.c.b16 %v2175, %v2159
        %v2816 = vpack.c.b16 %v2176, %v2160
        %v2817 = vpack.c.b16 %v2177, %v2161
        %v2818 = vpack.c.b16 %v2178, %v2162
        %v2819 = vpack.c.b16 %v2195, %v2179
        %v2820 = vpack.c.b16 %v2196, %v2180
        %v2821 = vpack.c.b16 %v2197, %v2181
        %v2822 = vpack.c.b16 %v2198, %v2182
        %v2823 = vpack.c.b16 %v2199, %v2183
        %v2824 = vpack.c.b16 %v2200, %v2184
        %v2825 = vpack.c.b16 %v2201, %v2185
        %v2826 = vpack.c.b16 %v2202, %v2186
        %v2827 = vpack.c.b16 %v2203, %v2187
        %v2828 = vpack.c.b16 %v2204, %v2188
        %v2829 = vpack.c.b16 %v2205, %v2189
        %v2830 = vpack.c.b16 %v2206, %v2190
        %v2831 = vpack.c.b16 %v2207, %v2191
        %v2832 = vpack.c.b16 %v2208, %v2192
        %v2833 = vpack.c.b16 %v2209, %v2193
        %v2834 = vpack.c.b16 %v2210, %v2194
        %v2835 = vpack.c.b16 %v2227, %v2211
        %v2836 = vpack.c.b16 %v2228, %v2212
        %v2837 = vpack.c.b16 %v2229, %v2213
        %v2838 = vpack.c.b16 %v2230, %v2214
        %v2839 = vpack.c.b16 %v2231, %v2215
        %v2840 = vpack.c.b16 %v2232, %v2216
        %v2841 = vpack.c.b16 %v2233, %v2217
        %v2842 = vpack.c.b16 %v2234, %v2218
        %v2843 = vpack.c.b16 %v2235, %v2219
        %v2844 = vpack.c.b16 %v2236, %v2220
        %v2845 = vpack.c.b16 %v2237, %v2221
        %v2846 = vpack.c.b16 %v2238, %v2222
        %v2847 = vpack.c.b16 %v2239, %v2223
        %v2848 = vpack.c.b16 %v2240, %v2224
        %v2849 = vpack.c.b16 %v2241, %v2225
        %v2850 = vpack.c.b16 %v2242, %v2226
        %v2851 = vpack.c.b16 %v2259, %v2243
        %v2852 = vpack.c.b16 %v2260, %v2244
        %v2853 = vpack.c.b16 %v2261, %v2245
        %v2854 = vpack.c.b16 %v2262, %v2246
        %v2855 = vpack.c.b16 %v2263, %v2247
        %v2856 = vpack.c.b16 %v2264, %v2248
        %v2857 = vpack.c.b16 %v2265, %v2249
        %v2858 = vpack.c.b16 %v2266, %v2250
        %v2859 = vpack.c.b16 %v2267, %v2251
        %v2860 = vpack.c.b16 %v2268, %v2252
        %v2861 = vpack.c.b16 %v2269, %v2253
        %v2862 = vpack.c.b16 %v2270, %v2254
        %v2863 = vpack.c.b16 %v2271, %v2255
        %v2864 = vpack.c.b16 %v2272, %v2256
        %v2865 = vpack.c.b16 %v2273, %v2257
        %v2866 = vpack.c.b16 %v2274, %v2258
        %v2867 = vpack.c.b16 %v2291, %v2275
        %v2868 = vpack.c.b16 %v2292, %v2276
        %v2869 = vpack.c.b16 %v2293, %v2277
        %v2870 = vpack.c.b16 %v2294, %v2278
        %v2871 = vpack.c.b16 %v2295, %v2279
        %v2872 = vpack.c.b16 %v2296, %v2280
        %v2873 = vpack.c.b16 %v2297, %v2281
        %v2874 = vpack.c.b16 %v2298, %v2282
        %v2875 = vpack.c.b16 %v2299, %v2283
        %v2876 = vpack.c.b16 %v2300, %v2284
        %v2877 = vpack.c.b16 %v2301, %v2285
        %v2878 = vpack.c.b16 %v2302, %v2286
        %v2879 = vpack.c.b16 %v2303, %v2287
        %v2880 = vpack.c.b16 %v2304, %v2288
        %v2881 = vpack.c.b16 %v2305, %v2289
        %v2882 = vpack.c.b16 %v2306, %v2290
        %v2883 = vpack.c.b16 %v2323, %v2307
        %v2884 = vpack.c.b16 %v2324, %v2308
        %v2885 = vpack.c.b16 %v2325, %v2309
        %v2886 = vpack.c.b16 %v2326, %v2310
        %v2887 = vpack.c.b16 %v2327, %v2311
        %v2888 = vpack.c.b16 %v2328, %v2312
        %v2889 = vpack.c.b16 %v2329, %v2313
        %v2890 = vpack.c.b16 %v2330, %v2314
        %v2891 = vpack.c.b16 %v2331, %v2315
        %v2892 = vpack.c.b16 %v2332, %v2316
        %v2893 = vpack.c.b16 %v2333, %v2317
        %v2894 = vpack.c.b16 %v2334, %v2318
        %v2895 = vpack.c.b16 %v2335, %v2319
        %v2896 = vpack.c.b16 %v2336, %v2320
        %v2897 = vpack.c.b16 %v2337, %v2321
        %v2898 = vpack.c.b16 %v2338, %v2322
        %v2899 = vpack.c.b16 %v2355, %v2339
        %v2900 = vpack.c.b16 %v2356, %v2340
        %v2901 = vpack.c.b16 %v2357, %v2341
        %v2902 = vpack.c.b16 %v2358, %v2342
        %v2903 = vpack.c.b16 %v2359, %v2343
        %v2904 = vpack.c.b16 %v2360, %v2344
        %v2905 = vpack.c.b16 %v2361, %v2345
        %v2906 = vpack.c.b16 %v2362, %v2346
        %v2907 = vpack.c.b16 %v2363, %v2347
        %v2908 = vpack.c.b16 %v2364, %v2348
        %v2909 = vpack.c.b16 %v2365, %v2349
        %v2910 = vpack.c.b16 %v2366, %v2350
        %v2911 = vpack.c.b16 %v2367, %v2351
        %v2912 = vpack.c.b16 %v2368, %v2352
        %v2913 = vpack.c.b16 %v2369, %v2353
        %v2914 = vpack.c.b16 %v2370, %v2354
        %v2915 = vpack.c.b16 %v2387, %v2371
        %v2916 = vpack.c.b16 %v2388, %v2372
        %v2917 = vpack.c.b16 %v2389, %v2373
        %v2918 = vpack.c.b16 %v2390, %v2374
        %v2919 = vpack.c.b16 %v2391, %v2375
        %v2920 = vpack.c.b16 %v2392, %v2376
        %v2921 = vpack.c.b16 %v2393, %v2377
        %v2922 = vpack.c.b16 %v2394, %v2378
        %v2923 = vpack.c.b16 %v2395, %v2379
        %v2924 = vpack.c.b16 %v2396, %v2380
        %v2925 = vpack.c.b16 %v2397, %v2381
        %v2926 = vpack.c.b16 %v2398, %v2382
        %v2927 = vpack.c.b16 %v2399, %v2383
        %v2928 = vpack.c.b16 %v2400, %v2384
        %v2929 = vpack.c.b16 %v2401, %v2385
        %v2930 = vpack.c.b16 %v2402, %v2386
        %v2931 = vpack.c.b16 %v2419, %v2403
        %v2932 = vpack.c.b16 %v2420, %v2404
        %v2933 = vpack.c.b16 %v2421, %v2405
        %v2934 = vpack.c.b16 %v2422, %v2406
        %v2935 = vpack.c.b16 %v2423, %v2407
        %v2936 = vpack.c.b16 %v2424, %v2408
        %v2937 = vpack.c.b16 %v2425, %v2409
        %v2938 = vpack.c.b16 %v2426, %v2410
        %v2939 = vpack.c.b16 %v2427, %v2411
        %v2940 = vpack.c.b16 %v2428, %v2412
        %v2941 = vpack.c.b16 %v2429, %v2413
        %v2942 = vpack.c.b16 %v2430, %v2414
        %v2943 = vpack.c.b16 %v2431, %v2415
        %v2944 = vpack.c.b16 %v2432, %v2416
        %v2945 = vpack.c.b16 %v2433, %v2417
        %v2946 = vpack.c.b16 %v2434, %v2418
        %3459 = vmatprep.subr.bf16.mxu0 %v2548
        %3460 = vmatpush1.bf16.msra.mxu0 %v2547
        %3461 = vmatprep.subr.bf16.mxu0 %v2532
        %3462 = vmatpush1.bf16.msra.mxu0 %v2531
        %3463 = vmatprep.subr.bf16.mxu0 %v2516
        %3464 = vmatpush1.bf16.msra.mxu0 %v2515
        %3465 = vmatprep.subr.bf16.mxu0 %v2500
        %3466 = vmatpush1.bf16.msra.mxu0 %v2499
        %3467 = vmatprep.subr.bf16.mxu0 %v2484
        %3468 = vmatpush1.bf16.msra.mxu0 %v2483
        %3469 = vmatprep.subr.bf16.mxu0 %v2468
        %3470 = vmatpush1.bf16.msra.mxu0 %v2467
        %3471 = vmatprep.subr.bf16.mxu0 %v2452
        %3472 = vmatpush1.bf16.msra.mxu0 %v2451
        %3473 = vmatprep.subr.bf16.mxu0 %v2436
        %3474 = vmatpush1.bf16.msra.mxu0 %v2435
        %3475 = vmatprep.subr.bf16.mxu0 %v2676
        %3476 = vmatpush2.bf16.msra.mxu0 %v2675
        %3477 = vmatprep.subr.bf16.mxu0 %v2660
        %3478 = vmatpush2.bf16.msra.mxu0 %v2659
        %3479 = vmatprep.subr.bf16.mxu0 %v2644
        %3480 = vmatpush2.bf16.msra.mxu0 %v2643
        %3481 = vmatprep.subr.bf16.mxu0 %v2628
        %3482 = vmatpush2.bf16.msra.mxu0 %v2627
        %3483 = vmatprep.subr.bf16.mxu0 %v2612
        %3484 = vmatpush2.bf16.msra.mxu0 %v2611
        %3485 = vmatprep.subr.bf16.mxu0 %v2596
        %3486 = vmatpush2.bf16.msra.mxu0 %v2595
        %3487 = vmatprep.subr.bf16.mxu0 %v2580
        %3488 = vmatpush2.bf16.msra.mxu0 %v2579
        %3489 = vmatprep.subr.bf16.mxu0 %v2564
        %3490 = vmatpush2.bf16.msra.mxu0 %v2563
        %3491 = vmatprep.mubr.bf16.mxu0 %v300
        %3492 = vmatmul.mubr.bf16.gmra.mxu0 %v299
        %v3493 = vpop.f32.mrf.mxu0
        %v3494 = vadd.f32 %v822, %v3493
        %v3495 = vpop.f32.mrf.mxu0
        %v3496 = vadd.f32 %v826, %v3495
        %v3497 = vpop.f32.mrf.mxu0
        %v3498 = vpop.f32.mrf.mxu0
        %3499 = vdwg.mxu0
        %3500 = vmatprep.subr.bf16.mxu0 %v2804
        %3501 = vmatpush1.bf16.msra.mxu0 %v2803
        %3502 = vmatprep.subr.bf16.mxu0 %v2788
        %3503 = vmatpush1.bf16.msra.mxu0 %v2787
        %3504 = vmatprep.subr.bf16.mxu0 %v2772
        %3505 = vmatpush1.bf16.msra.mxu0 %v2771
        %3506 = vmatprep.subr.bf16.mxu0 %v2756
        %3507 = vmatpush1.bf16.msra.mxu0 %v2755
        %3508 = vmatprep.subr.bf16.mxu0 %v2740
        %3509 = vmatpush1.bf16.msra.mxu0 %v2739
        %3510 = vmatprep.subr.bf16.mxu0 %v2724
        %3511 = vmatpush1.bf16.msra.mxu0 %v2723
        %3512 = vmatprep.subr.bf16.mxu0 %v2708
        %3513 = vmatpush1.bf16.msra.mxu0 %v2707
        %3514 = vmatprep.subr.bf16.mxu0 %v2692
        %3515 = vmatpush1.bf16.msra.mxu0 %v2691
        %3516 = vmatprep.subr.bf16.mxu0 %v2932
        %3517 = vmatpush2.bf16.msra.mxu0 %v2931
        %3518 = vmatprep.subr.bf16.mxu0 %v2916
        %3519 = vmatpush2.bf16.msra.mxu0 %v2915
        %3520 = vmatprep.subr.bf16.mxu0 %v2900
        %3521 = vmatpush2.bf16.msra.mxu0 %v2899
        %3522 = vmatprep.subr.bf16.mxu0 %v2884
        %3523 = vmatpush2.bf16.msra.mxu0 %v2883
        %3524 = vmatprep.subr.bf16.mxu0 %v2868
        %3525 = vmatpush2.bf16.msra.mxu0 %v2867
        %3526 = vmatprep.subr.bf16.mxu0 %v2852
        %3527 = vmatpush2.bf16.msra.mxu0 %v2851
        %3528 = vmatprep.subr.bf16.mxu0 %v2836
        %3529 = vmatpush2.bf16.msra.mxu0 %v2835
        %3530 = vmatprep.subr.bf16.mxu0 %v2820
        %3531 = vmatpush2.bf16.msra.mxu0 %v2819
        %3532 = vmatprep.mubr.bf16.mxu0 %v302
        %3533 = vmatmul.mubr.bf16.gmra.mxu0 %v301
        %v3534 = vpop.f32.mrf.mxu0
        %v3535 = vadd.f32 %v3494, %v3534
        %v3536 = vpop.f32.mrf.mxu0
        %v3537 = vadd.f32 %v3496, %v3536
        %v3538 = vpop.f32.mrf.mxu0
        %v3539 = vpop.f32.mrf.mxu0
        %3540 = vdwg.mxu0
        %3541 = vmatprep.subr.bf16.mxu0 %v2550
        %3542 = vmatpush1.bf16.msra.mxu0 %v2549
        %3543 = vmatprep.subr.bf16.mxu0 %v2534
        %3544 = vmatpush1.bf16.msra.mxu0 %v2533
        %3545 = vmatprep.subr.bf16.mxu0 %v2518
        %3546 = vmatpush1.bf16.msra.mxu0 %v2517
        %3547 = vmatprep.subr.bf16.mxu0 %v2502
        %3548 = vmatpush1.bf16.msra.mxu0 %v2501
        %3549 = vmatprep.subr.bf16.mxu0 %v2486
        %3550 = vmatpush1.bf16.msra.mxu0 %v2485
        %3551 = vmatprep.subr.bf16.mxu0 %v2470
        %3552 = vmatpush1.bf16.msra.mxu0 %v2469
        %3553 = vmatprep.subr.bf16.mxu0 %v2454
        %3554 = vmatpush1.bf16.msra.mxu0 %v2453
        %3555 = vmatprep.subr.bf16.mxu0 %v2438
        %3556 = vmatpush1.bf16.msra.mxu0 %v2437
        %3557 = vmatprep.subr.bf16.mxu0 %v2678
        %3558 = vmatpush2.bf16.msra.mxu0 %v2677
        %3559 = vmatprep.subr.bf16.mxu0 %v2662
        %3560 = vmatpush2.bf16.msra.mxu0 %v2661
        %3561 = vmatprep.subr.bf16.mxu0 %v2646
        %3562 = vmatpush2.bf16.msra.mxu0 %v2645
        %3563 = vmatprep.subr.bf16.mxu0 %v2630
        %3564 = vmatpush2.bf16.msra.mxu0 %v2629
        %3565 = vmatprep.subr.bf16.mxu0 %v2614
        %3566 = vmatpush2.bf16.msra.mxu0 %v2613
        %3567 = vmatprep.subr.bf16.mxu0 %v2598
        %3568 = vmatpush2.bf16.msra.mxu0 %v2597
        %3569 = vmatprep.subr.bf16.mxu0 %v2582
        %3570 = vmatpush2.bf16.msra.mxu0 %v2581
        %3571 = vmatprep.subr.bf16.mxu0 %v2566
        %3572 = vmatpush2.bf16.msra.mxu0 %v2565
        %3573 = vmatprep.mubr.bf16.mxu0 %v300
        %3574 = vmatmul.mubr.bf16.gmra.mxu0 %v299
        %v3575 = vpop.f32.mrf.mxu0
        %v3576 = vadd.f32 %v830, %v3575
        %v3577 = vpop.f32.mrf.mxu0
        %v3578 = vadd.f32 %v834, %v3577
        %v3579 = vpop.f32.mrf.mxu0
        %v3580 = vpop.f32.mrf.mxu0
        %3581 = vdwg.mxu0
        %3582 = vmatprep.subr.bf16.mxu0 %v2806
        %3583 = vmatpush1.bf16.msra.mxu0 %v2805
        %3584 = vmatprep.subr.bf16.mxu0 %v2790
        %3585 = vmatpush1.bf16.msra.mxu0 %v2789
        %3586 = vmatprep.subr.bf16.mxu0 %v2774
        %3587 = vmatpush1.bf16.msra.mxu0 %v2773
        %3588 = vmatprep.subr.bf16.mxu0 %v2758
        %3589 = vmatpush1.bf16.msra.mxu0 %v2757
        %3590 = vmatprep.subr.bf16.mxu0 %v2742
        %3591 = vmatpush1.bf16.msra.mxu0 %v2741
        %3592 = vmatprep.subr.bf16.mxu0 %v2726
        %3593 = vmatpush1.bf16.msra.mxu0 %v2725
        %3594 = vmatprep.subr.bf16.mxu0 %v2710
        %3595 = vmatpush1.bf16.msra.mxu0 %v2709
        %3596 = vmatprep.subr.bf16.mxu0 %v2694
        %3597 = vmatpush1.bf16.msra.mxu0 %v2693
        %3598 = vmatprep.subr.bf16.mxu0 %v2934
        %3599 = vmatpush2.bf16.msra.mxu0 %v2933
        %3600 = vmatprep.subr.bf16.mxu0 %v2918
        %3601 = vmatpush2.bf16.msra.mxu0 %v2917
        %3602 = vmatprep.subr.bf16.mxu0 %v2902
        %3603 = vmatpush2.bf16.msra.mxu0 %v2901
        %3604 = vmatprep.subr.bf16.mxu0 %v2886
        %3605 = vmatpush2.bf16.msra.mxu0 %v2885
        %3606 = vmatprep.subr.bf16.mxu0 %v2870
        %3607 = vmatpush2.bf16.msra.mxu0 %v2869
        %3608 = vmatprep.subr.bf16.mxu0 %v2854
        %3609 = vmatpush2.bf16.msra.mxu0 %v2853
        %3610 = vmatprep.subr.bf16.mxu0 %v2838
        %3611 = vmatpush2.bf16.msra.mxu0 %v2837
        %3612 = vmatprep.subr.bf16.mxu0 %v2822
        %3613 = vmatpush2.bf16.msra.mxu0 %v2821
        %3614 = vmatprep.mubr.bf16.mxu0 %v302
        %3615 = vmatmul.mubr.bf16.gmra.mxu0 %v301
        %v3616 = vpop.f32.mrf.mxu0
        %v3617 = vadd.f32 %v3576, %v3616
        %v3618 = vpop.f32.mrf.mxu0
        %v3619 = vadd.f32 %v3578, %v3618
        %v3620 = vpop.f32.mrf.mxu0
        %v3621 = vpop.f32.mrf.mxu0
        %3622 = vdwg.mxu0
        %3623 = vmatprep.subr.bf16.mxu0 %v2552
        %3624 = vmatpush1.bf16.msra.mxu0 %v2551
        %3625 = vmatprep.subr.bf16.mxu0 %v2536
        %3626 = vmatpush1.bf16.msra.mxu0 %v2535
        %3627 = vmatprep.subr.bf16.mxu0 %v2520
        %3628 = vmatpush1.bf16.msra.mxu0 %v2519
        %3629 = vmatprep.subr.bf16.mxu0 %v2504
        %3630 = vmatpush1.bf16.msra.mxu0 %v2503
        %3631 = vmatprep.subr.bf16.mxu0 %v2488
        %3632 = vmatpush1.bf16.msra.mxu0 %v2487
        %3633 = vmatprep.subr.bf16.mxu0 %v2472
        %3634 = vmatpush1.bf16.msra.mxu0 %v2471
        %3635 = vmatprep.subr.bf16.mxu0 %v2456
        %3636 = vmatpush1.bf16.msra.mxu0 %v2455
        %3637 = vmatprep.subr.bf16.mxu0 %v2440
        %3638 = vmatpush1.bf16.msra.mxu0 %v2439
        %3639 = vmatprep.subr.bf16.mxu0 %v2680
        %3640 = vmatpush2.bf16.msra.mxu0 %v2679
        %3641 = vmatprep.subr.bf16.mxu0 %v2664
        %3642 = vmatpush2.bf16.msra.mxu0 %v2663
        %3643 = vmatprep.subr.bf16.mxu0 %v2648
        %3644 = vmatpush2.bf16.msra.mxu0 %v2647
        %3645 = vmatprep.subr.bf16.mxu0 %v2632
        %3646 = vmatpush2.bf16.msra.mxu0 %v2631
        %3647 = vmatprep.subr.bf16.mxu0 %v2616
        %3648 = vmatpush2.bf16.msra.mxu0 %v2615
        %3649 = vmatprep.subr.bf16.mxu0 %v2600
        %3650 = vmatpush2.bf16.msra.mxu0 %v2599
        %3651 = vmatprep.subr.bf16.mxu0 %v2584
        %3652 = vmatpush2.bf16.msra.mxu0 %v2583
        %3653 = vmatprep.subr.bf16.mxu0 %v2568
        %3654 = vmatpush2.bf16.msra.mxu0 %v2567
        %3655 = vmatprep.mubr.bf16.mxu0 %v300
        %3656 = vmatmul.mubr.bf16.gmra.mxu0 %v299
        %v3657 = vpop.f32.mrf.mxu0
        %v3658 = vadd.f32 %v838, %v3657
        %v3659 = vpop.f32.mrf.mxu0
        %v3660 = vadd.f32 %v842, %v3659
        %v3661 = vpop.f32.mrf.mxu0
        %v3662 = vpop.f32.mrf.mxu0
        %3663 = vdwg.mxu0
        %3664 = vmatprep.subr.bf16.mxu0 %v2808
        %3665 = vmatpush1.bf16.msra.mxu0 %v2807
        %3666 = vmatprep.subr.bf16.mxu0 %v2792
        %3667 = vmatpush1.bf16.msra.mxu0 %v2791
        %3668 = vmatprep.subr.bf16.mxu0 %v2776
        %3669 = vmatpush1.bf16.msra.mxu0 %v2775
        %3670 = vmatprep.subr.bf16.mxu0 %v2760
        %3671 = vmatpush1.bf16.msra.mxu0 %v2759
        %3672 = vmatprep.subr.bf16.mxu0 %v2744
        %3673 = vmatpush1.bf16.msra.mxu0 %v2743
        %3674 = vmatprep.subr.bf16.mxu0 %v2728
        %3675 = vmatpush1.bf16.msra.mxu0 %v2727
        %3676 = vmatprep.subr.bf16.mxu0 %v2712
        %3677 = vmatpush1.bf16.msra.mxu0 %v2711
        %3678 = vmatprep.subr.bf16.mxu0 %v2696
        %3679 = vmatpush1.bf16.msra.mxu0 %v2695
        %3680 = vmatprep.subr.bf16.mxu0 %v2936
        %3681 = vmatpush2.bf16.msra.mxu0 %v2935
        %3682 = vmatprep.subr.bf16.mxu0 %v2920
        %3683 = vmatpush2.bf16.msra.mxu0 %v2919
        %3684 = vmatprep.subr.bf16.mxu0 %v2904
        %3685 = vmatpush2.bf16.msra.mxu0 %v2903
        %3686 = vmatprep.subr.bf16.mxu0 %v2888
        %3687 = vmatpush2.bf16.msra.mxu0 %v2887
        %3688 = vmatprep.subr.bf16.mxu0 %v2872
        %3689 = vmatpush2.bf16.msra.mxu0 %v2871
        %3690 = vmatprep.subr.bf16.mxu0 %v2856
        %3691 = vmatpush2.bf16.msra.mxu0 %v2855
        %3692 = vmatprep.subr.bf16.mxu0 %v2840
        %3693 = vmatpush2.bf16.msra.mxu0 %v2839
        %3694 = vmatprep.subr.bf16.mxu0 %v2824
        %3695 = vmatpush2.bf16.msra.mxu0 %v2823
        %3696 = vmatprep.mubr.bf16.mxu0 %v302
        %3697 = vmatmul.mubr.bf16.gmra.mxu0 %v301
        %v3698 = vpop.f32.mrf.mxu0
        %v3699 = vadd.f32 %v3658, %v3698
        %v3700 = vpop.f32.mrf.mxu0
        %v3701 = vadd.f32 %v3660, %v3700
        %v3702 = vpop.f32.mrf.mxu0
        %v3703 = vpop.f32.mrf.mxu0
        %3704 = vdwg.mxu0
        %3705 = vmatprep.subr.bf16.mxu0 %v2554
        %3706 = vmatpush1.bf16.msra.mxu0 %v2553
        %3707 = vmatprep.subr.bf16.mxu0 %v2538
        %3708 = vmatpush1.bf16.msra.mxu0 %v2537
        %3709 = vmatprep.subr.bf16.mxu0 %v2522
        %3710 = vmatpush1.bf16.msra.mxu0 %v2521
        %3711 = vmatprep.subr.bf16.mxu0 %v2506
        %3712 = vmatpush1.bf16.msra.mxu0 %v2505
        %3713 = vmatprep.subr.bf16.mxu0 %v2490
        %3714 = vmatpush1.bf16.msra.mxu0 %v2489
        %3715 = vmatprep.subr.bf16.mxu0 %v2474
        %3716 = vmatpush1.bf16.msra.mxu0 %v2473
        %3717 = vmatprep.subr.bf16.mxu0 %v2458
        %3718 = vmatpush1.bf16.msra.mxu0 %v2457
        %3719 = vmatprep.subr.bf16.mxu0 %v2442
        %3720 = vmatpush1.bf16.msra.mxu0 %v2441
        %3721 = vmatprep.subr.bf16.mxu0 %v2682
        %3722 = vmatpush2.bf16.msra.mxu0 %v2681
        %3723 = vmatprep.subr.bf16.mxu0 %v2666
        %3724 = vmatpush2.bf16.msra.mxu0 %v2665
        %3725 = vmatprep.subr.bf16.mxu0 %v2650
        %3726 = vmatpush2.bf16.msra.mxu0 %v2649
        %3727 = vmatprep.subr.bf16.mxu0 %v2634
        %3728 = vmatpush2.bf16.msra.mxu0 %v2633
        %3729 = vmatprep.subr.bf16.mxu0 %v2618
        %3730 = vmatpush2.bf16.msra.mxu0 %v2617
        %3731 = vmatprep.subr.bf16.mxu0 %v2602
        %3732 = vmatpush2.bf16.msra.mxu0 %v2601
        %3733 = vmatprep.subr.bf16.mxu0 %v2586
        %3734 = vmatpush2.bf16.msra.mxu0 %v2585
        %3735 = vmatprep.subr.bf16.mxu0 %v2570
        %3736 = vmatpush2.bf16.msra.mxu0 %v2569
        %3737 = vmatprep.mubr.bf16.mxu0 %v300
        %3738 = vmatmul.mubr.bf16.gmra.mxu0 %v299
        %v3739 = vpop.f32.mrf.mxu0
        %v3740 = vadd.f32 %v846, %v3739
        %v3741 = vpop.f32.mrf.mxu0
        %v3742 = vadd.f32 %v850, %v3741
        %v3743 = vpop.f32.mrf.mxu0
        %v3744 = vpop.f32.mrf.mxu0
        %3745 = vdwg.mxu0
        %3746 = vmatprep.subr.bf16.mxu0 %v2810
        %3747 = vmatpush1.bf16.msra.mxu0 %v2809
        %3748 = vmatprep.subr.bf16.mxu0 %v2794
        %3749 = vmatpush1.bf16.msra.mxu0 %v2793
        %3750 = vmatprep.subr.bf16.mxu0 %v2778
        %3751 = vmatpush1.bf16.msra.mxu0 %v2777
        %3752 = vmatprep.subr.bf16.mxu0 %v2762
        %3753 = vmatpush1.bf16.msra.mxu0 %v2761
        %3754 = vmatprep.subr.bf16.mxu0 %v2746
        %3755 = vmatpush1.bf16.msra.mxu0 %v2745
        %3756 = vmatprep.subr.bf16.mxu0 %v2730
        %3757 = vmatpush1.bf16.msra.mxu0 %v2729
        %3758 = vmatprep.subr.bf16.mxu0 %v2714
        %3759 = vmatpush1.bf16.msra.mxu0 %v2713
        %3760 = vmatprep.subr.bf16.mxu0 %v2698
        %3761 = vmatpush1.bf16.msra.mxu0 %v2697
        %3762 = vmatprep.subr.bf16.mxu0 %v2938
        %3763 = vmatpush2.bf16.msra.mxu0 %v2937
        %3764 = vmatprep.subr.bf16.mxu0 %v2922
        %3765 = vmatpush2.bf16.msra.mxu0 %v2921
        %3766 = vmatprep.subr.bf16.mxu0 %v2906
        %3767 = vmatpush2.bf16.msra.mxu0 %v2905
        %3768 = vmatprep.subr.bf16.mxu0 %v2890
        %3769 = vmatpush2.bf16.msra.mxu0 %v2889
        %3770 = vmatprep.subr.bf16.mxu0 %v2874
        %3771 = vmatpush2.bf16.msra.mxu0 %v2873
        %3772 = vmatprep.subr.bf16.mxu0 %v2858
        %3773 = vmatpush2.bf16.msra.mxu0 %v2857
        %3774 = vmatprep.subr.bf16.mxu0 %v2842
        %3775 = vmatpush2.bf16.msra.mxu0 %v2841
        %3776 = vmatprep.subr.bf16.mxu0 %v2826
        %3777 = vmatpush2.bf16.msra.mxu0 %v2825
        %3778 = vmatprep.mubr.bf16.mxu0 %v302
        %3779 = vmatmul.mubr.bf16.gmra.mxu0 %v301
        %v3780 = vpop.f32.mrf.mxu0
        %v3781 = vadd.f32 %v3740, %v3780
        %v3782 = vpop.f32.mrf.mxu0
        %v3783 = vadd.f32 %v3742, %v3782
        %v3784 = vpop.f32.mrf.mxu0
        %v3785 = vpop.f32.mrf.mxu0
        %3786 = vdwg.mxu0
        %3787 = vmatprep.subr.bf16.mxu0 %v2556
        %3788 = vmatpush1.bf16.msra.mxu0 %v2555
        %3789 = vmatprep.subr.bf16.mxu0 %v2540
        %3790 = vmatpush1.bf16.msra.mxu0 %v2539
        %3791 = vmatprep.subr.bf16.mxu0 %v2524
        %3792 = vmatpush1.bf16.msra.mxu0 %v2523
        %3793 = vmatprep.subr.bf16.mxu0 %v2508
        %3794 = vmatpush1.bf16.msra.mxu0 %v2507
        %3795 = vmatprep.subr.bf16.mxu0 %v2492
        %3796 = vmatpush1.bf16.msra.mxu0 %v2491
        %3797 = vmatprep.subr.bf16.mxu0 %v2476
        %3798 = vmatpush1.bf16.msra.mxu0 %v2475
        %3799 = vmatprep.subr.bf16.mxu0 %v2460
        %3800 = vmatpush1.bf16.msra.mxu0 %v2459
        %3801 = vmatprep.subr.bf16.mxu0 %v2444
        %3802 = vmatpush1.bf16.msra.mxu0 %v2443
        %3803 = vmatprep.subr.bf16.mxu0 %v2684
        %3804 = vmatpush2.bf16.msra.mxu0 %v2683
        %3805 = vmatprep.subr.bf16.mxu0 %v2668
        %3806 = vmatpush2.bf16.msra.mxu0 %v2667
        %3807 = vmatprep.subr.bf16.mxu0 %v2652
        %3808 = vmatpush2.bf16.msra.mxu0 %v2651
        %3809 = vmatprep.subr.bf16.mxu0 %v2636
        %3810 = vmatpush2.bf16.msra.mxu0 %v2635
        %3811 = vmatprep.subr.bf16.mxu0 %v2620
        %3812 = vmatpush2.bf16.msra.mxu0 %v2619
        %3813 = vmatprep.subr.bf16.mxu0 %v2604
        %3814 = vmatpush2.bf16.msra.mxu0 %v2603
        %3815 = vmatprep.subr.bf16.mxu0 %v2588
        %3816 = vmatpush2.bf16.msra.mxu0 %v2587
        %3817 = vmatprep.subr.bf16.mxu0 %v2572
        %3818 = vmatpush2.bf16.msra.mxu0 %v2571
        %3819 = vmatprep.mubr.bf16.mxu0 %v300
        %3820 = vmatmul.mubr.bf16.gmra.mxu0 %v299
        %v3821 = vpop.f32.mrf.mxu0
        %v3822 = vadd.f32 %v854, %v3821
        %v3823 = vpop.f32.mrf.mxu0
        %v3824 = vadd.f32 %v858, %v3823
        %v3825 = vpop.f32.mrf.mxu0
        %v3826 = vpop.f32.mrf.mxu0
        %3827 = vdwg.mxu0
        %3828 = vmatprep.subr.bf16.mxu0 %v2812
        %3829 = vmatpush1.bf16.msra.mxu0 %v2811
        %3830 = vmatprep.subr.bf16.mxu0 %v2796
        %3831 = vmatpush1.bf16.msra.mxu0 %v2795
        %3832 = vmatprep.subr.bf16.mxu0 %v2780
        %3833 = vmatpush1.bf16.msra.mxu0 %v2779
        %3834 = vmatprep.subr.bf16.mxu0 %v2764
        %3835 = vmatpush1.bf16.msra.mxu0 %v2763
        %3836 = vmatprep.subr.bf16.mxu0 %v2748
        %3837 = vmatpush1.bf16.msra.mxu0 %v2747
        %3838 = vmatprep.subr.bf16.mxu0 %v2732
        %3839 = vmatpush1.bf16.msra.mxu0 %v2731
        %3840 = vmatprep.subr.bf16.mxu0 %v2716
        %3841 = vmatpush1.bf16.msra.mxu0 %v2715
        %3842 = vmatprep.subr.bf16.mxu0 %v2700
        %3843 = vmatpush1.bf16.msra.mxu0 %v2699
        %3844 = vmatprep.subr.bf16.mxu0 %v2940
        %3845 = vmatpush2.bf16.msra.mxu0 %v2939
        %3846 = vmatprep.subr.bf16.mxu0 %v2924
        %3847 = vmatpush2.bf16.msra.mxu0 %v2923
        %3848 = vmatprep.subr.bf16.mxu0 %v2908
        %3849 = vmatpush2.bf16.msra.mxu0 %v2907
        %3850 = vmatprep.subr.bf16.mxu0 %v2892
        %3851 = vmatpush2.bf16.msra.mxu0 %v2891
        %3852 = vmatprep.subr.bf16.mxu0 %v2876
        %3853 = vmatpush2.bf16.msra.mxu0 %v2875
        %3854 = vmatprep.subr.bf16.mxu0 %v2860
        %3855 = vmatpush2.bf16.msra.mxu0 %v2859
        %3856 = vmatprep.subr.bf16.mxu0 %v2844
        %3857 = vmatpush2.bf16.msra.mxu0 %v2843
        %3858 = vmatprep.subr.bf16.mxu0 %v2828
        %3859 = vmatpush2.bf16.msra.mxu0 %v2827
        %3860 = vmatprep.mubr.bf16.mxu0 %v302
        %3861 = vmatmul.mubr.bf16.gmra.mxu0 %v301
        %v3862 = vpop.f32.mrf.mxu0
        %v3863 = vadd.f32 %v3822, %v3862
        %v3864 = vpop.f32.mrf.mxu0
        %v3865 = vadd.f32 %v3824, %v3864
        %v3866 = vpop.f32.mrf.mxu0
        %v3867 = vpop.f32.mrf.mxu0
        %3868 = vdwg.mxu0
        %3869 = vmatprep.subr.bf16.mxu0 %v2558
        %3870 = vmatpush1.bf16.msra.mxu0 %v2557
        %3871 = vmatprep.subr.bf16.mxu0 %v2542
        %3872 = vmatpush1.bf16.msra.mxu0 %v2541
        %3873 = vmatprep.subr.bf16.mxu0 %v2526
        %3874 = vmatpush1.bf16.msra.mxu0 %v2525
        %3875 = vmatprep.subr.bf16.mxu0 %v2510
        %3876 = vmatpush1.bf16.msra.mxu0 %v2509
        %3877 = vmatprep.subr.bf16.mxu0 %v2494
        %3878 = vmatpush1.bf16.msra.mxu0 %v2493
        %3879 = vmatprep.subr.bf16.mxu0 %v2478
        %3880 = vmatpush1.bf16.msra.mxu0 %v2477
        %3881 = vmatprep.subr.bf16.mxu0 %v2462
        %3882 = vmatpush1.bf16.msra.mxu0 %v2461
        %3883 = vmatprep.subr.bf16.mxu0 %v2446
        %3884 = vmatpush1.bf16.msra.mxu0 %v2445
        %3885 = vmatprep.subr.bf16.mxu0 %v2686
        %3886 = vmatpush2.bf16.msra.mxu0 %v2685
        %3887 = vmatprep.subr.bf16.mxu0 %v2670
        %3888 = vmatpush2.bf16.msra.mxu0 %v2669
        %3889 = vmatprep.subr.bf16.mxu0 %v2654
        %3890 = vmatpush2.bf16.msra.mxu0 %v2653
        %3891 = vmatprep.subr.bf16.mxu0 %v2638
        %3892 = vmatpush2.bf16.msra.mxu0 %v2637
        %3893 = vmatprep.subr.bf16.mxu0 %v2622
        %3894 = vmatpush2.bf16.msra.mxu0 %v2621
        %3895 = vmatprep.subr.bf16.mxu0 %v2606
        %3896 = vmatpush2.bf16.msra.mxu0 %v2605
        %3897 = vmatprep.subr.bf16.mxu0 %v2590
        %3898 = vmatpush2.bf16.msra.mxu0 %v2589
        %3899 = vmatprep.subr.bf16.mxu0 %v2574
        %3900 = vmatpush2.bf16.msra.mxu0 %v2573
        %3901 = vmatprep.mubr.bf16.mxu0 %v300
        %3902 = vmatmul.mubr.bf16.gmra.mxu0 %v299
        %v3903 = vpop.f32.mrf.mxu0
        %v3904 = vadd.f32 %v862, %v3903
        %v3905 = vpop.f32.mrf.mxu0
        %v3906 = vadd.f32 %v866, %v3905
        %v3907 = vpop.f32.mrf.mxu0
        %v3908 = vpop.f32.mrf.mxu0
        %3909 = vdwg.mxu0
        %3910 = vmatprep.subr.bf16.mxu0 %v2814
        %3911 = vmatpush1.bf16.msra.mxu0 %v2813
        %3912 = vmatprep.subr.bf16.mxu0 %v2798
        %3913 = vmatpush1.bf16.msra.mxu0 %v2797
        %3914 = vmatprep.subr.bf16.mxu0 %v2782
        %3915 = vmatpush1.bf16.msra.mxu0 %v2781
        %3916 = vmatprep.subr.bf16.mxu0 %v2766
        %3917 = vmatpush1.bf16.msra.mxu0 %v2765
        %3918 = vmatprep.subr.bf16.mxu0 %v2750
        %3919 = vmatpush1.bf16.msra.mxu0 %v2749
        %3920 = vmatprep.subr.bf16.mxu0 %v2734
        %3921 = vmatpush1.bf16.msra.mxu0 %v2733
        %3922 = vmatprep.subr.bf16.mxu0 %v2718
        %3923 = vmatpush1.bf16.msra.mxu0 %v2717
        %3924 = vmatprep.subr.bf16.mxu0 %v2702
        %3925 = vmatpush1.bf16.msra.mxu0 %v2701
        %3926 = vmatprep.subr.bf16.mxu0 %v2942
        %3927 = vmatpush2.bf16.msra.mxu0 %v2941
        %3928 = vmatprep.subr.bf16.mxu0 %v2926
        %3929 = vmatpush2.bf16.msra.mxu0 %v2925
        %3930 = vmatprep.subr.bf16.mxu0 %v2910
        %3931 = vmatpush2.bf16.msra.mxu0 %v2909
        %3932 = vmatprep.subr.bf16.mxu0 %v2894
        %3933 = vmatpush2.bf16.msra.mxu0 %v2893
        %3934 = vmatprep.subr.bf16.mxu0 %v2878
        %3935 = vmatpush2.bf16.msra.mxu0 %v2877
        %3936 = vmatprep.subr.bf16.mxu0 %v2862
        %3937 = vmatpush2.bf16.msra.mxu0 %v2861
        %3938 = vmatprep.subr.bf16.mxu0 %v2846
        %3939 = vmatpush2.bf16.msra.mxu0 %v2845
        %3940 = vmatprep.subr.bf16.mxu0 %v2830
        %3941 = vmatpush2.bf16.msra.mxu0 %v2829
        %3942 = vmatprep.mubr.bf16.mxu0 %v302
        %3943 = vmatmul.mubr.bf16.gmra.mxu0 %v301
        %v3944 = vpop.f32.mrf.mxu0
        %v3945 = vadd.f32 %v3904, %v3944
        %v3946 = vpop.f32.mrf.mxu0
        %v3947 = vadd.f32 %v3906, %v3946
        %v3948 = vpop.f32.mrf.mxu0
        %v3949 = vpop.f32.mrf.mxu0
        %3950 = vdwg.mxu0
        %3951 = vmatprep.subr.bf16.mxu0 %v2560
        %3952 = vmatpush1.bf16.msra.mxu0 %v2559
        %3953 = vmatprep.subr.bf16.mxu0 %v2544
        %3954 = vmatpush1.bf16.msra.mxu0 %v2543
        %3955 = vmatprep.subr.bf16.mxu0 %v2528
        %3956 = vmatpush1.bf16.msra.mxu0 %v2527
        %3957 = vmatprep.subr.bf16.mxu0 %v2512
        %3958 = vmatpush1.bf16.msra.mxu0 %v2511
        %3959 = vmatprep.subr.bf16.mxu0 %v2496
        %3960 = vmatpush1.bf16.msra.mxu0 %v2495
        %3961 = vmatprep.subr.bf16.mxu0 %v2480
        %3962 = vmatpush1.bf16.msra.mxu0 %v2479
        %3963 = vmatprep.subr.bf16.mxu0 %v2464
        %3964 = vmatpush1.bf16.msra.mxu0 %v2463
        %3965 = vmatprep.subr.bf16.mxu0 %v2448
        %3966 = vmatpush1.bf16.msra.mxu0 %v2447
        %3967 = vmatprep.subr.bf16.mxu0 %v2688
        %3968 = vmatpush2.bf16.msra.mxu0 %v2687
        %3969 = vmatprep.subr.bf16.mxu0 %v2672
        %3970 = vmatpush2.bf16.msra.mxu0 %v2671
        %3971 = vmatprep.subr.bf16.mxu0 %v2656
        %3972 = vmatpush2.bf16.msra.mxu0 %v2655
        %3973 = vmatprep.subr.bf16.mxu0 %v2640
        %3974 = vmatpush2.bf16.msra.mxu0 %v2639
        %3975 = vmatprep.subr.bf16.mxu0 %v2624
        %3976 = vmatpush2.bf16.msra.mxu0 %v2623
        %3977 = vmatprep.subr.bf16.mxu0 %v2608
        %3978 = vmatpush2.bf16.msra.mxu0 %v2607
        %3979 = vmatprep.subr.bf16.mxu0 %v2592
        %3980 = vmatpush2.bf16.msra.mxu0 %v2591
        %3981 = vmatprep.subr.bf16.mxu0 %v2576
        %3982 = vmatpush2.bf16.msra.mxu0 %v2575
        %3983 = vmatprep.mubr.bf16.mxu0 %v300
        %3984 = vmatmul.mubr.bf16.gmra.mxu0 %v299
        %v3985 = vpop.f32.mrf.mxu0
        %v3986 = vadd.f32 %v870, %v3985
        %v3987 = vpop.f32.mrf.mxu0
        %v3988 = vadd.f32 %v874, %v3987
        %v3989 = vpop.f32.mrf.mxu0
        %v3990 = vpop.f32.mrf.mxu0
        %3991 = vdwg.mxu0
        %3992 = vmatprep.subr.bf16.mxu0 %v2816
        %3993 = vmatpush1.bf16.msra.mxu0 %v2815
        %3994 = vmatprep.subr.bf16.mxu0 %v2800
        %3995 = vmatpush1.bf16.msra.mxu0 %v2799
        %3996 = vmatprep.subr.bf16.mxu0 %v2784
        %3997 = vmatpush1.bf16.msra.mxu0 %v2783
        %3998 = vmatprep.subr.bf16.mxu0 %v2768
        %3999 = vmatpush1.bf16.msra.mxu0 %v2767
        %4000 = vmatprep.subr.bf16.mxu0 %v2752
        %4001 = vmatpush1.bf16.msra.mxu0 %v2751
        %4002 = vmatprep.subr.bf16.mxu0 %v2736
        %4003 = vmatpush1.bf16.msra.mxu0 %v2735
        %4004 = vmatprep.subr.bf16.mxu0 %v2720
        %4005 = vmatpush1.bf16.msra.mxu0 %v2719
        %4006 = vmatprep.subr.bf16.mxu0 %v2704
        %4007 = vmatpush1.bf16.msra.mxu0 %v2703
        %4008 = vmatprep.subr.bf16.mxu0 %v2944
        %4009 = vmatpush2.bf16.msra.mxu0 %v2943
        %4010 = vmatprep.subr.bf16.mxu0 %v2928
        %4011 = vmatpush2.bf16.msra.mxu0 %v2927
        %4012 = vmatprep.subr.bf16.mxu0 %v2912
        %4013 = vmatpush2.bf16.msra.mxu0 %v2911
        %4014 = vmatprep.subr.bf16.mxu0 %v2896
        %4015 = vmatpush2.bf16.msra.mxu0 %v2895
        %4016 = vmatprep.subr.bf16.mxu0 %v2880
        %4017 = vmatpush2.bf16.msra.mxu0 %v2879
        %4018 = vmatprep.subr.bf16.mxu0 %v2864
        %4019 = vmatpush2.bf16.msra.mxu0 %v2863
        %4020 = vmatprep.subr.bf16.mxu0 %v2848
        %4021 = vmatpush2.bf16.msra.mxu0 %v2847
        %4022 = vmatprep.subr.bf16.mxu0 %v2832
        %4023 = vmatpush2.bf16.msra.mxu0 %v2831
        %4024 = vmatprep.mubr.bf16.mxu0 %v302
        %4025 = vmatmul.mubr.bf16.gmra.mxu0 %v301
        %v4026 = vpop.f32.mrf.mxu0
        %v4027 = vadd.f32 %v3986, %v4026
        %v4028 = vpop.f32.mrf.mxu0
        %v4029 = vadd.f32 %v3988, %v4028
        %v4030 = vpop.f32.mrf.mxu0
        %v4031 = vpop.f32.mrf.mxu0
        %4032 = vdwg.mxu0
        %4033 = vmatprep.subr.bf16.mxu0 %v2562
        %4034 = vmatpush1.bf16.msra.mxu0 %v2561
        %4035 = vmatprep.subr.bf16.mxu0 %v2546
        %4036 = vmatpush1.bf16.msra.mxu0 %v2545
        %4037 = vmatprep.subr.bf16.mxu0 %v2530
        %4038 = vmatpush1.bf16.msra.mxu0 %v2529
        %4039 = vmatprep.subr.bf16.mxu0 %v2514
        %4040 = vmatpush1.bf16.msra.mxu0 %v2513
        %4041 = vmatprep.subr.bf16.mxu0 %v2498
        %4042 = vmatpush1.bf16.msra.mxu0 %v2497
        %4043 = vmatprep.subr.bf16.mxu0 %v2482
        %4044 = vmatpush1.bf16.msra.mxu0 %v2481
        %4045 = vmatprep.subr.bf16.mxu0 %v2466
        %4046 = vmatpush1.bf16.msra.mxu0 %v2465
        %4047 = vmatprep.subr.bf16.mxu0 %v2450
        %4048 = vmatpush1.bf16.msra.mxu0 %v2449
        %4049 = vmatprep.subr.bf16.mxu0 %v2690
        %4050 = vmatpush2.bf16.msra.mxu0 %v2689
        %4051 = vmatprep.subr.bf16.mxu0 %v2674
        %4052 = vmatpush2.bf16.msra.mxu0 %v2673
        %4053 = vmatprep.subr.bf16.mxu0 %v2658
        %4054 = vmatpush2.bf16.msra.mxu0 %v2657
        %4055 = vmatprep.subr.bf16.mxu0 %v2642
        %4056 = vmatpush2.bf16.msra.mxu0 %v2641
        %4057 = vmatprep.subr.bf16.mxu0 %v2626
        %4058 = vmatpush2.bf16.msra.mxu0 %v2625
        %4059 = vmatprep.subr.bf16.mxu0 %v2610
        %4060 = vmatpush2.bf16.msra.mxu0 %v2609
        %4061 = vmatprep.subr.bf16.mxu0 %v2594
        %4062 = vmatpush2.bf16.msra.mxu0 %v2593
        %4063 = vmatprep.subr.bf16.mxu0 %v2578
        %4064 = vmatpush2.bf16.msra.mxu0 %v2577
        %4065 = vmatprep.mubr.bf16.mxu0 %v300
        %4066 = vmatmul.mubr.bf16.gmra.mxu0 %v299
        %v4067 = vpop.f32.mrf.mxu0
        %v4068 = vadd.f32 %v878, %v4067
        %v4069 = vpop.f32.mrf.mxu0
        %v4070 = vadd.f32 %v882, %v4069
        %v4071 = vpop.f32.mrf.mxu0
        %v4072 = vpop.f32.mrf.mxu0
        %4073 = vdwg.mxu0
        %4074 = vmatprep.subr.bf16.mxu0 %v2818
        %4075 = vmatpush1.bf16.msra.mxu0 %v2817
        %4076 = vmatprep.subr.bf16.mxu0 %v2802
        %4077 = vmatpush1.bf16.msra.mxu0 %v2801
        %4078 = vmatprep.subr.bf16.mxu0 %v2786
        %4079 = vmatpush1.bf16.msra.mxu0 %v2785
        %4080 = vmatprep.subr.bf16.mxu0 %v2770
        %4081 = vmatpush1.bf16.msra.mxu0 %v2769
        %4082 = vmatprep.subr.bf16.mxu0 %v2754
        %4083 = vmatpush1.bf16.msra.mxu0 %v2753
        %4084 = vmatprep.subr.bf16.mxu0 %v2738
        %4085 = vmatpush1.bf16.msra.mxu0 %v2737
        %4086 = vmatprep.subr.bf16.mxu0 %v2722
        %4087 = vmatpush1.bf16.msra.mxu0 %v2721
        %4088 = vmatprep.subr.bf16.mxu0 %v2706
        %4089 = vmatpush1.bf16.msra.mxu0 %v2705
        %4090 = vmatprep.subr.bf16.mxu0 %v2946
        %4091 = vmatpush2.bf16.msra.mxu0 %v2945
        %4092 = vmatprep.subr.bf16.mxu0 %v2930
        %4093 = vmatpush2.bf16.msra.mxu0 %v2929
        %4094 = vmatprep.subr.bf16.mxu0 %v2914
        %4095 = vmatpush2.bf16.msra.mxu0 %v2913
        %4096 = vmatprep.subr.bf16.mxu0 %v2898
        %4097 = vmatpush2.bf16.msra.mxu0 %v2897
        %4098 = vmatprep.subr.bf16.mxu0 %v2882
        %4099 = vmatpush2.bf16.msra.mxu0 %v2881
        %4100 = vmatprep.subr.bf16.mxu0 %v2866
        %4101 = vmatpush2.bf16.msra.mxu0 %v2865
        %4102 = vmatprep.subr.bf16.mxu0 %v2850
        %4103 = vmatpush2.bf16.msra.mxu0 %v2849
        %4104 = vmatprep.subr.bf16.mxu0 %v2834
        %4105 = vmatpush2.bf16.msra.mxu0 %v2833
        %4106 = vmatprep.mubr.bf16.mxu0 %v302
        %4107 = vmatmul.mubr.bf16.gmra.mxu0 %v301
        %v4108 = vpop.f32.mrf.mxu0
        %v4109 = vadd.f32 %v4068, %v4108
        %v4110 = vpop.f32.mrf.mxu0
        %v4111 = vadd.f32 %v4070, %v4110
        %v4112 = vpop.f32.mrf.mxu0
        %v4113 = vpop.f32.mrf.mxu0
        %4114 = vdwg.mxu0
        %v4115 = vmax.f32 %v3535, 0.0
        %v4116 = vmax.f32 %v3537, 0.0
        %v4117 = vmax.f32 %v3617, 0.0
        %v4118 = vmax.f32 %v3619, 0.0
        %v4119 = vmax.f32 %v3699, 0.0
        %v4120 = vmax.f32 %v3701, 0.0
        %v4121 = vmax.f32 %v3781, 0.0
        %v4122 = vmax.f32 %v3783, 0.0
        %v4123 = vmax.f32 %v3863, 0.0
        %v4124 = vmax.f32 %v3865, 0.0
        %v4125 = vmax.f32 %v3945, 0.0
        %v4126 = vmax.f32 %v3947, 0.0
        %v4127 = vmax.f32 %v4027, 0.0
        %v4128 = vmax.f32 %v4029, 0.0
        %v4129 = vmax.f32 %v4109, 0.0
        %v4130 = vmax.f32 %v4111, 0.0
        %v4131 = vpack.c.bf16 %v4115, %v4115
        %v4132 = vpack.c.bf16 %v4116, %v4116
        %v4133 = vpack.c.bf16 %v4117, %v4117
        %v4134 = vpack.c.bf16 %v4118, %v4118
        %v4135 = vpack.c.bf16 %v4119, %v4119
        %v4136 = vpack.c.bf16 %v4120, %v4120
        %v4137 = vpack.c.bf16 %v4121, %v4121
        %v4138 = vpack.c.bf16 %v4122, %v4122
        %v4139 = vpack.c.bf16 %v4123, %v4123
        %v4140 = vpack.c.bf16 %v4124, %v4124
        %v4141 = vpack.c.bf16 %v4125, %v4125
        %v4142 = vpack.c.bf16 %v4126, %v4126
        %v4143 = vpack.c.bf16 %v4127, %v4127
        %v4144 = vpack.c.bf16 %v4128, %v4128
        %v4145 = vpack.c.bf16 %v4129, %v4129
        %v4146 = vpack.c.bf16 %v4130, %v4130
        %v4147 = vld [vmem:[#allocation8] sm:$0xff]
        %v4148 = vld [vmem:[#allocation8 + $0x8] sm:$0xff]
        %v4149 = vld [vmem:[#allocation8 + $0x10] sm:$0xff]
        %v4150 = vld [vmem:[#allocation8 + $0x18] sm:$0xff]
        %v4151 = vld [vmem:[#allocation8 + $0x20] sm:$0xff]
        %v4152 = vld [vmem:[#allocation8 + $0x28] sm:$0xff]
        %v4153 = vld [vmem:[#allocation8 + $0x30] sm:$0xff]
        %v4154 = vld [vmem:[#allocation8 + $0x38] sm:$0xff]
        %v4155 = vld [vmem:[#allocation8 + $0x40] sm:$0xff]
        %v4156 = vld [vmem:[#allocation8 + $0x48] sm:$0xff]
        %v4157 = vld [vmem:[#allocation8 + $0x50] sm:$0xff]
        %v4158 = vld [vmem:[#allocation8 + $0x58] sm:$0xff]
        %v4159 = vld [vmem:[#allocation8 + $0x60] sm:$0xff]
        %v4160 = vld [vmem:[#allocation8 + $0x68] sm:$0xff]
        %v4161 = vld [vmem:[#allocation8 + $0x70] sm:$0xff]
        %v4162 = vld [vmem:[#allocation8 + $0x78] sm:$0xff]
        %v4163 = vld [vmem:[#allocation8 + $0x80] sm:$0xff]
        %v4164 = vld [vmem:[#allocation8 + $0x88] sm:$0xff]
        %v4165 = vld [vmem:[#allocation8 + $0x90] sm:$0xff]
        %v4166 = vld [vmem:[#allocation8 + $0x98] sm:$0xff]
        %v4167 = vld [vmem:[#allocation8 + $0xa0] sm:$0xff]
        %v4168 = vld [vmem:[#allocation8 + $0xa8] sm:$0xff]
        %v4169 = vld [vmem:[#allocation8 + $0xb0] sm:$0xff]
        %v4170 = vld [vmem:[#allocation8 + $0xb8] sm:$0xff]
        %v4171 = vld [vmem:[#allocation8 + $0xc0] sm:$0xff]
        %v4172 = vld [vmem:[#allocation8 + $0xc8] sm:$0xff]
        %v4173 = vld [vmem:[#allocation8 + $0xd0] sm:$0xff]
        %v4174 = vld [vmem:[#allocation8 + $0xd8] sm:$0xff]
        %v4175 = vld [vmem:[#allocation8 + $0xe0] sm:$0xff]
        %v4176 = vld [vmem:[#allocation8 + $0xe8] sm:$0xff]
        %v4177 = vld [vmem:[#allocation8 + $0xf0] sm:$0xff]
        %v4178 = vld [vmem:[#allocation8 + $0xf8] sm:$0xff]
        %v4179 = vld [vmem:[#allocation8 + $0x100] sm:$0xff]
        %v4180 = vld [vmem:[#allocation8 + $0x108] sm:$0xff]
        %v4181 = vld [vmem:[#allocation8 + $0x110] sm:$0xff]
        %v4182 = vld [vmem:[#allocation8 + $0x118] sm:$0xff]
        %v4183 = vld [vmem:[#allocation8 + $0x120] sm:$0xff]
        %v4184 = vld [vmem:[#allocation8 + $0x128] sm:$0xff]
        %v4185 = vld [vmem:[#allocation8 + $0x130] sm:$0xff]
        %v4186 = vld [vmem:[#allocation8 + $0x138] sm:$0xff]
        %v4187 = vld [vmem:[#allocation8 + $0x140] sm:$0xff]
        %v4188 = vld [vmem:[#allocation8 + $0x148] sm:$0xff]
        %v4189 = vld [vmem:[#allocation8 + $0x150] sm:$0xff]
        %v4190 = vld [vmem:[#allocation8 + $0x158] sm:$0xff]
        %v4191 = vld [vmem:[#allocation8 + $0x160] sm:$0xff]
        %v4192 = vld [vmem:[#allocation8 + $0x168] sm:$0xff]
        %v4193 = vld [vmem:[#allocation8 + $0x170] sm:$0xff]
        %v4194 = vld [vmem:[#allocation8 + $0x178] sm:$0xff]
        %v4195 = vld [vmem:[#allocation8 + $0x180] sm:$0xff]
        %v4196 = vld [vmem:[#allocation8 + $0x188] sm:$0xff]
        %v4197 = vld [vmem:[#allocation8 + $0x190] sm:$0xff]
        %v4198 = vld [vmem:[#allocation8 + $0x198] sm:$0xff]
        %v4199 = vld [vmem:[#allocation8 + $0x1a0] sm:$0xff]
        %v4200 = vld [vmem:[#allocation8 + $0x1a8] sm:$0xff]
        %v4201 = vld [vmem:[#allocation8 + $0x1b0] sm:$0xff]
        %v4202 = vld [vmem:[#allocation8 + $0x1b8] sm:$0xff]
        %v4203 = vld [vmem:[#allocation8 + $0x1c0] sm:$0xff]
        %v4204 = vld [vmem:[#allocation8 + $0x1c8] sm:$0xff]
        %v4205 = vld [vmem:[#allocation8 + $0x1d0] sm:$0xff]
        %v4206 = vld [vmem:[#allocation8 + $0x1d8] sm:$0xff]
        %v4207 = vld [vmem:[#allocation8 + $0x1e0] sm:$0xff]
        %v4208 = vld [vmem:[#allocation8 + $0x1e8] sm:$0xff]
        %v4209 = vld [vmem:[#allocation8 + $0x1f0] sm:$0xff]
        %v4210 = vld [vmem:[#allocation8 + $0x1f8] sm:$0xff]
        %v4211 = vld [vmem:[#allocation8 + $0x200] sm:$0xff]
        %v4212 = vld [vmem:[#allocation8 + $0x208] sm:$0xff]
        %v4213 = vld [vmem:[#allocation8 + $0x210] sm:$0xff]
        %v4214 = vld [vmem:[#allocation8 + $0x218] sm:$0xff]
        %v4215 = vld [vmem:[#allocation8 + $0x220] sm:$0xff]
        %v4216 = vld [vmem:[#allocation8 + $0x228] sm:$0xff]
        %v4217 = vld [vmem:[#allocation8 + $0x230] sm:$0xff]
        %v4218 = vld [vmem:[#allocation8 + $0x238] sm:$0xff]
        %v4219 = vld [vmem:[#allocation8 + $0x240] sm:$0xff]
        %v4220 = vld [vmem:[#allocation8 + $0x248] sm:$0xff]
        %v4221 = vld [vmem:[#allocation8 + $0x250] sm:$0xff]
        %v4222 = vld [vmem:[#allocation8 + $0x258] sm:$0xff]
        %v4223 = vld [vmem:[#allocation8 + $0x260] sm:$0xff]
        %v4224 = vld [vmem:[#allocation8 + $0x268] sm:$0xff]
        %v4225 = vld [vmem:[#allocation8 + $0x270] sm:$0xff]
        %v4226 = vld [vmem:[#allocation8 + $0x278] sm:$0xff]
        %v4227 = vld [vmem:[#allocation8 + $0x280] sm:$0xff]
        %v4228 = vld [vmem:[#allocation8 + $0x288] sm:$0xff]
        %v4229 = vld [vmem:[#allocation8 + $0x290] sm:$0xff]
        %v4230 = vld [vmem:[#allocation8 + $0x298] sm:$0xff]
        %v4231 = vld [vmem:[#allocation8 + $0x2a0] sm:$0xff]
        %v4232 = vld [vmem:[#allocation8 + $0x2a8] sm:$0xff]
        %v4233 = vld [vmem:[#allocation8 + $0x2b0] sm:$0xff]
        %v4234 = vld [vmem:[#allocation8 + $0x2b8] sm:$0xff]
        %v4235 = vld [vmem:[#allocation8 + $0x2c0] sm:$0xff]
        %v4236 = vld [vmem:[#allocation8 + $0x2c8] sm:$0xff]
        %v4237 = vld [vmem:[#allocation8 + $0x2d0] sm:$0xff]
        %v4238 = vld [vmem:[#allocation8 + $0x2d8] sm:$0xff]
        %v4239 = vld [vmem:[#allocation8 + $0x2e0] sm:$0xff]
        %v4240 = vld [vmem:[#allocation8 + $0x2e8] sm:$0xff]
        %v4241 = vld [vmem:[#allocation8 + $0x2f0] sm:$0xff]
        %v4242 = vld [vmem:[#allocation8 + $0x2f8] sm:$0xff]
        %v4243 = vld [vmem:[#allocation8 + $0x300] sm:$0xff]
        %v4244 = vld [vmem:[#allocation8 + $0x308] sm:$0xff]
        %v4245 = vld [vmem:[#allocation8 + $0x310] sm:$0xff]
        %v4246 = vld [vmem:[#allocation8 + $0x318] sm:$0xff]
        %v4247 = vld [vmem:[#allocation8 + $0x320] sm:$0xff]
        %v4248 = vld [vmem:[#allocation8 + $0x328] sm:$0xff]
        %v4249 = vld [vmem:[#allocation8 + $0x330] sm:$0xff]
        %v4250 = vld [vmem:[#allocation8 + $0x338] sm:$0xff]
        %v4251 = vld [vmem:[#allocation8 + $0x340] sm:$0xff]
        %v4252 = vld [vmem:[#allocation8 + $0x348] sm:$0xff]
        %v4253 = vld [vmem:[#allocation8 + $0x350] sm:$0xff]
        %v4254 = vld [vmem:[#allocation8 + $0x358] sm:$0xff]
        %v4255 = vld [vmem:[#allocation8 + $0x360] sm:$0xff]
        %v4256 = vld [vmem:[#allocation8 + $0x368] sm:$0xff]
        %v4257 = vld [vmem:[#allocation8 + $0x370] sm:$0xff]
        %v4258 = vld [vmem:[#allocation8 + $0x378] sm:$0xff]
        %v4259 = vld [vmem:[#allocation8 + $0x380] sm:$0xff]
        %v4260 = vld [vmem:[#allocation8 + $0x388] sm:$0xff]
        %v4261 = vld [vmem:[#allocation8 + $0x390] sm:$0xff]
        %v4262 = vld [vmem:[#allocation8 + $0x398] sm:$0xff]
        %v4263 = vld [vmem:[#allocation8 + $0x3a0] sm:$0xff]
        %v4264 = vld [vmem:[#allocation8 + $0x3a8] sm:$0xff]
        %v4265 = vld [vmem:[#allocation8 + $0x3b0] sm:$0xff]
        %v4266 = vld [vmem:[#allocation8 + $0x3b8] sm:$0xff]
        %v4267 = vld [vmem:[#allocation8 + $0x3c0] sm:$0xff]
        %v4268 = vld [vmem:[#allocation8 + $0x3c8] sm:$0xff]
        %v4269 = vld [vmem:[#allocation8 + $0x3d0] sm:$0xff]
        %v4270 = vld [vmem:[#allocation8 + $0x3d8] sm:$0xff]
        %v4271 = vld [vmem:[#allocation8 + $0x3e0] sm:$0xff]
        %v4272 = vld [vmem:[#allocation8 + $0x3e8] sm:$0xff]
        %v4273 = vld [vmem:[#allocation8 + $0x3f0] sm:$0xff]
        %v4274 = vld [vmem:[#allocation8 + $0x3f8] sm:$0xff]
        %v4275 = vld [vmem:[#allocation8 + $0x400] sm:$0xff]
        %v4276 = vld [vmem:[#allocation8 + $0x408] sm:$0xff]
        %v4277 = vld [vmem:[#allocation8 + $0x410] sm:$0xff]
        %v4278 = vld [vmem:[#allocation8 + $0x418] sm:$0xff]
        %v4279 = vld [vmem:[#allocation8 + $0x420] sm:$0xff]
        %v4280 = vld [vmem:[#allocation8 + $0x428] sm:$0xff]
        %v4281 = vld [vmem:[#allocation8 + $0x430] sm:$0xff]
        %v4282 = vld [vmem:[#allocation8 + $0x438] sm:$0xff]
        %v4283 = vld [vmem:[#allocation8 + $0x440] sm:$0xff]
        %v4284 = vld [vmem:[#allocation8 + $0x448] sm:$0xff]
        %v4285 = vld [vmem:[#allocation8 + $0x450] sm:$0xff]
        %v4286 = vld [vmem:[#allocation8 + $0x458] sm:$0xff]
        %v4287 = vld [vmem:[#allocation8 + $0x460] sm:$0xff]
        %v4288 = vld [vmem:[#allocation8 + $0x468] sm:$0xff]
        %v4289 = vld [vmem:[#allocation8 + $0x470] sm:$0xff]
        %v4290 = vld [vmem:[#allocation8 + $0x478] sm:$0xff]
        %v4291 = vld [vmem:[#allocation8 + $0x480] sm:$0xff]
        %v4292 = vld [vmem:[#allocation8 + $0x488] sm:$0xff]
        %v4293 = vld [vmem:[#allocation8 + $0x490] sm:$0xff]
        %v4294 = vld [vmem:[#allocation8 + $0x498] sm:$0xff]
        %v4295 = vld [vmem:[#allocation8 + $0x4a0] sm:$0xff]
        %v4296 = vld [vmem:[#allocation8 + $0x4a8] sm:$0xff]
        %v4297 = vld [vmem:[#allocation8 + $0x4b0] sm:$0xff]
        %v4298 = vld [vmem:[#allocation8 + $0x4b8] sm:$0xff]
        %v4299 = vld [vmem:[#allocation8 + $0x4c0] sm:$0xff]
        %v4300 = vld [vmem:[#allocation8 + $0x4c8] sm:$0xff]
        %v4301 = vld [vmem:[#allocation8 + $0x4d0] sm:$0xff]
        %v4302 = vld [vmem:[#allocation8 + $0x4d8] sm:$0xff]
        %v4303 = vld [vmem:[#allocation8 + $0x4e0] sm:$0xff]
        %v4304 = vld [vmem:[#allocation8 + $0x4e8] sm:$0xff]
        %v4305 = vld [vmem:[#allocation8 + $0x4f0] sm:$0xff]
        %v4306 = vld [vmem:[#allocation8 + $0x4f8] sm:$0xff]
        %v4307 = vld [vmem:[#allocation8 + $0x500] sm:$0xff]
        %v4308 = vld [vmem:[#allocation8 + $0x508] sm:$0xff]
        %v4309 = vld [vmem:[#allocation8 + $0x510] sm:$0xff]
        %v4310 = vld [vmem:[#allocation8 + $0x518] sm:$0xff]
        %v4311 = vld [vmem:[#allocation8 + $0x520] sm:$0xff]
        %v4312 = vld [vmem:[#allocation8 + $0x528] sm:$0xff]
        %v4313 = vld [vmem:[#allocation8 + $0x530] sm:$0xff]
        %v4314 = vld [vmem:[#allocation8 + $0x538] sm:$0xff]
        %v4315 = vld [vmem:[#allocation8 + $0x540] sm:$0xff]
        %v4316 = vld [vmem:[#allocation8 + $0x548] sm:$0xff]
        %v4317 = vld [vmem:[#allocation8 + $0x550] sm:$0xff]
        %v4318 = vld [vmem:[#allocation8 + $0x558] sm:$0xff]
        %v4319 = vld [vmem:[#allocation8 + $0x560] sm:$0xff]
        %v4320 = vld [vmem:[#allocation8 + $0x568] sm:$0xff]
        %v4321 = vld [vmem:[#allocation8 + $0x570] sm:$0xff]
        %v4322 = vld [vmem:[#allocation8 + $0x578] sm:$0xff]
        %v4323 = vld [vmem:[#allocation8 + $0x580] sm:$0xff]
        %v4324 = vld [vmem:[#allocation8 + $0x588] sm:$0xff]
        %v4325 = vld [vmem:[#allocation8 + $0x590] sm:$0xff]
        %v4326 = vld [vmem:[#allocation8 + $0x598] sm:$0xff]
        %v4327 = vld [vmem:[#allocation8 + $0x5a0] sm:$0xff]
        %v4328 = vld [vmem:[#allocation8 + $0x5a8] sm:$0xff]
        %v4329 = vld [vmem:[#allocation8 + $0x5b0] sm:$0xff]
        %v4330 = vld [vmem:[#allocation8 + $0x5b8] sm:$0xff]
        %v4331 = vld [vmem:[#allocation8 + $0x5c0] sm:$0xff]
        %v4332 = vld [vmem:[#allocation8 + $0x5c8] sm:$0xff]
        %v4333 = vld [vmem:[#allocation8 + $0x5d0] sm:$0xff]
        %v4334 = vld [vmem:[#allocation8 + $0x5d8] sm:$0xff]
        %v4335 = vld [vmem:[#allocation8 + $0x5e0] sm:$0xff]
        %v4336 = vld [vmem:[#allocation8 + $0x5e8] sm:$0xff]
        %v4337 = vld [vmem:[#allocation8 + $0x5f0] sm:$0xff]
        %v4338 = vld [vmem:[#allocation8 + $0x5f8] sm:$0xff]
        %v4339 = vld [vmem:[#allocation8 + $0x600] sm:$0xff]
        %v4340 = vld [vmem:[#allocation8 + $0x608] sm:$0xff]
        %v4341 = vld [vmem:[#allocation8 + $0x610] sm:$0xff]
        %v4342 = vld [vmem:[#allocation8 + $0x618] sm:$0xff]
        %v4343 = vld [vmem:[#allocation8 + $0x620] sm:$0xff]
        %v4344 = vld [vmem:[#allocation8 + $0x628] sm:$0xff]
        %v4345 = vld [vmem:[#allocation8 + $0x630] sm:$0xff]
        %v4346 = vld [vmem:[#allocation8 + $0x638] sm:$0xff]
        %v4347 = vld [vmem:[#allocation8 + $0x640] sm:$0xff]
        %v4348 = vld [vmem:[#allocation8 + $0x648] sm:$0xff]
        %v4349 = vld [vmem:[#allocation8 + $0x650] sm:$0xff]
        %v4350 = vld [vmem:[#allocation8 + $0x658] sm:$0xff]
        %v4351 = vld [vmem:[#allocation8 + $0x660] sm:$0xff]
        %v4352 = vld [vmem:[#allocation8 + $0x668] sm:$0xff]
        %v4353 = vld [vmem:[#allocation8 + $0x670] sm:$0xff]
        %v4354 = vld [vmem:[#allocation8 + $0x678] sm:$0xff]
        %v4355 = vld [vmem:[#allocation8 + $0x680] sm:$0xff]
        %v4356 = vld [vmem:[#allocation8 + $0x688] sm:$0xff]
        %v4357 = vld [vmem:[#allocation8 + $0x690] sm:$0xff]
        %v4358 = vld [vmem:[#allocation8 + $0x698] sm:$0xff]
        %v4359 = vld [vmem:[#allocation8 + $0x6a0] sm:$0xff]
        %v4360 = vld [vmem:[#allocation8 + $0x6a8] sm:$0xff]
        %v4361 = vld [vmem:[#allocation8 + $0x6b0] sm:$0xff]
        %v4362 = vld [vmem:[#allocation8 + $0x6b8] sm:$0xff]
        %v4363 = vld [vmem:[#allocation8 + $0x6c0] sm:$0xff]
        %v4364 = vld [vmem:[#allocation8 + $0x6c8] sm:$0xff]
        %v4365 = vld [vmem:[#allocation8 + $0x6d0] sm:$0xff]
        %v4366 = vld [vmem:[#allocation8 + $0x6d8] sm:$0xff]
        %v4367 = vld [vmem:[#allocation8 + $0x6e0] sm:$0xff]
        %v4368 = vld [vmem:[#allocation8 + $0x6e8] sm:$0xff]
        %v4369 = vld [vmem:[#allocation8 + $0x6f0] sm:$0xff]
        %v4370 = vld [vmem:[#allocation8 + $0x6f8] sm:$0xff]
        %v4371 = vld [vmem:[#allocation8 + $0x700] sm:$0xff]
        %v4372 = vld [vmem:[#allocation8 + $0x708] sm:$0xff]
        %v4373 = vld [vmem:[#allocation8 + $0x710] sm:$0xff]
        %v4374 = vld [vmem:[#allocation8 + $0x718] sm:$0xff]
        %v4375 = vld [vmem:[#allocation8 + $0x720] sm:$0xff]
        %v4376 = vld [vmem:[#allocation8 + $0x728] sm:$0xff]
        %v4377 = vld [vmem:[#allocation8 + $0x730] sm:$0xff]
        %v4378 = vld [vmem:[#allocation8 + $0x738] sm:$0xff]
        %v4379 = vld [vmem:[#allocation8 + $0x740] sm:$0xff]
        %v4380 = vld [vmem:[#allocation8 + $0x748] sm:$0xff]
        %v4381 = vld [vmem:[#allocation8 + $0x750] sm:$0xff]
        %v4382 = vld [vmem:[#allocation8 + $0x758] sm:$0xff]
        %v4383 = vld [vmem:[#allocation8 + $0x760] sm:$0xff]
        %v4384 = vld [vmem:[#allocation8 + $0x768] sm:$0xff]
        %v4385 = vld [vmem:[#allocation8 + $0x770] sm:$0xff]
        %v4386 = vld [vmem:[#allocation8 + $0x778] sm:$0xff]
        %v4387 = vld [vmem:[#allocation8 + $0x780] sm:$0xff]
        %v4388 = vld [vmem:[#allocation8 + $0x788] sm:$0xff]
        %v4389 = vld [vmem:[#allocation8 + $0x790] sm:$0xff]
        %v4390 = vld [vmem:[#allocation8 + $0x798] sm:$0xff]
        %v4391 = vld [vmem:[#allocation8 + $0x7a0] sm:$0xff]
        %v4392 = vld [vmem:[#allocation8 + $0x7a8] sm:$0xff]
        %v4393 = vld [vmem:[#allocation8 + $0x7b0] sm:$0xff]
        %v4394 = vld [vmem:[#allocation8 + $0x7b8] sm:$0xff]
        %v4395 = vld [vmem:[#allocation8 + $0x7c0] sm:$0xff]
        %v4396 = vld [vmem:[#allocation8 + $0x7c8] sm:$0xff]
        %v4397 = vld [vmem:[#allocation8 + $0x7d0] sm:$0xff]
        %v4398 = vld [vmem:[#allocation8 + $0x7d8] sm:$0xff]
        %v4399 = vld [vmem:[#allocation8 + $0x7e0] sm:$0xff]
        %v4400 = vld [vmem:[#allocation8 + $0x7e8] sm:$0xff]
        %v4401 = vld [vmem:[#allocation8 + $0x7f0] sm:$0xff]
        %v4402 = vld [vmem:[#allocation8 + $0x7f8] sm:$0xff]
        %v4403 = vld [vmem:[#allocation8 + $0x800] sm:$0xff]
        %v4404 = vld [vmem:[#allocation8 + $0x808] sm:$0xff]
        %v4405 = vld [vmem:[#allocation8 + $0x810] sm:$0xff]
        %v4406 = vld [vmem:[#allocation8 + $0x818] sm:$0xff]
        %v4407 = vld [vmem:[#allocation8 + $0x820] sm:$0xff]
        %v4408 = vld [vmem:[#allocation8 + $0x828] sm:$0xff]
        %v4409 = vld [vmem:[#allocation8 + $0x830] sm:$0xff]
        %v4410 = vld [vmem:[#allocation8 + $0x838] sm:$0xff]
        %v4411 = vld [vmem:[#allocation8 + $0x840] sm:$0xff]
        %v4412 = vld [vmem:[#allocation8 + $0x848] sm:$0xff]
        %v4413 = vld [vmem:[#allocation8 + $0x850] sm:$0xff]
        %v4414 = vld [vmem:[#allocation8 + $0x858] sm:$0xff]
        %v4415 = vld [vmem:[#allocation8 + $0x860] sm:$0xff]
        %v4416 = vld [vmem:[#allocation8 + $0x868] sm:$0xff]
        %v4417 = vld [vmem:[#allocation8 + $0x870] sm:$0xff]
        %v4418 = vld [vmem:[#allocation8 + $0x878] sm:$0xff]
        %v4419 = vld [vmem:[#allocation8 + $0x880] sm:$0xff]
        %v4420 = vld [vmem:[#allocation8 + $0x888] sm:$0xff]
        %v4421 = vld [vmem:[#allocation8 + $0x890] sm:$0xff]
        %v4422 = vld [vmem:[#allocation8 + $0x898] sm:$0xff]
        %v4423 = vld [vmem:[#allocation8 + $0x8a0] sm:$0xff]
        %v4424 = vld [vmem:[#allocation8 + $0x8a8] sm:$0xff]
        %v4425 = vld [vmem:[#allocation8 + $0x8b0] sm:$0xff]
        %v4426 = vld [vmem:[#allocation8 + $0x8b8] sm:$0xff]
        %v4427 = vld [vmem:[#allocation8 + $0x8c0] sm:$0xff]
        %v4428 = vld [vmem:[#allocation8 + $0x8c8] sm:$0xff]
        %v4429 = vld [vmem:[#allocation8 + $0x8d0] sm:$0xff]
        %v4430 = vld [vmem:[#allocation8 + $0x8d8] sm:$0xff]
        %v4431 = vld [vmem:[#allocation8 + $0x8e0] sm:$0xff]
        %v4432 = vld [vmem:[#allocation8 + $0x8e8] sm:$0xff]
        %v4433 = vld [vmem:[#allocation8 + $0x8f0] sm:$0xff]
        %v4434 = vld [vmem:[#allocation8 + $0x8f8] sm:$0xff]
        %v4435 = vld [vmem:[#allocation8 + $0x900] sm:$0xff]
        %v4436 = vld [vmem:[#allocation8 + $0x908] sm:$0xff]
        %v4437 = vld [vmem:[#allocation8 + $0x910] sm:$0xff]
        %v4438 = vld [vmem:[#allocation8 + $0x918] sm:$0xff]
        %v4439 = vld [vmem:[#allocation8 + $0x920] sm:$0xff]
        %v4440 = vld [vmem:[#allocation8 + $0x928] sm:$0xff]
        %v4441 = vld [vmem:[#allocation8 + $0x930] sm:$0xff]
        %v4442 = vld [vmem:[#allocation8 + $0x938] sm:$0xff]
        %v4443 = vld [vmem:[#allocation8 + $0x940] sm:$0xff]
        %v4444 = vld [vmem:[#allocation8 + $0x948] sm:$0xff]
        %v4445 = vld [vmem:[#allocation8 + $0x950] sm:$0xff]
        %v4446 = vld [vmem:[#allocation8 + $0x958] sm:$0xff]
        %v4447 = vld [vmem:[#allocation8 + $0x960] sm:$0xff]
        %v4448 = vld [vmem:[#allocation8 + $0x968] sm:$0xff]
        %v4449 = vld [vmem:[#allocation8 + $0x970] sm:$0xff]
        %v4450 = vld [vmem:[#allocation8 + $0x978] sm:$0xff]
        %v4451 = vld [vmem:[#allocation8 + $0x980] sm:$0xff]
        %v4452 = vld [vmem:[#allocation8 + $0x988] sm:$0xff]
        %v4453 = vld [vmem:[#allocation8 + $0x990] sm:$0xff]
        %v4454 = vld [vmem:[#allocation8 + $0x998] sm:$0xff]
        %v4455 = vld [vmem:[#allocation8 + $0x9a0] sm:$0xff]
        %v4456 = vld [vmem:[#allocation8 + $0x9a8] sm:$0xff]
        %v4457 = vld [vmem:[#allocation8 + $0x9b0] sm:$0xff]
        %v4458 = vld [vmem:[#allocation8 + $0x9b8] sm:$0xff]
        %v4459 = vld [vmem:[#allocation8 + $0x9c0] sm:$0xff]
        %v4460 = vld [vmem:[#allocation8 + $0x9c8] sm:$0xff]
        %v4461 = vld [vmem:[#allocation8 + $0x9d0] sm:$0xff]
        %v4462 = vld [vmem:[#allocation8 + $0x9d8] sm:$0xff]
        %v4463 = vld [vmem:[#allocation8 + $0x9e0] sm:$0xff]
        %v4464 = vld [vmem:[#allocation8 + $0x9e8] sm:$0xff]
        %v4465 = vld [vmem:[#allocation8 + $0x9f0] sm:$0xff]
        %v4466 = vld [vmem:[#allocation8 + $0x9f8] sm:$0xff]
        %v4467 = vld [vmem:[#allocation8 + $0xa00] sm:$0xff]
        %v4468 = vld [vmem:[#allocation8 + $0xa08] sm:$0xff]
        %v4469 = vld [vmem:[#allocation8 + $0xa10] sm:$0xff]
        %v4470 = vld [vmem:[#allocation8 + $0xa18] sm:$0xff]
        %v4471 = vld [vmem:[#allocation8 + $0xa20] sm:$0xff]
        %v4472 = vld [vmem:[#allocation8 + $0xa28] sm:$0xff]
        %v4473 = vld [vmem:[#allocation8 + $0xa30] sm:$0xff]
        %v4474 = vld [vmem:[#allocation8 + $0xa38] sm:$0xff]
        %v4475 = vld [vmem:[#allocation8 + $0xa40] sm:$0xff]
        %v4476 = vld [vmem:[#allocation8 + $0xa48] sm:$0xff]
        %v4477 = vld [vmem:[#allocation8 + $0xa50] sm:$0xff]
        %v4478 = vld [vmem:[#allocation8 + $0xa58] sm:$0xff]
        %v4479 = vld [vmem:[#allocation8 + $0xa60] sm:$0xff]
        %v4480 = vld [vmem:[#allocation8 + $0xa68] sm:$0xff]
        %v4481 = vld [vmem:[#allocation8 + $0xa70] sm:$0xff]
        %v4482 = vld [vmem:[#allocation8 + $0xa78] sm:$0xff]
        %v4483 = vld [vmem:[#allocation8 + $0xa80] sm:$0xff]
        %v4484 = vld [vmem:[#allocation8 + $0xa88] sm:$0xff]
        %v4485 = vld [vmem:[#allocation8 + $0xa90] sm:$0xff]
        %v4486 = vld [vmem:[#allocation8 + $0xa98] sm:$0xff]
        %v4487 = vld [vmem:[#allocation8 + $0xaa0] sm:$0xff]
        %v4488 = vld [vmem:[#allocation8 + $0xaa8] sm:$0xff]
        %v4489 = vld [vmem:[#allocation8 + $0xab0] sm:$0xff]
        %v4490 = vld [vmem:[#allocation8 + $0xab8] sm:$0xff]
        %v4491 = vld [vmem:[#allocation8 + $0xac0] sm:$0xff]
        %v4492 = vld [vmem:[#allocation8 + $0xac8] sm:$0xff]
        %v4493 = vld [vmem:[#allocation8 + $0xad0] sm:$0xff]
        %v4494 = vld [vmem:[#allocation8 + $0xad8] sm:$0xff]
        %v4495 = vld [vmem:[#allocation8 + $0xae0] sm:$0xff]
        %v4496 = vld [vmem:[#allocation8 + $0xae8] sm:$0xff]
        %v4497 = vld [vmem:[#allocation8 + $0xaf0] sm:$0xff]
        %v4498 = vld [vmem:[#allocation8 + $0xaf8] sm:$0xff]
        %v4499 = vld [vmem:[#allocation8 + $0xb00] sm:$0xff]
        %v4500 = vld [vmem:[#allocation8 + $0xb08] sm:$0xff]
        %v4501 = vld [vmem:[#allocation8 + $0xb10] sm:$0xff]
        %v4502 = vld [vmem:[#allocation8 + $0xb18] sm:$0xff]
        %v4503 = vld [vmem:[#allocation8 + $0xb20] sm:$0xff]
        %v4504 = vld [vmem:[#allocation8 + $0xb28] sm:$0xff]
        %v4505 = vld [vmem:[#allocation8 + $0xb30] sm:$0xff]
        %v4506 = vld [vmem:[#allocation8 + $0xb38] sm:$0xff]
        %v4507 = vld [vmem:[#allocation8 + $0xb40] sm:$0xff]
        %v4508 = vld [vmem:[#allocation8 + $0xb48] sm:$0xff]
        %v4509 = vld [vmem:[#allocation8 + $0xb50] sm:$0xff]
        %v4510 = vld [vmem:[#allocation8 + $0xb58] sm:$0xff]
        %v4511 = vld [vmem:[#allocation8 + $0xb60] sm:$0xff]
        %v4512 = vld [vmem:[#allocation8 + $0xb68] sm:$0xff]
        %v4513 = vld [vmem:[#allocation8 + $0xb70] sm:$0xff]
        %v4514 = vld [vmem:[#allocation8 + $0xb78] sm:$0xff]
        %v4515 = vld [vmem:[#allocation8 + $0xb80] sm:$0xff]
        %v4516 = vld [vmem:[#allocation8 + $0xb88] sm:$0xff]
        %v4517 = vld [vmem:[#allocation8 + $0xb90] sm:$0xff]
        %v4518 = vld [vmem:[#allocation8 + $0xb98] sm:$0xff]
        %v4519 = vld [vmem:[#allocation8 + $0xba0] sm:$0xff]
        %v4520 = vld [vmem:[#allocation8 + $0xba8] sm:$0xff]
        %v4521 = vld [vmem:[#allocation8 + $0xbb0] sm:$0xff]
        %v4522 = vld [vmem:[#allocation8 + $0xbb8] sm:$0xff]
        %v4523 = vld [vmem:[#allocation8 + $0xbc0] sm:$0xff]
        %v4524 = vld [vmem:[#allocation8 + $0xbc8] sm:$0xff]
        %v4525 = vld [vmem:[#allocation8 + $0xbd0] sm:$0xff]
        %v4526 = vld [vmem:[#allocation8 + $0xbd8] sm:$0xff]
        %v4527 = vld [vmem:[#allocation8 + $0xbe0] sm:$0xff]
        %v4528 = vld [vmem:[#allocation8 + $0xbe8] sm:$0xff]
        %v4529 = vld [vmem:[#allocation8 + $0xbf0] sm:$0xff]
        %v4530 = vld [vmem:[#allocation8 + $0xbf8] sm:$0xff]
        %v4531 = vld [vmem:[#allocation8 + $0xc00] sm:$0xff]
        %v4532 = vld [vmem:[#allocation8 + $0xc08] sm:$0xff]
        %v4533 = vld [vmem:[#allocation8 + $0xc10] sm:$0xff]
        %v4534 = vld [vmem:[#allocation8 + $0xc18] sm:$0xff]
        %v4535 = vld [vmem:[#allocation8 + $0xc20] sm:$0xff]
        %v4536 = vld [vmem:[#allocation8 + $0xc28] sm:$0xff]
        %v4537 = vld [vmem:[#allocation8 + $0xc30] sm:$0xff]
        %v4538 = vld [vmem:[#allocation8 + $0xc38] sm:$0xff]
        %v4539 = vld [vmem:[#allocation8 + $0xc40] sm:$0xff]
        %v4540 = vld [vmem:[#allocation8 + $0xc48] sm:$0xff]
        %v4541 = vld [vmem:[#allocation8 + $0xc50] sm:$0xff]
        %v4542 = vld [vmem:[#allocation8 + $0xc58] sm:$0xff]
        %v4543 = vld [vmem:[#allocation8 + $0xc60] sm:$0xff]
        %v4544 = vld [vmem:[#allocation8 + $0xc68] sm:$0xff]
        %v4545 = vld [vmem:[#allocation8 + $0xc70] sm:$0xff]
        %v4546 = vld [vmem:[#allocation8 + $0xc78] sm:$0xff]
        %v4547 = vld [vmem:[#allocation8 + $0xc80] sm:$0xff]
        %v4548 = vld [vmem:[#allocation8 + $0xc88] sm:$0xff]
        %v4549 = vld [vmem:[#allocation8 + $0xc90] sm:$0xff]
        %v4550 = vld [vmem:[#allocation8 + $0xc98] sm:$0xff]
        %v4551 = vld [vmem:[#allocation8 + $0xca0] sm:$0xff]
        %v4552 = vld [vmem:[#allocation8 + $0xca8] sm:$0xff]
        %v4553 = vld [vmem:[#allocation8 + $0xcb0] sm:$0xff]
        %v4554 = vld [vmem:[#allocation8 + $0xcb8] sm:$0xff]
        %v4555 = vld [vmem:[#allocation8 + $0xcc0] sm:$0xff]
        %v4556 = vld [vmem:[#allocation8 + $0xcc8] sm:$0xff]
        %v4557 = vld [vmem:[#allocation8 + $0xcd0] sm:$0xff]
        %v4558 = vld [vmem:[#allocation8 + $0xcd8] sm:$0xff]
        %v4559 = vld [vmem:[#allocation8 + $0xce0] sm:$0xff]
        %v4560 = vld [vmem:[#allocation8 + $0xce8] sm:$0xff]
        %v4561 = vld [vmem:[#allocation8 + $0xcf0] sm:$0xff]
        %v4562 = vld [vmem:[#allocation8 + $0xcf8] sm:$0xff]
        %v4563 = vld [vmem:[#allocation8 + $0xd00] sm:$0xff]
        %v4564 = vld [vmem:[#allocation8 + $0xd08] sm:$0xff]
        %v4565 = vld [vmem:[#allocation8 + $0xd10] sm:$0xff]
        %v4566 = vld [vmem:[#allocation8 + $0xd18] sm:$0xff]
        %v4567 = vld [vmem:[#allocation8 + $0xd20] sm:$0xff]
        %v4568 = vld [vmem:[#allocation8 + $0xd28] sm:$0xff]
        %v4569 = vld [vmem:[#allocation8 + $0xd30] sm:$0xff]
        %v4570 = vld [vmem:[#allocation8 + $0xd38] sm:$0xff]
        %v4571 = vld [vmem:[#allocation8 + $0xd40] sm:$0xff]
        %v4572 = vld [vmem:[#allocation8 + $0xd48] sm:$0xff]
        %v4573 = vld [vmem:[#allocation8 + $0xd50] sm:$0xff]
        %v4574 = vld [vmem:[#allocation8 + $0xd58] sm:$0xff]
        %v4575 = vld [vmem:[#allocation8 + $0xd60] sm:$0xff]
        %v4576 = vld [vmem:[#allocation8 + $0xd68] sm:$0xff]
        %v4577 = vld [vmem:[#allocation8 + $0xd70] sm:$0xff]
        %v4578 = vld [vmem:[#allocation8 + $0xd78] sm:$0xff]
        %v4579 = vld [vmem:[#allocation8 + $0xd80] sm:$0xff]
        %v4580 = vld [vmem:[#allocation8 + $0xd88] sm:$0xff]
        %v4581 = vld [vmem:[#allocation8 + $0xd90] sm:$0xff]
        %v4582 = vld [vmem:[#allocation8 + $0xd98] sm:$0xff]
        %v4583 = vld [vmem:[#allocation8 + $0xda0] sm:$0xff]
        %v4584 = vld [vmem:[#allocation8 + $0xda8] sm:$0xff]
        %v4585 = vld [vmem:[#allocation8 + $0xdb0] sm:$0xff]
        %v4586 = vld [vmem:[#allocation8 + $0xdb8] sm:$0xff]
        %v4587 = vld [vmem:[#allocation8 + $0xdc0] sm:$0xff]
        %v4588 = vld [vmem:[#allocation8 + $0xdc8] sm:$0xff]
        %v4589 = vld [vmem:[#allocation8 + $0xdd0] sm:$0xff]
        %v4590 = vld [vmem:[#allocation8 + $0xdd8] sm:$0xff]
        %v4591 = vld [vmem:[#allocation8 + $0xde0] sm:$0xff]
        %v4592 = vld [vmem:[#allocation8 + $0xde8] sm:$0xff]
        %v4593 = vld [vmem:[#allocation8 + $0xdf0] sm:$0xff]
        %v4594 = vld [vmem:[#allocation8 + $0xdf8] sm:$0xff]
        %v4595 = vld [vmem:[#allocation8 + $0xe00] sm:$0xff]
        %v4596 = vld [vmem:[#allocation8 + $0xe08] sm:$0xff]
        %v4597 = vld [vmem:[#allocation8 + $0xe10] sm:$0xff]
        %v4598 = vld [vmem:[#allocation8 + $0xe18] sm:$0xff]
        %v4599 = vld [vmem:[#allocation8 + $0xe20] sm:$0xff]
        %v4600 = vld [vmem:[#allocation8 + $0xe28] sm:$0xff]
        %v4601 = vld [vmem:[#allocation8 + $0xe30] sm:$0xff]
        %v4602 = vld [vmem:[#allocation8 + $0xe38] sm:$0xff]
        %v4603 = vld [vmem:[#allocation8 + $0xe40] sm:$0xff]
        %v4604 = vld [vmem:[#allocation8 + $0xe48] sm:$0xff]
        %v4605 = vld [vmem:[#allocation8 + $0xe50] sm:$0xff]
        %v4606 = vld [vmem:[#allocation8 + $0xe58] sm:$0xff]
        %v4607 = vld [vmem:[#allocation8 + $0xe60] sm:$0xff]
        %v4608 = vld [vmem:[#allocation8 + $0xe68] sm:$0xff]
        %v4609 = vld [vmem:[#allocation8 + $0xe70] sm:$0xff]
        %v4610 = vld [vmem:[#allocation8 + $0xe78] sm:$0xff]
        %v4611 = vld [vmem:[#allocation8 + $0xe80] sm:$0xff]
        %v4612 = vld [vmem:[#allocation8 + $0xe88] sm:$0xff]
        %v4613 = vld [vmem:[#allocation8 + $0xe90] sm:$0xff]
        %v4614 = vld [vmem:[#allocation8 + $0xe98] sm:$0xff]
        %v4615 = vld [vmem:[#allocation8 + $0xea0] sm:$0xff]
        %v4616 = vld [vmem:[#allocation8 + $0xea8] sm:$0xff]
        %v4617 = vld [vmem:[#allocation8 + $0xeb0] sm:$0xff]
        %v4618 = vld [vmem:[#allocation8 + $0xeb8] sm:$0xff]
        %v4619 = vld [vmem:[#allocation8 + $0xec0] sm:$0xff]
        %v4620 = vld [vmem:[#allocation8 + $0xec8] sm:$0xff]
        %v4621 = vld [vmem:[#allocation8 + $0xed0] sm:$0xff]
        %v4622 = vld [vmem:[#allocation8 + $0xed8] sm:$0xff]
        %v4623 = vld [vmem:[#allocation8 + $0xee0] sm:$0xff]
        %v4624 = vld [vmem:[#allocation8 + $0xee8] sm:$0xff]
        %v4625 = vld [vmem:[#allocation8 + $0xef0] sm:$0xff]
        %v4626 = vld [vmem:[#allocation8 + $0xef8] sm:$0xff]
        %v4627 = vld [vmem:[#allocation8 + $0xf00] sm:$0xff]
        %v4628 = vld [vmem:[#allocation8 + $0xf08] sm:$0xff]
        %v4629 = vld [vmem:[#allocation8 + $0xf10] sm:$0xff]
        %v4630 = vld [vmem:[#allocation8 + $0xf18] sm:$0xff]
        %v4631 = vld [vmem:[#allocation8 + $0xf20] sm:$0xff]
        %v4632 = vld [vmem:[#allocation8 + $0xf28] sm:$0xff]
        %v4633 = vld [vmem:[#allocation8 + $0xf30] sm:$0xff]
        %v4634 = vld [vmem:[#allocation8 + $0xf38] sm:$0xff]
        %v4635 = vld [vmem:[#allocation8 + $0xf40] sm:$0xff]
        %v4636 = vld [vmem:[#allocation8 + $0xf48] sm:$0xff]
        %v4637 = vld [vmem:[#allocation8 + $0xf50] sm:$0xff]
        %v4638 = vld [vmem:[#allocation8 + $0xf58] sm:$0xff]
        %v4639 = vld [vmem:[#allocation8 + $0xf60] sm:$0xff]
        %v4640 = vld [vmem:[#allocation8 + $0xf68] sm:$0xff]
        %v4641 = vld [vmem:[#allocation8 + $0xf70] sm:$0xff]
        %v4642 = vld [vmem:[#allocation8 + $0xf78] sm:$0xff]
        %v4643 = vld [vmem:[#allocation8 + $0xf80] sm:$0xff]
        %v4644 = vld [vmem:[#allocation8 + $0xf88] sm:$0xff]
        %v4645 = vld [vmem:[#allocation8 + $0xf90] sm:$0xff]
        %v4646 = vld [vmem:[#allocation8 + $0xf98] sm:$0xff]
        %v4647 = vld [vmem:[#allocation8 + $0xfa0] sm:$0xff]
        %v4648 = vld [vmem:[#allocation8 + $0xfa8] sm:$0xff]
        %v4649 = vld [vmem:[#allocation8 + $0xfb0] sm:$0xff]
        %v4650 = vld [vmem:[#allocation8 + $0xfb8] sm:$0xff]
        %v4651 = vld [vmem:[#allocation8 + $0xfc0] sm:$0xff]
        %v4652 = vld [vmem:[#allocation8 + $0xfc8] sm:$0xff]
        %v4653 = vld [vmem:[#allocation8 + $0xfd0] sm:$0xff]
        %v4654 = vld [vmem:[#allocation8 + $0xfd8] sm:$0xff]
        %v4655 = vld [vmem:[#allocation8 + $0xfe0] sm:$0xff]
        %v4656 = vld [vmem:[#allocation8 + $0xfe8] sm:$0xff]
        %v4657 = vld [vmem:[#allocation8 + $0xff0] sm:$0xff]
        %v4658 = vld [vmem:[#allocation8 + $0xff8] sm:$0xff]
        %v4659 = vld [vmem:[#allocation10] sm:$0xf]
        %v4661 = vlaneseq
        %v4662 = vshrl.u32 %v4661, 7
        %v4663 = vsub.s32 0, %v4662
        %v4664 = vrot.slane %v4659, %v4663
        %v4665 = vlaneseq
        %v4666 = vshrl.u32 %v4665, 7
        %v4667 = vsub.s32 1, %v4666
        %v4668 = vrot.slane %v4659, %v4667
        %v4669 = vlaneseq
        %v4670 = vshrl.u32 %v4669, 7
        %v4671 = vsub.s32 2, %v4670
        %v4672 = vrot.slane %v4659, %v4671
        %v4673 = vlaneseq
        %v4674 = vshrl.u32 %v4673, 7
        %v4675 = vsub.s32 3, %v4674
        %v4676 = vrot.slane %v4659, %v4675
        %v5193 = vunpack.c.l.b16 %v4147
        %v5194 = vunpack.c.h.b16 %v4147
        %v5195 = vunpack.c.l.b16 %v4148
        %v5196 = vunpack.c.h.b16 %v4148
        %v5197 = vunpack.c.l.b16 %v4149
        %v5198 = vunpack.c.h.b16 %v4149
        %v5199 = vunpack.c.l.b16 %v4150
        %v5200 = vunpack.c.h.b16 %v4150
        %v5201 = vunpack.c.l.b16 %v4151
        %v5202 = vunpack.c.h.b16 %v4151
        %v5203 = vunpack.c.l.b16 %v4152
        %v5204 = vunpack.c.h.b16 %v4152
        %v5205 = vunpack.c.l.b16 %v4153
        %v5206 = vunpack.c.h.b16 %v4153
        %v5207 = vunpack.c.l.b16 %v4154
        %v5208 = vunpack.c.h.b16 %v4154
        %v5209 = vunpack.c.l.b16 %v4155
        %v5210 = vunpack.c.h.b16 %v4155
        %v5211 = vunpack.c.l.b16 %v4156
        %v5212 = vunpack.c.h.b16 %v4156
        %v5213 = vunpack.c.l.b16 %v4157
        %v5214 = vunpack.c.h.b16 %v4157
        %v5215 = vunpack.c.l.b16 %v4158
        %v5216 = vunpack.c.h.b16 %v4158
        %v5217 = vunpack.c.l.b16 %v4159
        %v5218 = vunpack.c.h.b16 %v4159
        %v5219 = vunpack.c.l.b16 %v4160
        %v5220 = vunpack.c.h.b16 %v4160
        %v5221 = vunpack.c.l.b16 %v4161
        %v5222 = vunpack.c.h.b16 %v4161
        %v5223 = vunpack.c.l.b16 %v4162
        %v5224 = vunpack.c.h.b16 %v4162
        %v5225 = vunpack.c.l.b16 %v4163
        %v5226 = vunpack.c.h.b16 %v4163
        %v5227 = vunpack.c.l.b16 %v4164
        %v5228 = vunpack.c.h.b16 %v4164
        %v5229 = vunpack.c.l.b16 %v4165
        %v5230 = vunpack.c.h.b16 %v4165
        %v5231 = vunpack.c.l.b16 %v4166
        %v5232 = vunpack.c.h.b16 %v4166
        %v5233 = vunpack.c.l.b16 %v4167
        %v5234 = vunpack.c.h.b16 %v4167
        %v5235 = vunpack.c.l.b16 %v4168
        %v5236 = vunpack.c.h.b16 %v4168
        %v5237 = vunpack.c.l.b16 %v4169
        %v5238 = vunpack.c.h.b16 %v4169
        %v5239 = vunpack.c.l.b16 %v4170
        %v5240 = vunpack.c.h.b16 %v4170
        %v5241 = vunpack.c.l.b16 %v4171
        %v5242 = vunpack.c.h.b16 %v4171
        %v5243 = vunpack.c.l.b16 %v4172
        %v5244 = vunpack.c.h.b16 %v4172
        %v5245 = vunpack.c.l.b16 %v4173
        %v5246 = vunpack.c.h.b16 %v4173
        %v5247 = vunpack.c.l.b16 %v4174
        %v5248 = vunpack.c.h.b16 %v4174
        %v5249 = vunpack.c.l.b16 %v4175
        %v5250 = vunpack.c.h.b16 %v4175
        %v5251 = vunpack.c.l.b16 %v4176
        %v5252 = vunpack.c.h.b16 %v4176
        %v5253 = vunpack.c.l.b16 %v4177
        %v5254 = vunpack.c.h.b16 %v4177
        %v5255 = vunpack.c.l.b16 %v4178
        %v5256 = vunpack.c.h.b16 %v4178
        %v5257 = vunpack.c.l.b16 %v4179
        %v5258 = vunpack.c.h.b16 %v4179
        %v5259 = vunpack.c.l.b16 %v4180
        %v5260 = vunpack.c.h.b16 %v4180
        %v5261 = vunpack.c.l.b16 %v4181
        %v5262 = vunpack.c.h.b16 %v4181
        %v5263 = vunpack.c.l.b16 %v4182
        %v5264 = vunpack.c.h.b16 %v4182
        %v5265 = vunpack.c.l.b16 %v4183
        %v5266 = vunpack.c.h.b16 %v4183
        %v5267 = vunpack.c.l.b16 %v4184
        %v5268 = vunpack.c.h.b16 %v4184
        %v5269 = vunpack.c.l.b16 %v4185
        %v5270 = vunpack.c.h.b16 %v4185
        %v5271 = vunpack.c.l.b16 %v4186
        %v5272 = vunpack.c.h.b16 %v4186
        %v5273 = vunpack.c.l.b16 %v4187
        %v5274 = vunpack.c.h.b16 %v4187
        %v5275 = vunpack.c.l.b16 %v4188
        %v5276 = vunpack.c.h.b16 %v4188
        %v5277 = vunpack.c.l.b16 %v4189
        %v5278 = vunpack.c.h.b16 %v4189
        %v5279 = vunpack.c.l.b16 %v4190
        %v5280 = vunpack.c.h.b16 %v4190
        %v5281 = vunpack.c.l.b16 %v4191
        %v5282 = vunpack.c.h.b16 %v4191
        %v5283 = vunpack.c.l.b16 %v4192
        %v5284 = vunpack.c.h.b16 %v4192
        %v5285 = vunpack.c.l.b16 %v4193
        %v5286 = vunpack.c.h.b16 %v4193
        %v5287 = vunpack.c.l.b16 %v4194
        %v5288 = vunpack.c.h.b16 %v4194
        %v5289 = vunpack.c.l.b16 %v4195
        %v5290 = vunpack.c.h.b16 %v4195
        %v5291 = vunpack.c.l.b16 %v4196
        %v5292 = vunpack.c.h.b16 %v4196
        %v5293 = vunpack.c.l.b16 %v4197
        %v5294 = vunpack.c.h.b16 %v4197
        %v5295 = vunpack.c.l.b16 %v4198
        %v5296 = vunpack.c.h.b16 %v4198
        %v5297 = vunpack.c.l.b16 %v4199
        %v5298 = vunpack.c.h.b16 %v4199
        %v5299 = vunpack.c.l.b16 %v4200
        %v5300 = vunpack.c.h.b16 %v4200
        %v5301 = vunpack.c.l.b16 %v4201
        %v5302 = vunpack.c.h.b16 %v4201
        %v5303 = vunpack.c.l.b16 %v4202
        %v5304 = vunpack.c.h.b16 %v4202
        %v5305 = vunpack.c.l.b16 %v4203
        %v5306 = vunpack.c.h.b16 %v4203
        %v5307 = vunpack.c.l.b16 %v4204
        %v5308 = vunpack.c.h.b16 %v4204
        %v5309 = vunpack.c.l.b16 %v4205
        %v5310 = vunpack.c.h.b16 %v4205
        %v5311 = vunpack.c.l.b16 %v4206
        %v5312 = vunpack.c.h.b16 %v4206
        %v5313 = vunpack.c.l.b16 %v4207
        %v5314 = vunpack.c.h.b16 %v4207
        %v5315 = vunpack.c.l.b16 %v4208
        %v5316 = vunpack.c.h.b16 %v4208
        %v5317 = vunpack.c.l.b16 %v4209
        %v5318 = vunpack.c.h.b16 %v4209
        %v5319 = vunpack.c.l.b16 %v4210
        %v5320 = vunpack.c.h.b16 %v4210
        %v5321 = vunpack.c.l.b16 %v4211
        %v5322 = vunpack.c.h.b16 %v4211
        %v5323 = vunpack.c.l.b16 %v4212
        %v5324 = vunpack.c.h.b16 %v4212
        %v5325 = vunpack.c.l.b16 %v4213
        %v5326 = vunpack.c.h.b16 %v4213
        %v5327 = vunpack.c.l.b16 %v4214
        %v5328 = vunpack.c.h.b16 %v4214
        %v5329 = vunpack.c.l.b16 %v4215
        %v5330 = vunpack.c.h.b16 %v4215
        %v5331 = vunpack.c.l.b16 %v4216
        %v5332 = vunpack.c.h.b16 %v4216
        %v5333 = vunpack.c.l.b16 %v4217
        %v5334 = vunpack.c.h.b16 %v4217
        %v5335 = vunpack.c.l.b16 %v4218
        %v5336 = vunpack.c.h.b16 %v4218
        %v5337 = vunpack.c.l.b16 %v4219
        %v5338 = vunpack.c.h.b16 %v4219
        %v5339 = vunpack.c.l.b16 %v4220
        %v5340 = vunpack.c.h.b16 %v4220
        %v5341 = vunpack.c.l.b16 %v4221
        %v5342 = vunpack.c.h.b16 %v4221
        %v5343 = vunpack.c.l.b16 %v4222
        %v5344 = vunpack.c.h.b16 %v4222
        %v5345 = vunpack.c.l.b16 %v4223
        %v5346 = vunpack.c.h.b16 %v4223
        %v5347 = vunpack.c.l.b16 %v4224
        %v5348 = vunpack.c.h.b16 %v4224
        %v5349 = vunpack.c.l.b16 %v4225
        %v5350 = vunpack.c.h.b16 %v4225
        %v5351 = vunpack.c.l.b16 %v4226
        %v5352 = vunpack.c.h.b16 %v4226
        %v5353 = vunpack.c.l.b16 %v4227
        %v5354 = vunpack.c.h.b16 %v4227
        %v5355 = vunpack.c.l.b16 %v4228
        %v5356 = vunpack.c.h.b16 %v4228
        %v5357 = vunpack.c.l.b16 %v4229
        %v5358 = vunpack.c.h.b16 %v4229
        %v5359 = vunpack.c.l.b16 %v4230
        %v5360 = vunpack.c.h.b16 %v4230
        %v5361 = vunpack.c.l.b16 %v4231
        %v5362 = vunpack.c.h.b16 %v4231
        %v5363 = vunpack.c.l.b16 %v4232
        %v5364 = vunpack.c.h.b16 %v4232
        %v5365 = vunpack.c.l.b16 %v4233
        %v5366 = vunpack.c.h.b16 %v4233
        %v5367 = vunpack.c.l.b16 %v4234
        %v5368 = vunpack.c.h.b16 %v4234
        %v5369 = vunpack.c.l.b16 %v4235
        %v5370 = vunpack.c.h.b16 %v4235
        %v5371 = vunpack.c.l.b16 %v4236
        %v5372 = vunpack.c.h.b16 %v4236
        %v5373 = vunpack.c.l.b16 %v4237
        %v5374 = vunpack.c.h.b16 %v4237
        %v5375 = vunpack.c.l.b16 %v4238
        %v5376 = vunpack.c.h.b16 %v4238
        %v5377 = vunpack.c.l.b16 %v4239
        %v5378 = vunpack.c.h.b16 %v4239
        %v5379 = vunpack.c.l.b16 %v4240
        %v5380 = vunpack.c.h.b16 %v4240
        %v5381 = vunpack.c.l.b16 %v4241
        %v5382 = vunpack.c.h.b16 %v4241
        %v5383 = vunpack.c.l.b16 %v4242
        %v5384 = vunpack.c.h.b16 %v4242
        %v5385 = vunpack.c.l.b16 %v4243
        %v5386 = vunpack.c.h.b16 %v4243
        %v5387 = vunpack.c.l.b16 %v4244
        %v5388 = vunpack.c.h.b16 %v4244
        %v5389 = vunpack.c.l.b16 %v4245
        %v5390 = vunpack.c.h.b16 %v4245
        %v5391 = vunpack.c.l.b16 %v4246
        %v5392 = vunpack.c.h.b16 %v4246
        %v5393 = vunpack.c.l.b16 %v4247
        %v5394 = vunpack.c.h.b16 %v4247
        %v5395 = vunpack.c.l.b16 %v4248
        %v5396 = vunpack.c.h.b16 %v4248
        %v5397 = vunpack.c.l.b16 %v4249
        %v5398 = vunpack.c.h.b16 %v4249
        %v5399 = vunpack.c.l.b16 %v4250
        %v5400 = vunpack.c.h.b16 %v4250
        %v5401 = vunpack.c.l.b16 %v4251
        %v5402 = vunpack.c.h.b16 %v4251
        %v5403 = vunpack.c.l.b16 %v4252
        %v5404 = vunpack.c.h.b16 %v4252
        %v5405 = vunpack.c.l.b16 %v4253
        %v5406 = vunpack.c.h.b16 %v4253
        %v5407 = vunpack.c.l.b16 %v4254
        %v5408 = vunpack.c.h.b16 %v4254
        %v5409 = vunpack.c.l.b16 %v4255
        %v5410 = vunpack.c.h.b16 %v4255
        %v5411 = vunpack.c.l.b16 %v4256
        %v5412 = vunpack.c.h.b16 %v4256
        %v5413 = vunpack.c.l.b16 %v4257
        %v5414 = vunpack.c.h.b16 %v4257
        %v5415 = vunpack.c.l.b16 %v4258
        %v5416 = vunpack.c.h.b16 %v4258
        %v5417 = vunpack.c.l.b16 %v4259
        %v5418 = vunpack.c.h.b16 %v4259
        %v5419 = vunpack.c.l.b16 %v4260
        %v5420 = vunpack.c.h.b16 %v4260
        %v5421 = vunpack.c.l.b16 %v4261
        %v5422 = vunpack.c.h.b16 %v4261
        %v5423 = vunpack.c.l.b16 %v4262
        %v5424 = vunpack.c.h.b16 %v4262
        %v5425 = vunpack.c.l.b16 %v4263
        %v5426 = vunpack.c.h.b16 %v4263
        %v5427 = vunpack.c.l.b16 %v4264
        %v5428 = vunpack.c.h.b16 %v4264
        %v5429 = vunpack.c.l.b16 %v4265
        %v5430 = vunpack.c.h.b16 %v4265
        %v5431 = vunpack.c.l.b16 %v4266
        %v5432 = vunpack.c.h.b16 %v4266
        %v5433 = vunpack.c.l.b16 %v4267
        %v5434 = vunpack.c.h.b16 %v4267
        %v5435 = vunpack.c.l.b16 %v4268
        %v5436 = vunpack.c.h.b16 %v4268
        %v5437 = vunpack.c.l.b16 %v4269
        %v5438 = vunpack.c.h.b16 %v4269
        %v5439 = vunpack.c.l.b16 %v4270
        %v5440 = vunpack.c.h.b16 %v4270
        %v5441 = vunpack.c.l.b16 %v4271
        %v5442 = vunpack.c.h.b16 %v4271
        %v5443 = vunpack.c.l.b16 %v4272
        %v5444 = vunpack.c.h.b16 %v4272
        %v5445 = vunpack.c.l.b16 %v4273
        %v5446 = vunpack.c.h.b16 %v4273
        %v5447 = vunpack.c.l.b16 %v4274
        %v5448 = vunpack.c.h.b16 %v4274
        %v5449 = vunpack.c.l.b16 %v4275
        %v5450 = vunpack.c.h.b16 %v4275
        %v5451 = vunpack.c.l.b16 %v4276
        %v5452 = vunpack.c.h.b16 %v4276
        %v5453 = vunpack.c.l.b16 %v4277
        %v5454 = vunpack.c.h.b16 %v4277
        %v5455 = vunpack.c.l.b16 %v4278
        %v5456 = vunpack.c.h.b16 %v4278
        %v5457 = vunpack.c.l.b16 %v4279
        %v5458 = vunpack.c.h.b16 %v4279
        %v5459 = vunpack.c.l.b16 %v4280
        %v5460 = vunpack.c.h.b16 %v4280
        %v5461 = vunpack.c.l.b16 %v4281
        %v5462 = vunpack.c.h.b16 %v4281
        %v5463 = vunpack.c.l.b16 %v4282
        %v5464 = vunpack.c.h.b16 %v4282
        %v5465 = vunpack.c.l.b16 %v4283
        %v5466 = vunpack.c.h.b16 %v4283
        %v5467 = vunpack.c.l.b16 %v4284
        %v5468 = vunpack.c.h.b16 %v4284
        %v5469 = vunpack.c.l.b16 %v4285
        %v5470 = vunpack.c.h.b16 %v4285
        %v5471 = vunpack.c.l.b16 %v4286
        %v5472 = vunpack.c.h.b16 %v4286
        %v5473 = vunpack.c.l.b16 %v4287
        %v5474 = vunpack.c.h.b16 %v4287
        %v5475 = vunpack.c.l.b16 %v4288
        %v5476 = vunpack.c.h.b16 %v4288
        %v5477 = vunpack.c.l.b16 %v4289
        %v5478 = vunpack.c.h.b16 %v4289
        %v5479 = vunpack.c.l.b16 %v4290
        %v5480 = vunpack.c.h.b16 %v4290
        %v5481 = vunpack.c.l.b16 %v4291
        %v5482 = vunpack.c.h.b16 %v4291
        %v5483 = vunpack.c.l.b16 %v4292
        %v5484 = vunpack.c.h.b16 %v4292
        %v5485 = vunpack.c.l.b16 %v4293
        %v5486 = vunpack.c.h.b16 %v4293
        %v5487 = vunpack.c.l.b16 %v4294
        %v5488 = vunpack.c.h.b16 %v4294
        %v5489 = vunpack.c.l.b16 %v4295
        %v5490 = vunpack.c.h.b16 %v4295
        %v5491 = vunpack.c.l.b16 %v4296
        %v5492 = vunpack.c.h.b16 %v4296
        %v5493 = vunpack.c.l.b16 %v4297
        %v5494 = vunpack.c.h.b16 %v4297
        %v5495 = vunpack.c.l.b16 %v4298
        %v5496 = vunpack.c.h.b16 %v4298
        %v5497 = vunpack.c.l.b16 %v4299
        %v5498 = vunpack.c.h.b16 %v4299
        %v5499 = vunpack.c.l.b16 %v4300
        %v5500 = vunpack.c.h.b16 %v4300
        %v5501 = vunpack.c.l.b16 %v4301
        %v5502 = vunpack.c.h.b16 %v4301
        %v5503 = vunpack.c.l.b16 %v4302
        %v5504 = vunpack.c.h.b16 %v4302
        %v5505 = vunpack.c.l.b16 %v4303
        %v5506 = vunpack.c.h.b16 %v4303
        %v5507 = vunpack.c.l.b16 %v4304
        %v5508 = vunpack.c.h.b16 %v4304
        %v5509 = vunpack.c.l.b16 %v4305
        %v5510 = vunpack.c.h.b16 %v4305
        %v5511 = vunpack.c.l.b16 %v4306
        %v5512 = vunpack.c.h.b16 %v4306
        %v5513 = vunpack.c.l.b16 %v4307
        %v5514 = vunpack.c.h.b16 %v4307
        %v5515 = vunpack.c.l.b16 %v4308
        %v5516 = vunpack.c.h.b16 %v4308
        %v5517 = vunpack.c.l.b16 %v4309
        %v5518 = vunpack.c.h.b16 %v4309
        %v5519 = vunpack.c.l.b16 %v4310
        %v5520 = vunpack.c.h.b16 %v4310
        %v5521 = vunpack.c.l.b16 %v4311
        %v5522 = vunpack.c.h.b16 %v4311
        %v5523 = vunpack.c.l.b16 %v4312
        %v5524 = vunpack.c.h.b16 %v4312
        %v5525 = vunpack.c.l.b16 %v4313
        %v5526 = vunpack.c.h.b16 %v4313
        %v5527 = vunpack.c.l.b16 %v4314
        %v5528 = vunpack.c.h.b16 %v4314
        %v5529 = vunpack.c.l.b16 %v4315
        %v5530 = vunpack.c.h.b16 %v4315
        %v5531 = vunpack.c.l.b16 %v4316
        %v5532 = vunpack.c.h.b16 %v4316
        %v5533 = vunpack.c.l.b16 %v4317
        %v5534 = vunpack.c.h.b16 %v4317
        %v5535 = vunpack.c.l.b16 %v4318
        %v5536 = vunpack.c.h.b16 %v4318
        %v5537 = vunpack.c.l.b16 %v4319
        %v5538 = vunpack.c.h.b16 %v4319
        %v5539 = vunpack.c.l.b16 %v4320
        %v5540 = vunpack.c.h.b16 %v4320
        %v5541 = vunpack.c.l.b16 %v4321
        %v5542 = vunpack.c.h.b16 %v4321
        %v5543 = vunpack.c.l.b16 %v4322
        %v5544 = vunpack.c.h.b16 %v4322
        %v5545 = vunpack.c.l.b16 %v4323
        %v5546 = vunpack.c.h.b16 %v4323
        %v5547 = vunpack.c.l.b16 %v4324
        %v5548 = vunpack.c.h.b16 %v4324
        %v5549 = vunpack.c.l.b16 %v4325
        %v5550 = vunpack.c.h.b16 %v4325
        %v5551 = vunpack.c.l.b16 %v4326
        %v5552 = vunpack.c.h.b16 %v4326
        %v5553 = vunpack.c.l.b16 %v4327
        %v5554 = vunpack.c.h.b16 %v4327
        %v5555 = vunpack.c.l.b16 %v4328
        %v5556 = vunpack.c.h.b16 %v4328
        %v5557 = vunpack.c.l.b16 %v4329
        %v5558 = vunpack.c.h.b16 %v4329
        %v5559 = vunpack.c.l.b16 %v4330
        %v5560 = vunpack.c.h.b16 %v4330
        %v5561 = vunpack.c.l.b16 %v4331
        %v5562 = vunpack.c.h.b16 %v4331
        %v5563 = vunpack.c.l.b16 %v4332
        %v5564 = vunpack.c.h.b16 %v4332
        %v5565 = vunpack.c.l.b16 %v4333
        %v5566 = vunpack.c.h.b16 %v4333
        %v5567 = vunpack.c.l.b16 %v4334
        %v5568 = vunpack.c.h.b16 %v4334
        %v5569 = vunpack.c.l.b16 %v4335
        %v5570 = vunpack.c.h.b16 %v4335
        %v5571 = vunpack.c.l.b16 %v4336
        %v5572 = vunpack.c.h.b16 %v4336
        %v5573 = vunpack.c.l.b16 %v4337
        %v5574 = vunpack.c.h.b16 %v4337
        %v5575 = vunpack.c.l.b16 %v4338
        %v5576 = vunpack.c.h.b16 %v4338
        %v5577 = vunpack.c.l.b16 %v4339
        %v5578 = vunpack.c.h.b16 %v4339
        %v5579 = vunpack.c.l.b16 %v4340
        %v5580 = vunpack.c.h.b16 %v4340
        %v5581 = vunpack.c.l.b16 %v4341
        %v5582 = vunpack.c.h.b16 %v4341
        %v5583 = vunpack.c.l.b16 %v4342
        %v5584 = vunpack.c.h.b16 %v4342
        %v5585 = vunpack.c.l.b16 %v4343
        %v5586 = vunpack.c.h.b16 %v4343
        %v5587 = vunpack.c.l.b16 %v4344
        %v5588 = vunpack.c.h.b16 %v4344
        %v5589 = vunpack.c.l.b16 %v4345
        %v5590 = vunpack.c.h.b16 %v4345
        %v5591 = vunpack.c.l.b16 %v4346
        %v5592 = vunpack.c.h.b16 %v4346
        %v5593 = vunpack.c.l.b16 %v4347
        %v5594 = vunpack.c.h.b16 %v4347
        %v5595 = vunpack.c.l.b16 %v4348
        %v5596 = vunpack.c.h.b16 %v4348
        %v5597 = vunpack.c.l.b16 %v4349
        %v5598 = vunpack.c.h.b16 %v4349
        %v5599 = vunpack.c.l.b16 %v4350
        %v5600 = vunpack.c.h.b16 %v4350
        %v5601 = vunpack.c.l.b16 %v4351
        %v5602 = vunpack.c.h.b16 %v4351
        %v5603 = vunpack.c.l.b16 %v4352
        %v5604 = vunpack.c.h.b16 %v4352
        %v5605 = vunpack.c.l.b16 %v4353
        %v5606 = vunpack.c.h.b16 %v4353
        %v5607 = vunpack.c.l.b16 %v4354
        %v5608 = vunpack.c.h.b16 %v4354
        %v5609 = vunpack.c.l.b16 %v4355
        %v5610 = vunpack.c.h.b16 %v4355
        %v5611 = vunpack.c.l.b16 %v4356
        %v5612 = vunpack.c.h.b16 %v4356
        %v5613 = vunpack.c.l.b16 %v4357
        %v5614 = vunpack.c.h.b16 %v4357
        %v5615 = vunpack.c.l.b16 %v4358
        %v5616 = vunpack.c.h.b16 %v4358
        %v5617 = vunpack.c.l.b16 %v4359
        %v5618 = vunpack.c.h.b16 %v4359
        %v5619 = vunpack.c.l.b16 %v4360
        %v5620 = vunpack.c.h.b16 %v4360
        %v5621 = vunpack.c.l.b16 %v4361
        %v5622 = vunpack.c.h.b16 %v4361
        %v5623 = vunpack.c.l.b16 %v4362
        %v5624 = vunpack.c.h.b16 %v4362
        %v5625 = vunpack.c.l.b16 %v4363
        %v5626 = vunpack.c.h.b16 %v4363
        %v5627 = vunpack.c.l.b16 %v4364
        %v5628 = vunpack.c.h.b16 %v4364
        %v5629 = vunpack.c.l.b16 %v4365
        %v5630 = vunpack.c.h.b16 %v4365
        %v5631 = vunpack.c.l.b16 %v4366
        %v5632 = vunpack.c.h.b16 %v4366
        %v5633 = vunpack.c.l.b16 %v4367
        %v5634 = vunpack.c.h.b16 %v4367
        %v5635 = vunpack.c.l.b16 %v4368
        %v5636 = vunpack.c.h.b16 %v4368
        %v5637 = vunpack.c.l.b16 %v4369
        %v5638 = vunpack.c.h.b16 %v4369
        %v5639 = vunpack.c.l.b16 %v4370
        %v5640 = vunpack.c.h.b16 %v4370
        %v5641 = vunpack.c.l.b16 %v4371
        %v5642 = vunpack.c.h.b16 %v4371
        %v5643 = vunpack.c.l.b16 %v4372
        %v5644 = vunpack.c.h.b16 %v4372
        %v5645 = vunpack.c.l.b16 %v4373
        %v5646 = vunpack.c.h.b16 %v4373
        %v5647 = vunpack.c.l.b16 %v4374
        %v5648 = vunpack.c.h.b16 %v4374
        %v5649 = vunpack.c.l.b16 %v4375
        %v5650 = vunpack.c.h.b16 %v4375
        %v5651 = vunpack.c.l.b16 %v4376
        %v5652 = vunpack.c.h.b16 %v4376
        %v5653 = vunpack.c.l.b16 %v4377
        %v5654 = vunpack.c.h.b16 %v4377
        %v5655 = vunpack.c.l.b16 %v4378
        %v5656 = vunpack.c.h.b16 %v4378
        %v5657 = vunpack.c.l.b16 %v4379
        %v5658 = vunpack.c.h.b16 %v4379
        %v5659 = vunpack.c.l.b16 %v4380
        %v5660 = vunpack.c.h.b16 %v4380
        %v5661 = vunpack.c.l.b16 %v4381
        %v5662 = vunpack.c.h.b16 %v4381
        %v5663 = vunpack.c.l.b16 %v4382
        %v5664 = vunpack.c.h.b16 %v4382
        %v5665 = vunpack.c.l.b16 %v4383
        %v5666 = vunpack.c.h.b16 %v4383
        %v5667 = vunpack.c.l.b16 %v4384
        %v5668 = vunpack.c.h.b16 %v4384
        %v5669 = vunpack.c.l.b16 %v4385
        %v5670 = vunpack.c.h.b16 %v4385
        %v5671 = vunpack.c.l.b16 %v4386
        %v5672 = vunpack.c.h.b16 %v4386
        %v5673 = vunpack.c.l.b16 %v4387
        %v5674 = vunpack.c.h.b16 %v4387
        %v5675 = vunpack.c.l.b16 %v4388
        %v5676 = vunpack.c.h.b16 %v4388
        %v5677 = vunpack.c.l.b16 %v4389
        %v5678 = vunpack.c.h.b16 %v4389
        %v5679 = vunpack.c.l.b16 %v4390
        %v5680 = vunpack.c.h.b16 %v4390
        %v5681 = vunpack.c.l.b16 %v4391
        %v5682 = vunpack.c.h.b16 %v4391
        %v5683 = vunpack.c.l.b16 %v4392
        %v5684 = vunpack.c.h.b16 %v4392
        %v5685 = vunpack.c.l.b16 %v4393
        %v5686 = vunpack.c.h.b16 %v4393
        %v5687 = vunpack.c.l.b16 %v4394
        %v5688 = vunpack.c.h.b16 %v4394
        %v5689 = vunpack.c.l.b16 %v4395
        %v5690 = vunpack.c.h.b16 %v4395
        %v5691 = vunpack.c.l.b16 %v4396
        %v5692 = vunpack.c.h.b16 %v4396
        %v5693 = vunpack.c.l.b16 %v4397
        %v5694 = vunpack.c.h.b16 %v4397
        %v5695 = vunpack.c.l.b16 %v4398
        %v5696 = vunpack.c.h.b16 %v4398
        %v5697 = vunpack.c.l.b16 %v4399
        %v5698 = vunpack.c.h.b16 %v4399
        %v5699 = vunpack.c.l.b16 %v4400
        %v5700 = vunpack.c.h.b16 %v4400
        %v5701 = vunpack.c.l.b16 %v4401
        %v5702 = vunpack.c.h.b16 %v4401
        %v5703 = vunpack.c.l.b16 %v4402
        %v5704 = vunpack.c.h.b16 %v4402
        %v5705 = vunpack.c.l.b16 %v4403
        %v5706 = vunpack.c.h.b16 %v4403
        %v5707 = vunpack.c.l.b16 %v4404
        %v5708 = vunpack.c.h.b16 %v4404
        %v5709 = vunpack.c.l.b16 %v4405
        %v5710 = vunpack.c.h.b16 %v4405
        %v5711 = vunpack.c.l.b16 %v4406
        %v5712 = vunpack.c.h.b16 %v4406
        %v5713 = vunpack.c.l.b16 %v4407
        %v5714 = vunpack.c.h.b16 %v4407
        %v5715 = vunpack.c.l.b16 %v4408
        %v5716 = vunpack.c.h.b16 %v4408
        %v5717 = vunpack.c.l.b16 %v4409
        %v5718 = vunpack.c.h.b16 %v4409
        %v5719 = vunpack.c.l.b16 %v4410
        %v5720 = vunpack.c.h.b16 %v4410
        %v5721 = vunpack.c.l.b16 %v4411
        %v5722 = vunpack.c.h.b16 %v4411
        %v5723 = vunpack.c.l.b16 %v4412
        %v5724 = vunpack.c.h.b16 %v4412
        %v5725 = vunpack.c.l.b16 %v4413
        %v5726 = vunpack.c.h.b16 %v4413
        %v5727 = vunpack.c.l.b16 %v4414
        %v5728 = vunpack.c.h.b16 %v4414
        %v5729 = vunpack.c.l.b16 %v4415
        %v5730 = vunpack.c.h.b16 %v4415
        %v5731 = vunpack.c.l.b16 %v4416
        %v5732 = vunpack.c.h.b16 %v4416
        %v5733 = vunpack.c.l.b16 %v4417
        %v5734 = vunpack.c.h.b16 %v4417
        %v5735 = vunpack.c.l.b16 %v4418
        %v5736 = vunpack.c.h.b16 %v4418
        %v5737 = vunpack.c.l.b16 %v4419
        %v5738 = vunpack.c.h.b16 %v4419
        %v5739 = vunpack.c.l.b16 %v4420
        %v5740 = vunpack.c.h.b16 %v4420
        %v5741 = vunpack.c.l.b16 %v4421
        %v5742 = vunpack.c.h.b16 %v4421
        %v5743 = vunpack.c.l.b16 %v4422
        %v5744 = vunpack.c.h.b16 %v4422
        %v5745 = vunpack.c.l.b16 %v4423
        %v5746 = vunpack.c.h.b16 %v4423
        %v5747 = vunpack.c.l.b16 %v4424
        %v5748 = vunpack.c.h.b16 %v4424
        %v5749 = vunpack.c.l.b16 %v4425
        %v5750 = vunpack.c.h.b16 %v4425
        %v5751 = vunpack.c.l.b16 %v4426
        %v5752 = vunpack.c.h.b16 %v4426
        %v5753 = vunpack.c.l.b16 %v4427
        %v5754 = vunpack.c.h.b16 %v4427
        %v5755 = vunpack.c.l.b16 %v4428
        %v5756 = vunpack.c.h.b16 %v4428
        %v5757 = vunpack.c.l.b16 %v4429
        %v5758 = vunpack.c.h.b16 %v4429
        %v5759 = vunpack.c.l.b16 %v4430
        %v5760 = vunpack.c.h.b16 %v4430
        %v5761 = vunpack.c.l.b16 %v4431
        %v5762 = vunpack.c.h.b16 %v4431
        %v5763 = vunpack.c.l.b16 %v4432
        %v5764 = vunpack.c.h.b16 %v4432
        %v5765 = vunpack.c.l.b16 %v4433
        %v5766 = vunpack.c.h.b16 %v4433
        %v5767 = vunpack.c.l.b16 %v4434
        %v5768 = vunpack.c.h.b16 %v4434
        %v5769 = vunpack.c.l.b16 %v4435
        %v5770 = vunpack.c.h.b16 %v4435
        %v5771 = vunpack.c.l.b16 %v4436
        %v5772 = vunpack.c.h.b16 %v4436
        %v5773 = vunpack.c.l.b16 %v4437
        %v5774 = vunpack.c.h.b16 %v4437
        %v5775 = vunpack.c.l.b16 %v4438
        %v5776 = vunpack.c.h.b16 %v4438
        %v5777 = vunpack.c.l.b16 %v4439
        %v5778 = vunpack.c.h.b16 %v4439
        %v5779 = vunpack.c.l.b16 %v4440
        %v5780 = vunpack.c.h.b16 %v4440
        %v5781 = vunpack.c.l.b16 %v4441
        %v5782 = vunpack.c.h.b16 %v4441
        %v5783 = vunpack.c.l.b16 %v4442
        %v5784 = vunpack.c.h.b16 %v4442
        %v5785 = vunpack.c.l.b16 %v4443
        %v5786 = vunpack.c.h.b16 %v4443
        %v5787 = vunpack.c.l.b16 %v4444
        %v5788 = vunpack.c.h.b16 %v4444
        %v5789 = vunpack.c.l.b16 %v4445
        %v5790 = vunpack.c.h.b16 %v4445
        %v5791 = vunpack.c.l.b16 %v4446
        %v5792 = vunpack.c.h.b16 %v4446
        %v5793 = vunpack.c.l.b16 %v4447
        %v5794 = vunpack.c.h.b16 %v4447
        %v5795 = vunpack.c.l.b16 %v4448
        %v5796 = vunpack.c.h.b16 %v4448
        %v5797 = vunpack.c.l.b16 %v4449
        %v5798 = vunpack.c.h.b16 %v4449
        %v5799 = vunpack.c.l.b16 %v4450
        %v5800 = vunpack.c.h.b16 %v4450
        %v5801 = vunpack.c.l.b16 %v4451
        %v5802 = vunpack.c.h.b16 %v4451
        %v5803 = vunpack.c.l.b16 %v4452
        %v5804 = vunpack.c.h.b16 %v4452
        %v5805 = vunpack.c.l.b16 %v4453
        %v5806 = vunpack.c.h.b16 %v4453
        %v5807 = vunpack.c.l.b16 %v4454
        %v5808 = vunpack.c.h.b16 %v4454
        %v5809 = vunpack.c.l.b16 %v4455
        %v5810 = vunpack.c.h.b16 %v4455
        %v5811 = vunpack.c.l.b16 %v4456
        %v5812 = vunpack.c.h.b16 %v4456
        %v5813 = vunpack.c.l.b16 %v4457
        %v5814 = vunpack.c.h.b16 %v4457
        %v5815 = vunpack.c.l.b16 %v4458
        %v5816 = vunpack.c.h.b16 %v4458
        %v5817 = vunpack.c.l.b16 %v4459
        %v5818 = vunpack.c.h.b16 %v4459
        %v5819 = vunpack.c.l.b16 %v4460
        %v5820 = vunpack.c.h.b16 %v4460
        %v5821 = vunpack.c.l.b16 %v4461
        %v5822 = vunpack.c.h.b16 %v4461
        %v5823 = vunpack.c.l.b16 %v4462
        %v5824 = vunpack.c.h.b16 %v4462
        %v5825 = vunpack.c.l.b16 %v4463
        %v5826 = vunpack.c.h.b16 %v4463
        %v5827 = vunpack.c.l.b16 %v4464
        %v5828 = vunpack.c.h.b16 %v4464
        %v5829 = vunpack.c.l.b16 %v4465
        %v5830 = vunpack.c.h.b16 %v4465
        %v5831 = vunpack.c.l.b16 %v4466
        %v5832 = vunpack.c.h.b16 %v4466
        %v5833 = vunpack.c.l.b16 %v4467
        %v5834 = vunpack.c.h.b16 %v4467
        %v5835 = vunpack.c.l.b16 %v4468
        %v5836 = vunpack.c.h.b16 %v4468
        %v5837 = vunpack.c.l.b16 %v4469
        %v5838 = vunpack.c.h.b16 %v4469
        %v5839 = vunpack.c.l.b16 %v4470
        %v5840 = vunpack.c.h.b16 %v4470
        %v5841 = vunpack.c.l.b16 %v4471
        %v5842 = vunpack.c.h.b16 %v4471
        %v5843 = vunpack.c.l.b16 %v4472
        %v5844 = vunpack.c.h.b16 %v4472
        %v5845 = vunpack.c.l.b16 %v4473
        %v5846 = vunpack.c.h.b16 %v4473
        %v5847 = vunpack.c.l.b16 %v4474
        %v5848 = vunpack.c.h.b16 %v4474
        %v5849 = vunpack.c.l.b16 %v4475
        %v5850 = vunpack.c.h.b16 %v4475
        %v5851 = vunpack.c.l.b16 %v4476
        %v5852 = vunpack.c.h.b16 %v4476
        %v5853 = vunpack.c.l.b16 %v4477
        %v5854 = vunpack.c.h.b16 %v4477
        %v5855 = vunpack.c.l.b16 %v4478
        %v5856 = vunpack.c.h.b16 %v4478
        %v5857 = vunpack.c.l.b16 %v4479
        %v5858 = vunpack.c.h.b16 %v4479
        %v5859 = vunpack.c.l.b16 %v4480
        %v5860 = vunpack.c.h.b16 %v4480
        %v5861 = vunpack.c.l.b16 %v4481
        %v5862 = vunpack.c.h.b16 %v4481
        %v5863 = vunpack.c.l.b16 %v4482
        %v5864 = vunpack.c.h.b16 %v4482
        %v5865 = vunpack.c.l.b16 %v4483
        %v5866 = vunpack.c.h.b16 %v4483
        %v5867 = vunpack.c.l.b16 %v4484
        %v5868 = vunpack.c.h.b16 %v4484
        %v5869 = vunpack.c.l.b16 %v4485
        %v5870 = vunpack.c.h.b16 %v4485
        %v5871 = vunpack.c.l.b16 %v4486
        %v5872 = vunpack.c.h.b16 %v4486
        %v5873 = vunpack.c.l.b16 %v4487
        %v5874 = vunpack.c.h.b16 %v4487
        %v5875 = vunpack.c.l.b16 %v4488
        %v5876 = vunpack.c.h.b16 %v4488
        %v5877 = vunpack.c.l.b16 %v4489
        %v5878 = vunpack.c.h.b16 %v4489
        %v5879 = vunpack.c.l.b16 %v4490
        %v5880 = vunpack.c.h.b16 %v4490
        %v5881 = vunpack.c.l.b16 %v4491
        %v5882 = vunpack.c.h.b16 %v4491
        %v5883 = vunpack.c.l.b16 %v4492
        %v5884 = vunpack.c.h.b16 %v4492
        %v5885 = vunpack.c.l.b16 %v4493
        %v5886 = vunpack.c.h.b16 %v4493
        %v5887 = vunpack.c.l.b16 %v4494
        %v5888 = vunpack.c.h.b16 %v4494
        %v5889 = vunpack.c.l.b16 %v4495
        %v5890 = vunpack.c.h.b16 %v4495
        %v5891 = vunpack.c.l.b16 %v4496
        %v5892 = vunpack.c.h.b16 %v4496
        %v5893 = vunpack.c.l.b16 %v4497
        %v5894 = vunpack.c.h.b16 %v4497
        %v5895 = vunpack.c.l.b16 %v4498
        %v5896 = vunpack.c.h.b16 %v4498
        %v5897 = vunpack.c.l.b16 %v4499
        %v5898 = vunpack.c.h.b16 %v4499
        %v5899 = vunpack.c.l.b16 %v4500
        %v5900 = vunpack.c.h.b16 %v4500
        %v5901 = vunpack.c.l.b16 %v4501
        %v5902 = vunpack.c.h.b16 %v4501
        %v5903 = vunpack.c.l.b16 %v4502
        %v5904 = vunpack.c.h.b16 %v4502
        %v5905 = vunpack.c.l.b16 %v4503
        %v5906 = vunpack.c.h.b16 %v4503
        %v5907 = vunpack.c.l.b16 %v4504
        %v5908 = vunpack.c.h.b16 %v4504
        %v5909 = vunpack.c.l.b16 %v4505
        %v5910 = vunpack.c.h.b16 %v4505
        %v5911 = vunpack.c.l.b16 %v4506
        %v5912 = vunpack.c.h.b16 %v4506
        %v5913 = vunpack.c.l.b16 %v4507
        %v5914 = vunpack.c.h.b16 %v4507
        %v5915 = vunpack.c.l.b16 %v4508
        %v5916 = vunpack.c.h.b16 %v4508
        %v5917 = vunpack.c.l.b16 %v4509
        %v5918 = vunpack.c.h.b16 %v4509
        %v5919 = vunpack.c.l.b16 %v4510
        %v5920 = vunpack.c.h.b16 %v4510
        %v5921 = vunpack.c.l.b16 %v4511
        %v5922 = vunpack.c.h.b16 %v4511
        %v5923 = vunpack.c.l.b16 %v4512
        %v5924 = vunpack.c.h.b16 %v4512
        %v5925 = vunpack.c.l.b16 %v4513
        %v5926 = vunpack.c.h.b16 %v4513
        %v5927 = vunpack.c.l.b16 %v4514
        %v5928 = vunpack.c.h.b16 %v4514
        %v5929 = vunpack.c.l.b16 %v4515
        %v5930 = vunpack.c.h.b16 %v4515
        %v5931 = vunpack.c.l.b16 %v4516
        %v5932 = vunpack.c.h.b16 %v4516
        %v5933 = vunpack.c.l.b16 %v4517
        %v5934 = vunpack.c.h.b16 %v4517
        %v5935 = vunpack.c.l.b16 %v4518
        %v5936 = vunpack.c.h.b16 %v4518
        %v5937 = vunpack.c.l.b16 %v4519
        %v5938 = vunpack.c.h.b16 %v4519
        %v5939 = vunpack.c.l.b16 %v4520
        %v5940 = vunpack.c.h.b16 %v4520
        %v5941 = vunpack.c.l.b16 %v4521
        %v5942 = vunpack.c.h.b16 %v4521
        %v5943 = vunpack.c.l.b16 %v4522
        %v5944 = vunpack.c.h.b16 %v4522
        %v5945 = vunpack.c.l.b16 %v4523
        %v5946 = vunpack.c.h.b16 %v4523
        %v5947 = vunpack.c.l.b16 %v4524
        %v5948 = vunpack.c.h.b16 %v4524
        %v5949 = vunpack.c.l.b16 %v4525
        %v5950 = vunpack.c.h.b16 %v4525
        %v5951 = vunpack.c.l.b16 %v4526
        %v5952 = vunpack.c.h.b16 %v4526
        %v5953 = vunpack.c.l.b16 %v4527
        %v5954 = vunpack.c.h.b16 %v4527
        %v5955 = vunpack.c.l.b16 %v4528
        %v5956 = vunpack.c.h.b16 %v4528
        %v5957 = vunpack.c.l.b16 %v4529
        %v5958 = vunpack.c.h.b16 %v4529
        %v5959 = vunpack.c.l.b16 %v4530
        %v5960 = vunpack.c.h.b16 %v4530
        %v5961 = vunpack.c.l.b16 %v4531
        %v5962 = vunpack.c.h.b16 %v4531
        %v5963 = vunpack.c.l.b16 %v4532
        %v5964 = vunpack.c.h.b16 %v4532
        %v5965 = vunpack.c.l.b16 %v4533
        %v5966 = vunpack.c.h.b16 %v4533
        %v5967 = vunpack.c.l.b16 %v4534
        %v5968 = vunpack.c.h.b16 %v4534
        %v5969 = vunpack.c.l.b16 %v4535
        %v5970 = vunpack.c.h.b16 %v4535
        %v5971 = vunpack.c.l.b16 %v4536
        %v5972 = vunpack.c.h.b16 %v4536
        %v5973 = vunpack.c.l.b16 %v4537
        %v5974 = vunpack.c.h.b16 %v4537
        %v5975 = vunpack.c.l.b16 %v4538
        %v5976 = vunpack.c.h.b16 %v4538
        %v5977 = vunpack.c.l.b16 %v4539
        %v5978 = vunpack.c.h.b16 %v4539
        %v5979 = vunpack.c.l.b16 %v4540
        %v5980 = vunpack.c.h.b16 %v4540
        %v5981 = vunpack.c.l.b16 %v4541
        %v5982 = vunpack.c.h.b16 %v4541
        %v5983 = vunpack.c.l.b16 %v4542
        %v5984 = vunpack.c.h.b16 %v4542
        %v5985 = vunpack.c.l.b16 %v4543
        %v5986 = vunpack.c.h.b16 %v4543
        %v5987 = vunpack.c.l.b16 %v4544
        %v5988 = vunpack.c.h.b16 %v4544
        %v5989 = vunpack.c.l.b16 %v4545
        %v5990 = vunpack.c.h.b16 %v4545
        %v5991 = vunpack.c.l.b16 %v4546
        %v5992 = vunpack.c.h.b16 %v4546
        %v5993 = vunpack.c.l.b16 %v4547
        %v5994 = vunpack.c.h.b16 %v4547
        %v5995 = vunpack.c.l.b16 %v4548
        %v5996 = vunpack.c.h.b16 %v4548
        %v5997 = vunpack.c.l.b16 %v4549
        %v5998 = vunpack.c.h.b16 %v4549
        %v5999 = vunpack.c.l.b16 %v4550
        %v6000 = vunpack.c.h.b16 %v4550
        %v6001 = vunpack.c.l.b16 %v4551
        %v6002 = vunpack.c.h.b16 %v4551
        %v6003 = vunpack.c.l.b16 %v4552
        %v6004 = vunpack.c.h.b16 %v4552
        %v6005 = vunpack.c.l.b16 %v4553
        %v6006 = vunpack.c.h.b16 %v4553
        %v6007 = vunpack.c.l.b16 %v4554
        %v6008 = vunpack.c.h.b16 %v4554
        %v6009 = vunpack.c.l.b16 %v4555
        %v6010 = vunpack.c.h.b16 %v4555
        %v6011 = vunpack.c.l.b16 %v4556
        %v6012 = vunpack.c.h.b16 %v4556
        %v6013 = vunpack.c.l.b16 %v4557
        %v6014 = vunpack.c.h.b16 %v4557
        %v6015 = vunpack.c.l.b16 %v4558
        %v6016 = vunpack.c.h.b16 %v4558
        %v6017 = vunpack.c.l.b16 %v4559
        %v6018 = vunpack.c.h.b16 %v4559
        %v6019 = vunpack.c.l.b16 %v4560
        %v6020 = vunpack.c.h.b16 %v4560
        %v6021 = vunpack.c.l.b16 %v4561
        %v6022 = vunpack.c.h.b16 %v4561
        %v6023 = vunpack.c.l.b16 %v4562
        %v6024 = vunpack.c.h.b16 %v4562
        %v6025 = vunpack.c.l.b16 %v4563
        %v6026 = vunpack.c.h.b16 %v4563
        %v6027 = vunpack.c.l.b16 %v4564
        %v6028 = vunpack.c.h.b16 %v4564
        %v6029 = vunpack.c.l.b16 %v4565
        %v6030 = vunpack.c.h.b16 %v4565
        %v6031 = vunpack.c.l.b16 %v4566
        %v6032 = vunpack.c.h.b16 %v4566
        %v6033 = vunpack.c.l.b16 %v4567
        %v6034 = vunpack.c.h.b16 %v4567
        %v6035 = vunpack.c.l.b16 %v4568
        %v6036 = vunpack.c.h.b16 %v4568
        %v6037 = vunpack.c.l.b16 %v4569
        %v6038 = vunpack.c.h.b16 %v4569
        %v6039 = vunpack.c.l.b16 %v4570
        %v6040 = vunpack.c.h.b16 %v4570
        %v6041 = vunpack.c.l.b16 %v4571
        %v6042 = vunpack.c.h.b16 %v4571
        %v6043 = vunpack.c.l.b16 %v4572
        %v6044 = vunpack.c.h.b16 %v4572
        %v6045 = vunpack.c.l.b16 %v4573
        %v6046 = vunpack.c.h.b16 %v4573
        %v6047 = vunpack.c.l.b16 %v4574
        %v6048 = vunpack.c.h.b16 %v4574
        %v6049 = vunpack.c.l.b16 %v4575
        %v6050 = vunpack.c.h.b16 %v4575
        %v6051 = vunpack.c.l.b16 %v4576
        %v6052 = vunpack.c.h.b16 %v4576
        %v6053 = vunpack.c.l.b16 %v4577
        %v6054 = vunpack.c.h.b16 %v4577
        %v6055 = vunpack.c.l.b16 %v4578
        %v6056 = vunpack.c.h.b16 %v4578
        %v6057 = vunpack.c.l.b16 %v4579
        %v6058 = vunpack.c.h.b16 %v4579
        %v6059 = vunpack.c.l.b16 %v4580
        %v6060 = vunpack.c.h.b16 %v4580
        %v6061 = vunpack.c.l.b16 %v4581
        %v6062 = vunpack.c.h.b16 %v4581
        %v6063 = vunpack.c.l.b16 %v4582
        %v6064 = vunpack.c.h.b16 %v4582
        %v6065 = vunpack.c.l.b16 %v4583
        %v6066 = vunpack.c.h.b16 %v4583
        %v6067 = vunpack.c.l.b16 %v4584
        %v6068 = vunpack.c.h.b16 %v4584
        %v6069 = vunpack.c.l.b16 %v4585
        %v6070 = vunpack.c.h.b16 %v4585
        %v6071 = vunpack.c.l.b16 %v4586
        %v6072 = vunpack.c.h.b16 %v4586
        %v6073 = vunpack.c.l.b16 %v4587
        %v6074 = vunpack.c.h.b16 %v4587
        %v6075 = vunpack.c.l.b16 %v4588
        %v6076 = vunpack.c.h.b16 %v4588
        %v6077 = vunpack.c.l.b16 %v4589
        %v6078 = vunpack.c.h.b16 %v4589
        %v6079 = vunpack.c.l.b16 %v4590
        %v6080 = vunpack.c.h.b16 %v4590
        %v6081 = vunpack.c.l.b16 %v4591
        %v6082 = vunpack.c.h.b16 %v4591
        %v6083 = vunpack.c.l.b16 %v4592
        %v6084 = vunpack.c.h.b16 %v4592
        %v6085 = vunpack.c.l.b16 %v4593
        %v6086 = vunpack.c.h.b16 %v4593
        %v6087 = vunpack.c.l.b16 %v4594
        %v6088 = vunpack.c.h.b16 %v4594
        %v6089 = vunpack.c.l.b16 %v4595
        %v6090 = vunpack.c.h.b16 %v4595
        %v6091 = vunpack.c.l.b16 %v4596
        %v6092 = vunpack.c.h.b16 %v4596
        %v6093 = vunpack.c.l.b16 %v4597
        %v6094 = vunpack.c.h.b16 %v4597
        %v6095 = vunpack.c.l.b16 %v4598
        %v6096 = vunpack.c.h.b16 %v4598
        %v6097 = vunpack.c.l.b16 %v4599
        %v6098 = vunpack.c.h.b16 %v4599
        %v6099 = vunpack.c.l.b16 %v4600
        %v6100 = vunpack.c.h.b16 %v4600
        %v6101 = vunpack.c.l.b16 %v4601
        %v6102 = vunpack.c.h.b16 %v4601
        %v6103 = vunpack.c.l.b16 %v4602
        %v6104 = vunpack.c.h.b16 %v4602
        %v6105 = vunpack.c.l.b16 %v4603
        %v6106 = vunpack.c.h.b16 %v4603
        %v6107 = vunpack.c.l.b16 %v4604
        %v6108 = vunpack.c.h.b16 %v4604
        %v6109 = vunpack.c.l.b16 %v4605
        %v6110 = vunpack.c.h.b16 %v4605
        %v6111 = vunpack.c.l.b16 %v4606
        %v6112 = vunpack.c.h.b16 %v4606
        %v6113 = vunpack.c.l.b16 %v4607
        %v6114 = vunpack.c.h.b16 %v4607
        %v6115 = vunpack.c.l.b16 %v4608
        %v6116 = vunpack.c.h.b16 %v4608
        %v6117 = vunpack.c.l.b16 %v4609
        %v6118 = vunpack.c.h.b16 %v4609
        %v6119 = vunpack.c.l.b16 %v4610
        %v6120 = vunpack.c.h.b16 %v4610
        %v6121 = vunpack.c.l.b16 %v4611
        %v6122 = vunpack.c.h.b16 %v4611
        %v6123 = vunpack.c.l.b16 %v4612
        %v6124 = vunpack.c.h.b16 %v4612
        %v6125 = vunpack.c.l.b16 %v4613
        %v6126 = vunpack.c.h.b16 %v4613
        %v6127 = vunpack.c.l.b16 %v4614
        %v6128 = vunpack.c.h.b16 %v4614
        %v6129 = vunpack.c.l.b16 %v4615
        %v6130 = vunpack.c.h.b16 %v4615
        %v6131 = vunpack.c.l.b16 %v4616
        %v6132 = vunpack.c.h.b16 %v4616
        %v6133 = vunpack.c.l.b16 %v4617
        %v6134 = vunpack.c.h.b16 %v4617
        %v6135 = vunpack.c.l.b16 %v4618
        %v6136 = vunpack.c.h.b16 %v4618
        %v6137 = vunpack.c.l.b16 %v4619
        %v6138 = vunpack.c.h.b16 %v4619
        %v6139 = vunpack.c.l.b16 %v4620
        %v6140 = vunpack.c.h.b16 %v4620
        %v6141 = vunpack.c.l.b16 %v4621
        %v6142 = vunpack.c.h.b16 %v4621
        %v6143 = vunpack.c.l.b16 %v4622
        %v6144 = vunpack.c.h.b16 %v4622
        %v6145 = vunpack.c.l.b16 %v4623
        %v6146 = vunpack.c.h.b16 %v4623
        %v6147 = vunpack.c.l.b16 %v4624
        %v6148 = vunpack.c.h.b16 %v4624
        %v6149 = vunpack.c.l.b16 %v4625
        %v6150 = vunpack.c.h.b16 %v4625
        %v6151 = vunpack.c.l.b16 %v4626
        %v6152 = vunpack.c.h.b16 %v4626
        %v6153 = vunpack.c.l.b16 %v4627
        %v6154 = vunpack.c.h.b16 %v4627
        %v6155 = vunpack.c.l.b16 %v4628
        %v6156 = vunpack.c.h.b16 %v4628
        %v6157 = vunpack.c.l.b16 %v4629
        %v6158 = vunpack.c.h.b16 %v4629
        %v6159 = vunpack.c.l.b16 %v4630
        %v6160 = vunpack.c.h.b16 %v4630
        %v6161 = vunpack.c.l.b16 %v4631
        %v6162 = vunpack.c.h.b16 %v4631
        %v6163 = vunpack.c.l.b16 %v4632
        %v6164 = vunpack.c.h.b16 %v4632
        %v6165 = vunpack.c.l.b16 %v4633
        %v6166 = vunpack.c.h.b16 %v4633
        %v6167 = vunpack.c.l.b16 %v4634
        %v6168 = vunpack.c.h.b16 %v4634
        %v6169 = vunpack.c.l.b16 %v4635
        %v6170 = vunpack.c.h.b16 %v4635
        %v6171 = vunpack.c.l.b16 %v4636
        %v6172 = vunpack.c.h.b16 %v4636
        %v6173 = vunpack.c.l.b16 %v4637
        %v6174 = vunpack.c.h.b16 %v4637
        %v6175 = vunpack.c.l.b16 %v4638
        %v6176 = vunpack.c.h.b16 %v4638
        %v6177 = vunpack.c.l.b16 %v4639
        %v6178 = vunpack.c.h.b16 %v4639
        %v6179 = vunpack.c.l.b16 %v4640
        %v6180 = vunpack.c.h.b16 %v4640
        %v6181 = vunpack.c.l.b16 %v4641
        %v6182 = vunpack.c.h.b16 %v4641
        %v6183 = vunpack.c.l.b16 %v4642
        %v6184 = vunpack.c.h.b16 %v4642
        %v6185 = vunpack.c.l.b16 %v4643
        %v6186 = vunpack.c.h.b16 %v4643
        %v6187 = vunpack.c.l.b16 %v4644
        %v6188 = vunpack.c.h.b16 %v4644
        %v6189 = vunpack.c.l.b16 %v4645
        %v6190 = vunpack.c.h.b16 %v4645
        %v6191 = vunpack.c.l.b16 %v4646
        %v6192 = vunpack.c.h.b16 %v4646
        %v6193 = vunpack.c.l.b16 %v4647
        %v6194 = vunpack.c.h.b16 %v4647
        %v6195 = vunpack.c.l.b16 %v4648
        %v6196 = vunpack.c.h.b16 %v4648
        %v6197 = vunpack.c.l.b16 %v4649
        %v6198 = vunpack.c.h.b16 %v4649
        %v6199 = vunpack.c.l.b16 %v4650
        %v6200 = vunpack.c.h.b16 %v4650
        %v6201 = vunpack.c.l.b16 %v4651
        %v6202 = vunpack.c.h.b16 %v4651
        %v6203 = vunpack.c.l.b16 %v4652
        %v6204 = vunpack.c.h.b16 %v4652
        %v6205 = vunpack.c.l.b16 %v4653
        %v6206 = vunpack.c.h.b16 %v4653
        %v6207 = vunpack.c.l.b16 %v4654
        %v6208 = vunpack.c.h.b16 %v4654
        %v6209 = vunpack.c.l.b16 %v4655
        %v6210 = vunpack.c.h.b16 %v4655
        %v6211 = vunpack.c.l.b16 %v4656
        %v6212 = vunpack.c.h.b16 %v4656
        %v6213 = vunpack.c.l.b16 %v4657
        %v6214 = vunpack.c.h.b16 %v4657
        %v6215 = vunpack.c.l.b16 %v4658
        %v6216 = vunpack.c.h.b16 %v4658
        %v6217 = vpack.c.b16 %v5197, %v5193
        %v6218 = vpack.c.b16 %v5198, %v5194
        %v6219 = vpack.c.b16 %v5199, %v5195
        %v6220 = vpack.c.b16 %v5200, %v5196
        %v6221 = vpack.c.b16 %v5205, %v5201
        %v6222 = vpack.c.b16 %v5206, %v5202
        %v6223 = vpack.c.b16 %v5207, %v5203
        %v6224 = vpack.c.b16 %v5208, %v5204
        %v6225 = vpack.c.b16 %v5213, %v5209
        %v6226 = vpack.c.b16 %v5214, %v5210
        %v6227 = vpack.c.b16 %v5215, %v5211
        %v6228 = vpack.c.b16 %v5216, %v5212
        %v6229 = vpack.c.b16 %v5221, %v5217
        %v6230 = vpack.c.b16 %v5222, %v5218
        %v6231 = vpack.c.b16 %v5223, %v5219
        %v6232 = vpack.c.b16 %v5224, %v5220
        %v6233 = vpack.c.b16 %v5229, %v5225
        %v6234 = vpack.c.b16 %v5230, %v5226
        %v6235 = vpack.c.b16 %v5231, %v5227
        %v6236 = vpack.c.b16 %v5232, %v5228
        %v6237 = vpack.c.b16 %v5237, %v5233
        %v6238 = vpack.c.b16 %v5238, %v5234
        %v6239 = vpack.c.b16 %v5239, %v5235
        %v6240 = vpack.c.b16 %v5240, %v5236
        %v6241 = vpack.c.b16 %v5245, %v5241
        %v6242 = vpack.c.b16 %v5246, %v5242
        %v6243 = vpack.c.b16 %v5247, %v5243
        %v6244 = vpack.c.b16 %v5248, %v5244
        %v6245 = vpack.c.b16 %v5253, %v5249
        %v6246 = vpack.c.b16 %v5254, %v5250
        %v6247 = vpack.c.b16 %v5255, %v5251
        %v6248 = vpack.c.b16 %v5256, %v5252
        %v6249 = vpack.c.b16 %v5261, %v5257
        %v6250 = vpack.c.b16 %v5262, %v5258
        %v6251 = vpack.c.b16 %v5263, %v5259
        %v6252 = vpack.c.b16 %v5264, %v5260
        %v6253 = vpack.c.b16 %v5269, %v5265
        %v6254 = vpack.c.b16 %v5270, %v5266
        %v6255 = vpack.c.b16 %v5271, %v5267
        %v6256 = vpack.c.b16 %v5272, %v5268
        %v6257 = vpack.c.b16 %v5277, %v5273
        %v6258 = vpack.c.b16 %v5278, %v5274
        %v6259 = vpack.c.b16 %v5279, %v5275
        %v6260 = vpack.c.b16 %v5280, %v5276
        %v6261 = vpack.c.b16 %v5285, %v5281
        %v6262 = vpack.c.b16 %v5286, %v5282
        %v6263 = vpack.c.b16 %v5287, %v5283
        %v6264 = vpack.c.b16 %v5288, %v5284
        %v6265 = vpack.c.b16 %v5293, %v5289
        %v6266 = vpack.c.b16 %v5294, %v5290
        %v6267 = vpack.c.b16 %v5295, %v5291
        %v6268 = vpack.c.b16 %v5296, %v5292
        %v6269 = vpack.c.b16 %v5301, %v5297
        %v6270 = vpack.c.b16 %v5302, %v5298
        %v6271 = vpack.c.b16 %v5303, %v5299
        %v6272 = vpack.c.b16 %v5304, %v5300
        %v6273 = vpack.c.b16 %v5309, %v5305
        %v6274 = vpack.c.b16 %v5310, %v5306
        %v6275 = vpack.c.b16 %v5311, %v5307
        %v6276 = vpack.c.b16 %v5312, %v5308
        %v6277 = vpack.c.b16 %v5317, %v5313
        %v6278 = vpack.c.b16 %v5318, %v5314
        %v6279 = vpack.c.b16 %v5319, %v5315
        %v6280 = vpack.c.b16 %v5320, %v5316
        %v6281 = vpack.c.b16 %v5325, %v5321
        %v6282 = vpack.c.b16 %v5326, %v5322
        %v6283 = vpack.c.b16 %v5327, %v5323
        %v6284 = vpack.c.b16 %v5328, %v5324
        %v6285 = vpack.c.b16 %v5333, %v5329
        %v6286 = vpack.c.b16 %v5334, %v5330
        %v6287 = vpack.c.b16 %v5335, %v5331
        %v6288 = vpack.c.b16 %v5336, %v5332
        %v6289 = vpack.c.b16 %v5341, %v5337
        %v6290 = vpack.c.b16 %v5342, %v5338
        %v6291 = vpack.c.b16 %v5343, %v5339
        %v6292 = vpack.c.b16 %v5344, %v5340
        %v6293 = vpack.c.b16 %v5349, %v5345
        %v6294 = vpack.c.b16 %v5350, %v5346
        %v6295 = vpack.c.b16 %v5351, %v5347
        %v6296 = vpack.c.b16 %v5352, %v5348
        %v6297 = vpack.c.b16 %v5357, %v5353
        %v6298 = vpack.c.b16 %v5358, %v5354
        %v6299 = vpack.c.b16 %v5359, %v5355
        %v6300 = vpack.c.b16 %v5360, %v5356
        %v6301 = vpack.c.b16 %v5365, %v5361
        %v6302 = vpack.c.b16 %v5366, %v5362
        %v6303 = vpack.c.b16 %v5367, %v5363
        %v6304 = vpack.c.b16 %v5368, %v5364
        %v6305 = vpack.c.b16 %v5373, %v5369
        %v6306 = vpack.c.b16 %v5374, %v5370
        %v6307 = vpack.c.b16 %v5375, %v5371
        %v6308 = vpack.c.b16 %v5376, %v5372
        %v6309 = vpack.c.b16 %v5381, %v5377
        %v6310 = vpack.c.b16 %v5382, %v5378
        %v6311 = vpack.c.b16 %v5383, %v5379
        %v6312 = vpack.c.b16 %v5384, %v5380
        %v6313 = vpack.c.b16 %v5389, %v5385
        %v6314 = vpack.c.b16 %v5390, %v5386
        %v6315 = vpack.c.b16 %v5391, %v5387
        %v6316 = vpack.c.b16 %v5392, %v5388
        %v6317 = vpack.c.b16 %v5397, %v5393
        %v6318 = vpack.c.b16 %v5398, %v5394
        %v6319 = vpack.c.b16 %v5399, %v5395
        %v6320 = vpack.c.b16 %v5400, %v5396
        %v6321 = vpack.c.b16 %v5405, %v5401
        %v6322 = vpack.c.b16 %v5406, %v5402
        %v6323 = vpack.c.b16 %v5407, %v5403
        %v6324 = vpack.c.b16 %v5408, %v5404
        %v6325 = vpack.c.b16 %v5413, %v5409
        %v6326 = vpack.c.b16 %v5414, %v5410
        %v6327 = vpack.c.b16 %v5415, %v5411
        %v6328 = vpack.c.b16 %v5416, %v5412
        %v6329 = vpack.c.b16 %v5421, %v5417
        %v6330 = vpack.c.b16 %v5422, %v5418
        %v6331 = vpack.c.b16 %v5423, %v5419
        %v6332 = vpack.c.b16 %v5424, %v5420
        %v6333 = vpack.c.b16 %v5429, %v5425
        %v6334 = vpack.c.b16 %v5430, %v5426
        %v6335 = vpack.c.b16 %v5431, %v5427
        %v6336 = vpack.c.b16 %v5432, %v5428
        %v6337 = vpack.c.b16 %v5437, %v5433
        %v6338 = vpack.c.b16 %v5438, %v5434
        %v6339 = vpack.c.b16 %v5439, %v5435
        %v6340 = vpack.c.b16 %v5440, %v5436
        %v6341 = vpack.c.b16 %v5445, %v5441
        %v6342 = vpack.c.b16 %v5446, %v5442
        %v6343 = vpack.c.b16 %v5447, %v5443
        %v6344 = vpack.c.b16 %v5448, %v5444
        %v6345 = vpack.c.b16 %v5453, %v5449
        %v6346 = vpack.c.b16 %v5454, %v5450
        %v6347 = vpack.c.b16 %v5455, %v5451
        %v6348 = vpack.c.b16 %v5456, %v5452
        %v6349 = vpack.c.b16 %v5461, %v5457
        %v6350 = vpack.c.b16 %v5462, %v5458
        %v6351 = vpack.c.b16 %v5463, %v5459
        %v6352 = vpack.c.b16 %v5464, %v5460
        %v6353 = vpack.c.b16 %v5469, %v5465
        %v6354 = vpack.c.b16 %v5470, %v5466
        %v6355 = vpack.c.b16 %v5471, %v5467
        %v6356 = vpack.c.b16 %v5472, %v5468
        %v6357 = vpack.c.b16 %v5477, %v5473
        %v6358 = vpack.c.b16 %v5478, %v5474
        %v6359 = vpack.c.b16 %v5479, %v5475
        %v6360 = vpack.c.b16 %v5480, %v5476
        %v6361 = vpack.c.b16 %v5485, %v5481
        %v6362 = vpack.c.b16 %v5486, %v5482
        %v6363 = vpack.c.b16 %v5487, %v5483
        %v6364 = vpack.c.b16 %v5488, %v5484
        %v6365 = vpack.c.b16 %v5493, %v5489
        %v6366 = vpack.c.b16 %v5494, %v5490
        %v6367 = vpack.c.b16 %v5495, %v5491
        %v6368 = vpack.c.b16 %v5496, %v5492
        %v6369 = vpack.c.b16 %v5501, %v5497
        %v6370 = vpack.c.b16 %v5502, %v5498
        %v6371 = vpack.c.b16 %v5503, %v5499
        %v6372 = vpack.c.b16 %v5504, %v5500
        %v6373 = vpack.c.b16 %v5509, %v5505
        %v6374 = vpack.c.b16 %v5510, %v5506
        %v6375 = vpack.c.b16 %v5511, %v5507
        %v6376 = vpack.c.b16 %v5512, %v5508
        %v6377 = vpack.c.b16 %v5517, %v5513
        %v6378 = vpack.c.b16 %v5518, %v5514
        %v6379 = vpack.c.b16 %v5519, %v5515
        %v6380 = vpack.c.b16 %v5520, %v5516
        %v6381 = vpack.c.b16 %v5525, %v5521
        %v6382 = vpack.c.b16 %v5526, %v5522
        %v6383 = vpack.c.b16 %v5527, %v5523
        %v6384 = vpack.c.b16 %v5528, %v5524
        %v6385 = vpack.c.b16 %v5533, %v5529
        %v6386 = vpack.c.b16 %v5534, %v5530
        %v6387 = vpack.c.b16 %v5535, %v5531
        %v6388 = vpack.c.b16 %v5536, %v5532
        %v6389 = vpack.c.b16 %v5541, %v5537
        %v6390 = vpack.c.b16 %v5542, %v5538
        %v6391 = vpack.c.b16 %v5543, %v5539
        %v6392 = vpack.c.b16 %v5544, %v5540
        %v6393 = vpack.c.b16 %v5549, %v5545
        %v6394 = vpack.c.b16 %v5550, %v5546
        %v6395 = vpack.c.b16 %v5551, %v5547
        %v6396 = vpack.c.b16 %v5552, %v5548
        %v6397 = vpack.c.b16 %v5557, %v5553
        %v6398 = vpack.c.b16 %v5558, %v5554
        %v6399 = vpack.c.b16 %v5559, %v5555
        %v6400 = vpack.c.b16 %v5560, %v5556
        %v6401 = vpack.c.b16 %v5565, %v5561
        %v6402 = vpack.c.b16 %v5566, %v5562
        %v6403 = vpack.c.b16 %v5567, %v5563
        %v6404 = vpack.c.b16 %v5568, %v5564
        %v6405 = vpack.c.b16 %v5573, %v5569
        %v6406 = vpack.c.b16 %v5574, %v5570
        %v6407 = vpack.c.b16 %v5575, %v5571
        %v6408 = vpack.c.b16 %v5576, %v5572
        %v6409 = vpack.c.b16 %v5581, %v5577
        %v6410 = vpack.c.b16 %v5582, %v5578
        %v6411 = vpack.c.b16 %v5583, %v5579
        %v6412 = vpack.c.b16 %v5584, %v5580
        %v6413 = vpack.c.b16 %v5589, %v5585
        %v6414 = vpack.c.b16 %v5590, %v5586
        %v6415 = vpack.c.b16 %v5591, %v5587
        %v6416 = vpack.c.b16 %v5592, %v5588
        %v6417 = vpack.c.b16 %v5597, %v5593
        %v6418 = vpack.c.b16 %v5598, %v5594
        %v6419 = vpack.c.b16 %v5599, %v5595
        %v6420 = vpack.c.b16 %v5600, %v5596
        %v6421 = vpack.c.b16 %v5605, %v5601
        %v6422 = vpack.c.b16 %v5606, %v5602
        %v6423 = vpack.c.b16 %v5607, %v5603
        %v6424 = vpack.c.b16 %v5608, %v5604
        %v6425 = vpack.c.b16 %v5613, %v5609
        %v6426 = vpack.c.b16 %v5614, %v5610
        %v6427 = vpack.c.b16 %v5615, %v5611
        %v6428 = vpack.c.b16 %v5616, %v5612
        %v6429 = vpack.c.b16 %v5621, %v5617
        %v6430 = vpack.c.b16 %v5622, %v5618
        %v6431 = vpack.c.b16 %v5623, %v5619
        %v6432 = vpack.c.b16 %v5624, %v5620
        %v6433 = vpack.c.b16 %v5629, %v5625
        %v6434 = vpack.c.b16 %v5630, %v5626
        %v6435 = vpack.c.b16 %v5631, %v5627
        %v6436 = vpack.c.b16 %v5632, %v5628
        %v6437 = vpack.c.b16 %v5637, %v5633
        %v6438 = vpack.c.b16 %v5638, %v5634
        %v6439 = vpack.c.b16 %v5639, %v5635
        %v6440 = vpack.c.b16 %v5640, %v5636
        %v6441 = vpack.c.b16 %v5645, %v5641
        %v6442 = vpack.c.b16 %v5646, %v5642
        %v6443 = vpack.c.b16 %v5647, %v5643
        %v6444 = vpack.c.b16 %v5648, %v5644
        %v6445 = vpack.c.b16 %v5653, %v5649
        %v6446 = vpack.c.b16 %v5654, %v5650
        %v6447 = vpack.c.b16 %v5655, %v5651
        %v6448 = vpack.c.b16 %v5656, %v5652
        %v6449 = vpack.c.b16 %v5661, %v5657
        %v6450 = vpack.c.b16 %v5662, %v5658
        %v6451 = vpack.c.b16 %v5663, %v5659
        %v6452 = vpack.c.b16 %v5664, %v5660
        %v6453 = vpack.c.b16 %v5669, %v5665
        %v6454 = vpack.c.b16 %v5670, %v5666
        %v6455 = vpack.c.b16 %v5671, %v5667
        %v6456 = vpack.c.b16 %v5672, %v5668
        %v6457 = vpack.c.b16 %v5677, %v5673
        %v6458 = vpack.c.b16 %v5678, %v5674
        %v6459 = vpack.c.b16 %v5679, %v5675
        %v6460 = vpack.c.b16 %v5680, %v5676
        %v6461 = vpack.c.b16 %v5685, %v5681
        %v6462 = vpack.c.b16 %v5686, %v5682
        %v6463 = vpack.c.b16 %v5687, %v5683
        %v6464 = vpack.c.b16 %v5688, %v5684
        %v6465 = vpack.c.b16 %v5693, %v5689
        %v6466 = vpack.c.b16 %v5694, %v5690
        %v6467 = vpack.c.b16 %v5695, %v5691
        %v6468 = vpack.c.b16 %v5696, %v5692
        %v6469 = vpack.c.b16 %v5701, %v5697
        %v6470 = vpack.c.b16 %v5702, %v5698
        %v6471 = vpack.c.b16 %v5703, %v5699
        %v6472 = vpack.c.b16 %v5704, %v5700
        %v6473 = vpack.c.b16 %v5709, %v5705
        %v6474 = vpack.c.b16 %v5710, %v5706
        %v6475 = vpack.c.b16 %v5711, %v5707
        %v6476 = vpack.c.b16 %v5712, %v5708
        %v6477 = vpack.c.b16 %v5717, %v5713
        %v6478 = vpack.c.b16 %v5718, %v5714
        %v6479 = vpack.c.b16 %v5719, %v5715
        %v6480 = vpack.c.b16 %v5720, %v5716
        %v6481 = vpack.c.b16 %v5725, %v5721
        %v6482 = vpack.c.b16 %v5726, %v5722
        %v6483 = vpack.c.b16 %v5727, %v5723
        %v6484 = vpack.c.b16 %v5728, %v5724
        %v6485 = vpack.c.b16 %v5733, %v5729
        %v6486 = vpack.c.b16 %v5734, %v5730
        %v6487 = vpack.c.b16 %v5735, %v5731
        %v6488 = vpack.c.b16 %v5736, %v5732
        %v6489 = vpack.c.b16 %v5741, %v5737
        %v6490 = vpack.c.b16 %v5742, %v5738
        %v6491 = vpack.c.b16 %v5743, %v5739
        %v6492 = vpack.c.b16 %v5744, %v5740
        %v6493 = vpack.c.b16 %v5749, %v5745
        %v6494 = vpack.c.b16 %v5750, %v5746
        %v6495 = vpack.c.b16 %v5751, %v5747
        %v6496 = vpack.c.b16 %v5752, %v5748
        %v6497 = vpack.c.b16 %v5757, %v5753
        %v6498 = vpack.c.b16 %v5758, %v5754
        %v6499 = vpack.c.b16 %v5759, %v5755
        %v6500 = vpack.c.b16 %v5760, %v5756
        %v6501 = vpack.c.b16 %v5765, %v5761
        %v6502 = vpack.c.b16 %v5766, %v5762
        %v6503 = vpack.c.b16 %v5767, %v5763
        %v6504 = vpack.c.b16 %v5768, %v5764
        %v6505 = vpack.c.b16 %v5773, %v5769
        %v6506 = vpack.c.b16 %v5774, %v5770
        %v6507 = vpack.c.b16 %v5775, %v5771
        %v6508 = vpack.c.b16 %v5776, %v5772
        %v6509 = vpack.c.b16 %v5781, %v5777
        %v6510 = vpack.c.b16 %v5782, %v5778
        %v6511 = vpack.c.b16 %v5783, %v5779
        %v6512 = vpack.c.b16 %v5784, %v5780
        %v6513 = vpack.c.b16 %v5789, %v5785
        %v6514 = vpack.c.b16 %v5790, %v5786
        %v6515 = vpack.c.b16 %v5791, %v5787
        %v6516 = vpack.c.b16 %v5792, %v5788
        %v6517 = vpack.c.b16 %v5797, %v5793
        %v6518 = vpack.c.b16 %v5798, %v5794
        %v6519 = vpack.c.b16 %v5799, %v5795
        %v6520 = vpack.c.b16 %v5800, %v5796
        %v6521 = vpack.c.b16 %v5805, %v5801
        %v6522 = vpack.c.b16 %v5806, %v5802
        %v6523 = vpack.c.b16 %v5807, %v5803
        %v6524 = vpack.c.b16 %v5808, %v5804
        %v6525 = vpack.c.b16 %v5813, %v5809
        %v6526 = vpack.c.b16 %v5814, %v5810
        %v6527 = vpack.c.b16 %v5815, %v5811
        %v6528 = vpack.c.b16 %v5816, %v5812
        %v6529 = vpack.c.b16 %v5821, %v5817
        %v6530 = vpack.c.b16 %v5822, %v5818
        %v6531 = vpack.c.b16 %v5823, %v5819
        %v6532 = vpack.c.b16 %v5824, %v5820
        %v6533 = vpack.c.b16 %v5829, %v5825
        %v6534 = vpack.c.b16 %v5830, %v5826
        %v6535 = vpack.c.b16 %v5831, %v5827
        %v6536 = vpack.c.b16 %v5832, %v5828
        %v6537 = vpack.c.b16 %v5837, %v5833
        %v6538 = vpack.c.b16 %v5838, %v5834
        %v6539 = vpack.c.b16 %v5839, %v5835
        %v6540 = vpack.c.b16 %v5840, %v5836
        %v6541 = vpack.c.b16 %v5845, %v5841
        %v6542 = vpack.c.b16 %v5846, %v5842
        %v6543 = vpack.c.b16 %v5847, %v5843
        %v6544 = vpack.c.b16 %v5848, %v5844
        %v6545 = vpack.c.b16 %v5853, %v5849
        %v6546 = vpack.c.b16 %v5854, %v5850
        %v6547 = vpack.c.b16 %v5855, %v5851
        %v6548 = vpack.c.b16 %v5856, %v5852
        %v6549 = vpack.c.b16 %v5861, %v5857
        %v6550 = vpack.c.b16 %v5862, %v5858
        %v6551 = vpack.c.b16 %v5863, %v5859
        %v6552 = vpack.c.b16 %v5864, %v5860
        %v6553 = vpack.c.b16 %v5869, %v5865
        %v6554 = vpack.c.b16 %v5870, %v5866
        %v6555 = vpack.c.b16 %v5871, %v5867
        %v6556 = vpack.c.b16 %v5872, %v5868
        %v6557 = vpack.c.b16 %v5877, %v5873
        %v6558 = vpack.c.b16 %v5878, %v5874
        %v6559 = vpack.c.b16 %v5879, %v5875
        %v6560 = vpack.c.b16 %v5880, %v5876
        %v6561 = vpack.c.b16 %v5885, %v5881
        %v6562 = vpack.c.b16 %v5886, %v5882
        %v6563 = vpack.c.b16 %v5887, %v5883
        %v6564 = vpack.c.b16 %v5888, %v5884
        %v6565 = vpack.c.b16 %v5893, %v5889
        %v6566 = vpack.c.b16 %v5894, %v5890
        %v6567 = vpack.c.b16 %v5895, %v5891
        %v6568 = vpack.c.b16 %v5896, %v5892
        %v6569 = vpack.c.b16 %v5901, %v5897
        %v6570 = vpack.c.b16 %v5902, %v5898
        %v6571 = vpack.c.b16 %v5903, %v5899
        %v6572 = vpack.c.b16 %v5904, %v5900
        %v6573 = vpack.c.b16 %v5909, %v5905
        %v6574 = vpack.c.b16 %v5910, %v5906
        %v6575 = vpack.c.b16 %v5911, %v5907
        %v6576 = vpack.c.b16 %v5912, %v5908
        %v6577 = vpack.c.b16 %v5917, %v5913
        %v6578 = vpack.c.b16 %v5918, %v5914
        %v6579 = vpack.c.b16 %v5919, %v5915
        %v6580 = vpack.c.b16 %v5920, %v5916
        %v6581 = vpack.c.b16 %v5925, %v5921
        %v6582 = vpack.c.b16 %v5926, %v5922
        %v6583 = vpack.c.b16 %v5927, %v5923
        %v6584 = vpack.c.b16 %v5928, %v5924
        %v6585 = vpack.c.b16 %v5933, %v5929
        %v6586 = vpack.c.b16 %v5934, %v5930
        %v6587 = vpack.c.b16 %v5935, %v5931
        %v6588 = vpack.c.b16 %v5936, %v5932
        %v6589 = vpack.c.b16 %v5941, %v5937
        %v6590 = vpack.c.b16 %v5942, %v5938
        %v6591 = vpack.c.b16 %v5943, %v5939
        %v6592 = vpack.c.b16 %v5944, %v5940
        %v6593 = vpack.c.b16 %v5949, %v5945
        %v6594 = vpack.c.b16 %v5950, %v5946
        %v6595 = vpack.c.b16 %v5951, %v5947
        %v6596 = vpack.c.b16 %v5952, %v5948
        %v6597 = vpack.c.b16 %v5957, %v5953
        %v6598 = vpack.c.b16 %v5958, %v5954
        %v6599 = vpack.c.b16 %v5959, %v5955
        %v6600 = vpack.c.b16 %v5960, %v5956
        %v6601 = vpack.c.b16 %v5965, %v5961
        %v6602 = vpack.c.b16 %v5966, %v5962
        %v6603 = vpack.c.b16 %v5967, %v5963
        %v6604 = vpack.c.b16 %v5968, %v5964
        %v6605 = vpack.c.b16 %v5973, %v5969
        %v6606 = vpack.c.b16 %v5974, %v5970
        %v6607 = vpack.c.b16 %v5975, %v5971
        %v6608 = vpack.c.b16 %v5976, %v5972
        %v6609 = vpack.c.b16 %v5981, %v5977
        %v6610 = vpack.c.b16 %v5982, %v5978
        %v6611 = vpack.c.b16 %v5983, %v5979
        %v6612 = vpack.c.b16 %v5984, %v5980
        %v6613 = vpack.c.b16 %v5989, %v5985
        %v6614 = vpack.c.b16 %v5990, %v5986
        %v6615 = vpack.c.b16 %v5991, %v5987
        %v6616 = vpack.c.b16 %v5992, %v5988
        %v6617 = vpack.c.b16 %v5997, %v5993
        %v6618 = vpack.c.b16 %v5998, %v5994
        %v6619 = vpack.c.b16 %v5999, %v5995
        %v6620 = vpack.c.b16 %v6000, %v5996
        %v6621 = vpack.c.b16 %v6005, %v6001
        %v6622 = vpack.c.b16 %v6006, %v6002
        %v6623 = vpack.c.b16 %v6007, %v6003
        %v6624 = vpack.c.b16 %v6008, %v6004
        %v6625 = vpack.c.b16 %v6013, %v6009
        %v6626 = vpack.c.b16 %v6014, %v6010
        %v6627 = vpack.c.b16 %v6015, %v6011
        %v6628 = vpack.c.b16 %v6016, %v6012
        %v6629 = vpack.c.b16 %v6021, %v6017
        %v6630 = vpack.c.b16 %v6022, %v6018
        %v6631 = vpack.c.b16 %v6023, %v6019
        %v6632 = vpack.c.b16 %v6024, %v6020
        %v6633 = vpack.c.b16 %v6029, %v6025
        %v6634 = vpack.c.b16 %v6030, %v6026
        %v6635 = vpack.c.b16 %v6031, %v6027
        %v6636 = vpack.c.b16 %v6032, %v6028
        %v6637 = vpack.c.b16 %v6037, %v6033
        %v6638 = vpack.c.b16 %v6038, %v6034
        %v6639 = vpack.c.b16 %v6039, %v6035
        %v6640 = vpack.c.b16 %v6040, %v6036
        %v6641 = vpack.c.b16 %v6045, %v6041
        %v6642 = vpack.c.b16 %v6046, %v6042
        %v6643 = vpack.c.b16 %v6047, %v6043
        %v6644 = vpack.c.b16 %v6048, %v6044
        %v6645 = vpack.c.b16 %v6053, %v6049
        %v6646 = vpack.c.b16 %v6054, %v6050
        %v6647 = vpack.c.b16 %v6055, %v6051
        %v6648 = vpack.c.b16 %v6056, %v6052
        %v6649 = vpack.c.b16 %v6061, %v6057
        %v6650 = vpack.c.b16 %v6062, %v6058
        %v6651 = vpack.c.b16 %v6063, %v6059
        %v6652 = vpack.c.b16 %v6064, %v6060
        %v6653 = vpack.c.b16 %v6069, %v6065
        %v6654 = vpack.c.b16 %v6070, %v6066
        %v6655 = vpack.c.b16 %v6071, %v6067
        %v6656 = vpack.c.b16 %v6072, %v6068
        %v6657 = vpack.c.b16 %v6077, %v6073
        %v6658 = vpack.c.b16 %v6078, %v6074
        %v6659 = vpack.c.b16 %v6079, %v6075
        %v6660 = vpack.c.b16 %v6080, %v6076
        %v6661 = vpack.c.b16 %v6085, %v6081
        %v6662 = vpack.c.b16 %v6086, %v6082
        %v6663 = vpack.c.b16 %v6087, %v6083
        %v6664 = vpack.c.b16 %v6088, %v6084
        %v6665 = vpack.c.b16 %v6093, %v6089
        %v6666 = vpack.c.b16 %v6094, %v6090
        %v6667 = vpack.c.b16 %v6095, %v6091
        %v6668 = vpack.c.b16 %v6096, %v6092
        %v6669 = vpack.c.b16 %v6101, %v6097
        %v6670 = vpack.c.b16 %v6102, %v6098
        %v6671 = vpack.c.b16 %v6103, %v6099
        %v6672 = vpack.c.b16 %v6104, %v6100
        %v6673 = vpack.c.b16 %v6109, %v6105
        %v6674 = vpack.c.b16 %v6110, %v6106
        %v6675 = vpack.c.b16 %v6111, %v6107
        %v6676 = vpack.c.b16 %v6112, %v6108
        %v6677 = vpack.c.b16 %v6117, %v6113
        %v6678 = vpack.c.b16 %v6118, %v6114
        %v6679 = vpack.c.b16 %v6119, %v6115
        %v6680 = vpack.c.b16 %v6120, %v6116
        %v6681 = vpack.c.b16 %v6125, %v6121
        %v6682 = vpack.c.b16 %v6126, %v6122
        %v6683 = vpack.c.b16 %v6127, %v6123
        %v6684 = vpack.c.b16 %v6128, %v6124
        %v6685 = vpack.c.b16 %v6133, %v6129
        %v6686 = vpack.c.b16 %v6134, %v6130
        %v6687 = vpack.c.b16 %v6135, %v6131
        %v6688 = vpack.c.b16 %v6136, %v6132
        %v6689 = vpack.c.b16 %v6141, %v6137
        %v6690 = vpack.c.b16 %v6142, %v6138
        %v6691 = vpack.c.b16 %v6143, %v6139
        %v6692 = vpack.c.b16 %v6144, %v6140
        %v6693 = vpack.c.b16 %v6149, %v6145
        %v6694 = vpack.c.b16 %v6150, %v6146
        %v6695 = vpack.c.b16 %v6151, %v6147
        %v6696 = vpack.c.b16 %v6152, %v6148
        %v6697 = vpack.c.b16 %v6157, %v6153
        %v6698 = vpack.c.b16 %v6158, %v6154
        %v6699 = vpack.c.b16 %v6159, %v6155
        %v6700 = vpack.c.b16 %v6160, %v6156
        %v6701 = vpack.c.b16 %v6165, %v6161
        %v6702 = vpack.c.b16 %v6166, %v6162
        %v6703 = vpack.c.b16 %v6167, %v6163
        %v6704 = vpack.c.b16 %v6168, %v6164
        %v6705 = vpack.c.b16 %v6173, %v6169
        %v6706 = vpack.c.b16 %v6174, %v6170
        %v6707 = vpack.c.b16 %v6175, %v6171
        %v6708 = vpack.c.b16 %v6176, %v6172
        %v6709 = vpack.c.b16 %v6181, %v6177
        %v6710 = vpack.c.b16 %v6182, %v6178
        %v6711 = vpack.c.b16 %v6183, %v6179
        %v6712 = vpack.c.b16 %v6184, %v6180
        %v6713 = vpack.c.b16 %v6189, %v6185
        %v6714 = vpack.c.b16 %v6190, %v6186
        %v6715 = vpack.c.b16 %v6191, %v6187
        %v6716 = vpack.c.b16 %v6192, %v6188
        %v6717 = vpack.c.b16 %v6197, %v6193
        %v6718 = vpack.c.b16 %v6198, %v6194
        %v6719 = vpack.c.b16 %v6199, %v6195
        %v6720 = vpack.c.b16 %v6200, %v6196
        %v6721 = vpack.c.b16 %v6205, %v6201
        %v6722 = vpack.c.b16 %v6206, %v6202
        %v6723 = vpack.c.b16 %v6207, %v6203
        %v6724 = vpack.c.b16 %v6208, %v6204
        %v6725 = vpack.c.b16 %v6213, %v6209
        %v6726 = vpack.c.b16 %v6214, %v6210
        %v6727 = vpack.c.b16 %v6215, %v6211
        %v6728 = vpack.c.b16 %v6216, %v6212
        %7241 = vmatprep.subr.bf16.mxu0 %v6246
        %7242 = vmatpush1.bf16.msra.mxu0 %v6245
        %7243 = vmatprep.subr.bf16.mxu0 %v6242
        %7244 = vmatpush1.bf16.msra.mxu0 %v6241
        %7245 = vmatprep.subr.bf16.mxu0 %v6238
        %7246 = vmatpush1.bf16.msra.mxu0 %v6237
        %7247 = vmatprep.subr.bf16.mxu0 %v6234
        %7248 = vmatpush1.bf16.msra.mxu0 %v6233
        %7249 = vmatprep.subr.bf16.mxu0 %v6230
        %7250 = vmatpush1.bf16.msra.mxu0 %v6229
        %7251 = vmatprep.subr.bf16.mxu0 %v6226
        %7252 = vmatpush1.bf16.msra.mxu0 %v6225
        %7253 = vmatprep.subr.bf16.mxu0 %v6222
        %7254 = vmatpush1.bf16.msra.mxu0 %v6221
        %7255 = vmatprep.subr.bf16.mxu0 %v6218
        %7256 = vmatpush1.bf16.msra.mxu0 %v6217
        %7257 = vmatprep.subr.bf16.mxu0 %v6278
        %7258 = vmatpush2.bf16.msra.mxu0 %v6277
        %7259 = vmatprep.subr.bf16.mxu0 %v6274
        %7260 = vmatpush2.bf16.msra.mxu0 %v6273
        %7261 = vmatprep.subr.bf16.mxu0 %v6270
        %7262 = vmatpush2.bf16.msra.mxu0 %v6269
        %7263 = vmatprep.subr.bf16.mxu0 %v6266
        %7264 = vmatpush2.bf16.msra.mxu0 %v6265
        %7265 = vmatprep.subr.bf16.mxu0 %v6262
        %7266 = vmatpush2.bf16.msra.mxu0 %v6261
        %7267 = vmatprep.subr.bf16.mxu0 %v6258
        %7268 = vmatpush2.bf16.msra.mxu0 %v6257
        %7269 = vmatprep.subr.bf16.mxu0 %v6254
        %7270 = vmatpush2.bf16.msra.mxu0 %v6253
        %7271 = vmatprep.subr.bf16.mxu0 %v6250
        %7272 = vmatpush2.bf16.msra.mxu0 %v6249
        %7273 = vmatprep.mubr.bf16.mxu0 %v4132
        %7274 = vmatmul.mubr.bf16.gmra.mxu0 %v4131
        %v7275 = vpop.f32.mrf.mxu0
        %v7276 = vadd.f32 %v4664, %v7275
        %v7277 = vpop.f32.mrf.mxu0
        %v7278 = vadd.f32 %v4668, %v7277
        %v7279 = vpop.f32.mrf.mxu0
        %v7280 = vpop.f32.mrf.mxu0
        %7281 = vdwg.mxu0
        %7282 = vmatprep.subr.bf16.mxu0 %v6310
        %7283 = vmatpush1.bf16.msra.mxu0 %v6309
        %7284 = vmatprep.subr.bf16.mxu0 %v6306
        %7285 = vmatpush1.bf16.msra.mxu0 %v6305
        %7286 = vmatprep.subr.bf16.mxu0 %v6302
        %7287 = vmatpush1.bf16.msra.mxu0 %v6301
        %7288 = vmatprep.subr.bf16.mxu0 %v6298
        %7289 = vmatpush1.bf16.msra.mxu0 %v6297
        %7290 = vmatprep.subr.bf16.mxu0 %v6294
        %7291 = vmatpush1.bf16.msra.mxu0 %v6293
        %7292 = vmatprep.subr.bf16.mxu0 %v6290
        %7293 = vmatpush1.bf16.msra.mxu0 %v6289
        %7294 = vmatprep.subr.bf16.mxu0 %v6286
        %7295 = vmatpush1.bf16.msra.mxu0 %v6285
        %7296 = vmatprep.subr.bf16.mxu0 %v6282
        %7297 = vmatpush1.bf16.msra.mxu0 %v6281
        %7298 = vmatprep.subr.bf16.mxu0 %v6342
        %7299 = vmatpush2.bf16.msra.mxu0 %v6341
        %7300 = vmatprep.subr.bf16.mxu0 %v6338
        %7301 = vmatpush2.bf16.msra.mxu0 %v6337
        %7302 = vmatprep.subr.bf16.mxu0 %v6334
        %7303 = vmatpush2.bf16.msra.mxu0 %v6333
        %7304 = vmatprep.subr.bf16.mxu0 %v6330
        %7305 = vmatpush2.bf16.msra.mxu0 %v6329
        %7306 = vmatprep.subr.bf16.mxu0 %v6326
        %7307 = vmatpush2.bf16.msra.mxu0 %v6325
        %7308 = vmatprep.subr.bf16.mxu0 %v6322
        %7309 = vmatpush2.bf16.msra.mxu0 %v6321
        %7310 = vmatprep.subr.bf16.mxu0 %v6318
        %7311 = vmatpush2.bf16.msra.mxu0 %v6317
        %7312 = vmatprep.subr.bf16.mxu0 %v6314
        %7313 = vmatpush2.bf16.msra.mxu0 %v6313
        %7314 = vmatprep.mubr.bf16.mxu0 %v4134
        %7315 = vmatmul.mubr.bf16.gmra.mxu0 %v4133
        %v7316 = vpop.f32.mrf.mxu0
        %v7317 = vadd.f32 %v7276, %v7316
        %v7318 = vpop.f32.mrf.mxu0
        %v7319 = vadd.f32 %v7278, %v7318
        %v7320 = vpop.f32.mrf.mxu0
        %v7321 = vpop.f32.mrf.mxu0
        %7322 = vdwg.mxu0
        %7323 = vmatprep.subr.bf16.mxu0 %v6374
        %7324 = vmatpush1.bf16.msra.mxu0 %v6373
        %7325 = vmatprep.subr.bf16.mxu0 %v6370
        %7326 = vmatpush1.bf16.msra.mxu0 %v6369
        %7327 = vmatprep.subr.bf16.mxu0 %v6366
        %7328 = vmatpush1.bf16.msra.mxu0 %v6365
        %7329 = vmatprep.subr.bf16.mxu0 %v6362
        %7330 = vmatpush1.bf16.msra.mxu0 %v6361
        %7331 = vmatprep.subr.bf16.mxu0 %v6358
        %7332 = vmatpush1.bf16.msra.mxu0 %v6357
        %7333 = vmatprep.subr.bf16.mxu0 %v6354
        %7334 = vmatpush1.bf16.msra.mxu0 %v6353
        %7335 = vmatprep.subr.bf16.mxu0 %v6350
        %7336 = vmatpush1.bf16.msra.mxu0 %v6349
        %7337 = vmatprep.subr.bf16.mxu0 %v6346
        %7338 = vmatpush1.bf16.msra.mxu0 %v6345
        %7339 = vmatprep.subr.bf16.mxu0 %v6406
        %7340 = vmatpush2.bf16.msra.mxu0 %v6405
        %7341 = vmatprep.subr.bf16.mxu0 %v6402
        %7342 = vmatpush2.bf16.msra.mxu0 %v6401
        %7343 = vmatprep.subr.bf16.mxu0 %v6398
        %7344 = vmatpush2.bf16.msra.mxu0 %v6397
        %7345 = vmatprep.subr.bf16.mxu0 %v6394
        %7346 = vmatpush2.bf16.msra.mxu0 %v6393
        %7347 = vmatprep.subr.bf16.mxu0 %v6390
        %7348 = vmatpush2.bf16.msra.mxu0 %v6389
        %7349 = vmatprep.subr.bf16.mxu0 %v6386
        %7350 = vmatpush2.bf16.msra.mxu0 %v6385
        %7351 = vmatprep.subr.bf16.mxu0 %v6382
        %7352 = vmatpush2.bf16.msra.mxu0 %v6381
        %7353 = vmatprep.subr.bf16.mxu0 %v6378
        %7354 = vmatpush2.bf16.msra.mxu0 %v6377
        %7355 = vmatprep.mubr.bf16.mxu0 %v4136
        %7356 = vmatmul.mubr.bf16.gmra.mxu0 %v4135
        %v7357 = vpop.f32.mrf.mxu0
        %v7358 = vadd.f32 %v7317, %v7357
        %v7359 = vpop.f32.mrf.mxu0
        %v7360 = vadd.f32 %v7319, %v7359
        %v7361 = vpop.f32.mrf.mxu0
        %v7362 = vpop.f32.mrf.mxu0
        %7363 = vdwg.mxu0
        %7364 = vmatprep.subr.bf16.mxu0 %v6438
        %7365 = vmatpush1.bf16.msra.mxu0 %v6437
        %7366 = vmatprep.subr.bf16.mxu0 %v6434
        %7367 = vmatpush1.bf16.msra.mxu0 %v6433
        %7368 = vmatprep.subr.bf16.mxu0 %v6430
        %7369 = vmatpush1.bf16.msra.mxu0 %v6429
        %7370 = vmatprep.subr.bf16.mxu0 %v6426
        %7371 = vmatpush1.bf16.msra.mxu0 %v6425
        %7372 = vmatprep.subr.bf16.mxu0 %v6422
        %7373 = vmatpush1.bf16.msra.mxu0 %v6421
        %7374 = vmatprep.subr.bf16.mxu0 %v6418
        %7375 = vmatpush1.bf16.msra.mxu0 %v6417
        %7376 = vmatprep.subr.bf16.mxu0 %v6414
        %7377 = vmatpush1.bf16.msra.mxu0 %v6413
        %7378 = vmatprep.subr.bf16.mxu0 %v6410
        %7379 = vmatpush1.bf16.msra.mxu0 %v6409
        %7380 = vmatprep.subr.bf16.mxu0 %v6470
        %7381 = vmatpush2.bf16.msra.mxu0 %v6469
        %7382 = vmatprep.subr.bf16.mxu0 %v6466
        %7383 = vmatpush2.bf16.msra.mxu0 %v6465
        %7384 = vmatprep.subr.bf16.mxu0 %v6462
        %7385 = vmatpush2.bf16.msra.mxu0 %v6461
        %7386 = vmatprep.subr.bf16.mxu0 %v6458
        %7387 = vmatpush2.bf16.msra.mxu0 %v6457
        %7388 = vmatprep.subr.bf16.mxu0 %v6454
        %7389 = vmatpush2.bf16.msra.mxu0 %v6453
        %7390 = vmatprep.subr.bf16.mxu0 %v6450
        %7391 = vmatpush2.bf16.msra.mxu0 %v6449
        %7392 = vmatprep.subr.bf16.mxu0 %v6446
        %7393 = vmatpush2.bf16.msra.mxu0 %v6445
        %7394 = vmatprep.subr.bf16.mxu0 %v6442
        %7395 = vmatpush2.bf16.msra.mxu0 %v6441
        %7396 = vmatprep.mubr.bf16.mxu0 %v4138
        %7397 = vmatmul.mubr.bf16.gmra.mxu0 %v4137
        %v7398 = vpop.f32.mrf.mxu0
        %v7399 = vadd.f32 %v7358, %v7398
        %v7400 = vpop.f32.mrf.mxu0
        %v7401 = vadd.f32 %v7360, %v7400
        %v7402 = vpop.f32.mrf.mxu0
        %v7403 = vpop.f32.mrf.mxu0
        %7404 = vdwg.mxu0
        %7405 = vmatprep.subr.bf16.mxu0 %v6502
        %7406 = vmatpush1.bf16.msra.mxu0 %v6501
        %7407 = vmatprep.subr.bf16.mxu0 %v6498
        %7408 = vmatpush1.bf16.msra.mxu0 %v6497
        %7409 = vmatprep.subr.bf16.mxu0 %v6494
        %7410 = vmatpush1.bf16.msra.mxu0 %v6493
        %7411 = vmatprep.subr.bf16.mxu0 %v6490
        %7412 = vmatpush1.bf16.msra.mxu0 %v6489
        %7413 = vmatprep.subr.bf16.mxu0 %v6486
        %7414 = vmatpush1.bf16.msra.mxu0 %v6485
        %7415 = vmatprep.subr.bf16.mxu0 %v6482
        %7416 = vmatpush1.bf16.msra.mxu0 %v6481
        %7417 = vmatprep.subr.bf16.mxu0 %v6478
        %7418 = vmatpush1.bf16.msra.mxu0 %v6477
        %7419 = vmatprep.subr.bf16.mxu0 %v6474
        %7420 = vmatpush1.bf16.msra.mxu0 %v6473
        %7421 = vmatprep.subr.bf16.mxu0 %v6534
        %7422 = vmatpush2.bf16.msra.mxu0 %v6533
        %7423 = vmatprep.subr.bf16.mxu0 %v6530
        %7424 = vmatpush2.bf16.msra.mxu0 %v6529
        %7425 = vmatprep.subr.bf16.mxu0 %v6526
        %7426 = vmatpush2.bf16.msra.mxu0 %v6525
        %7427 = vmatprep.subr.bf16.mxu0 %v6522
        %7428 = vmatpush2.bf16.msra.mxu0 %v6521
        %7429 = vmatprep.subr.bf16.mxu0 %v6518
        %7430 = vmatpush2.bf16.msra.mxu0 %v6517
        %7431 = vmatprep.subr.bf16.mxu0 %v6514
        %7432 = vmatpush2.bf16.msra.mxu0 %v6513
        %7433 = vmatprep.subr.bf16.mxu0 %v6510
        %7434 = vmatpush2.bf16.msra.mxu0 %v6509
        %7435 = vmatprep.subr.bf16.mxu0 %v6506
        %7436 = vmatpush2.bf16.msra.mxu0 %v6505
        %7437 = vmatprep.mubr.bf16.mxu0 %v4140
        %7438 = vmatmul.mubr.bf16.gmra.mxu0 %v4139
        %v7439 = vpop.f32.mrf.mxu0
        %v7440 = vadd.f32 %v7399, %v7439
        %v7441 = vpop.f32.mrf.mxu0
        %v7442 = vadd.f32 %v7401, %v7441
        %v7443 = vpop.f32.mrf.mxu0
        %v7444 = vpop.f32.mrf.mxu0
        %7445 = vdwg.mxu0
        %7446 = vmatprep.subr.bf16.mxu0 %v6566
        %7447 = vmatpush1.bf16.msra.mxu0 %v6565
        %7448 = vmatprep.subr.bf16.mxu0 %v6562
        %7449 = vmatpush1.bf16.msra.mxu0 %v6561
        %7450 = vmatprep.subr.bf16.mxu0 %v6558
        %7451 = vmatpush1.bf16.msra.mxu0 %v6557
        %7452 = vmatprep.subr.bf16.mxu0 %v6554
        %7453 = vmatpush1.bf16.msra.mxu0 %v6553
        %7454 = vmatprep.subr.bf16.mxu0 %v6550
        %7455 = vmatpush1.bf16.msra.mxu0 %v6549
        %7456 = vmatprep.subr.bf16.mxu0 %v6546
        %7457 = vmatpush1.bf16.msra.mxu0 %v6545
        %7458 = vmatprep.subr.bf16.mxu0 %v6542
        %7459 = vmatpush1.bf16.msra.mxu0 %v6541
        %7460 = vmatprep.subr.bf16.mxu0 %v6538
        %7461 = vmatpush1.bf16.msra.mxu0 %v6537
        %7462 = vmatprep.subr.bf16.mxu0 %v6598
        %7463 = vmatpush2.bf16.msra.mxu0 %v6597
        %7464 = vmatprep.subr.bf16.mxu0 %v6594
        %7465 = vmatpush2.bf16.msra.mxu0 %v6593
        %7466 = vmatprep.subr.bf16.mxu0 %v6590
        %7467 = vmatpush2.bf16.msra.mxu0 %v6589
        %7468 = vmatprep.subr.bf16.mxu0 %v6586
        %7469 = vmatpush2.bf16.msra.mxu0 %v6585
        %7470 = vmatprep.subr.bf16.mxu0 %v6582
        %7471 = vmatpush2.bf16.msra.mxu0 %v6581
        %7472 = vmatprep.subr.bf16.mxu0 %v6578
        %7473 = vmatpush2.bf16.msra.mxu0 %v6577
        %7474 = vmatprep.subr.bf16.mxu0 %v6574
        %7475 = vmatpush2.bf16.msra.mxu0 %v6573
        %7476 = vmatprep.subr.bf16.mxu0 %v6570
        %7477 = vmatpush2.bf16.msra.mxu0 %v6569
        %7478 = vmatprep.mubr.bf16.mxu0 %v4142
        %7479 = vmatmul.mubr.bf16.gmra.mxu0 %v4141
        %v7480 = vpop.f32.mrf.mxu0
        %v7481 = vadd.f32 %v7440, %v7480
        %v7482 = vpop.f32.mrf.mxu0
        %v7483 = vadd.f32 %v7442, %v7482
        %v7484 = vpop.f32.mrf.mxu0
        %v7485 = vpop.f32.mrf.mxu0
        %7486 = vdwg.mxu0
        %7487 = vmatprep.subr.bf16.mxu0 %v6630
        %7488 = vmatpush1.bf16.msra.mxu0 %v6629
        %7489 = vmatprep.subr.bf16.mxu0 %v6626
        %7490 = vmatpush1.bf16.msra.mxu0 %v6625
        %7491 = vmatprep.subr.bf16.mxu0 %v6622
        %7492 = vmatpush1.bf16.msra.mxu0 %v6621
        %7493 = vmatprep.subr.bf16.mxu0 %v6618
        %7494 = vmatpush1.bf16.msra.mxu0 %v6617
        %7495 = vmatprep.subr.bf16.mxu0 %v6614
        %7496 = vmatpush1.bf16.msra.mxu0 %v6613
        %7497 = vmatprep.subr.bf16.mxu0 %v6610
        %7498 = vmatpush1.bf16.msra.mxu0 %v6609
        %7499 = vmatprep.subr.bf16.mxu0 %v6606
        %7500 = vmatpush1.bf16.msra.mxu0 %v6605
        %7501 = vmatprep.subr.bf16.mxu0 %v6602
        %7502 = vmatpush1.bf16.msra.mxu0 %v6601
        %7503 = vmatprep.subr.bf16.mxu0 %v6662
        %7504 = vmatpush2.bf16.msra.mxu0 %v6661
        %7505 = vmatprep.subr.bf16.mxu0 %v6658
        %7506 = vmatpush2.bf16.msra.mxu0 %v6657
        %7507 = vmatprep.subr.bf16.mxu0 %v6654
        %7508 = vmatpush2.bf16.msra.mxu0 %v6653
        %7509 = vmatprep.subr.bf16.mxu0 %v6650
        %7510 = vmatpush2.bf16.msra.mxu0 %v6649
        %7511 = vmatprep.subr.bf16.mxu0 %v6646
        %7512 = vmatpush2.bf16.msra.mxu0 %v6645
        %7513 = vmatprep.subr.bf16.mxu0 %v6642
        %7514 = vmatpush2.bf16.msra.mxu0 %v6641
        %7515 = vmatprep.subr.bf16.mxu0 %v6638
        %7516 = vmatpush2.bf16.msra.mxu0 %v6637
        %7517 = vmatprep.subr.bf16.mxu0 %v6634
        %7518 = vmatpush2.bf16.msra.mxu0 %v6633
        %7519 = vmatprep.mubr.bf16.mxu0 %v4144
        %7520 = vmatmul.mubr.bf16.gmra.mxu0 %v4143
        %v7521 = vpop.f32.mrf.mxu0
        %v7522 = vadd.f32 %v7481, %v7521
        %v7523 = vpop.f32.mrf.mxu0
        %v7524 = vadd.f32 %v7483, %v7523
        %v7525 = vpop.f32.mrf.mxu0
        %v7526 = vpop.f32.mrf.mxu0
        %7527 = vdwg.mxu0
        %7528 = vmatprep.subr.bf16.mxu0 %v6694
        %7529 = vmatpush1.bf16.msra.mxu0 %v6693
        %7530 = vmatprep.subr.bf16.mxu0 %v6690
        %7531 = vmatpush1.bf16.msra.mxu0 %v6689
        %7532 = vmatprep.subr.bf16.mxu0 %v6686
        %7533 = vmatpush1.bf16.msra.mxu0 %v6685
        %7534 = vmatprep.subr.bf16.mxu0 %v6682
        %7535 = vmatpush1.bf16.msra.mxu0 %v6681
        %7536 = vmatprep.subr.bf16.mxu0 %v6678
        %7537 = vmatpush1.bf16.msra.mxu0 %v6677
        %7538 = vmatprep.subr.bf16.mxu0 %v6674
        %7539 = vmatpush1.bf16.msra.mxu0 %v6673
        %7540 = vmatprep.subr.bf16.mxu0 %v6670
        %7541 = vmatpush1.bf16.msra.mxu0 %v6669
        %7542 = vmatprep.subr.bf16.mxu0 %v6666
        %7543 = vmatpush1.bf16.msra.mxu0 %v6665
        %7544 = vmatprep.subr.bf16.mxu0 %v6726
        %7545 = vmatpush2.bf16.msra.mxu0 %v6725
        %7546 = vmatprep.subr.bf16.mxu0 %v6722
        %7547 = vmatpush2.bf16.msra.mxu0 %v6721
        %7548 = vmatprep.subr.bf16.mxu0 %v6718
        %7549 = vmatpush2.bf16.msra.mxu0 %v6717
        %7550 = vmatprep.subr.bf16.mxu0 %v6714
        %7551 = vmatpush2.bf16.msra.mxu0 %v6713
        %7552 = vmatprep.subr.bf16.mxu0 %v6710
        %7553 = vmatpush2.bf16.msra.mxu0 %v6709
        %7554 = vmatprep.subr.bf16.mxu0 %v6706
        %7555 = vmatpush2.bf16.msra.mxu0 %v6705
        %7556 = vmatprep.subr.bf16.mxu0 %v6702
        %7557 = vmatpush2.bf16.msra.mxu0 %v6701
        %7558 = vmatprep.subr.bf16.mxu0 %v6698
        %7559 = vmatpush2.bf16.msra.mxu0 %v6697
        %7560 = vmatprep.mubr.bf16.mxu0 %v4146
        %7561 = vmatmul.mubr.bf16.gmra.mxu0 %v4145
        %v7562 = vpop.f32.mrf.mxu0
        %v7563 = vadd.f32 %v7522, %v7562
        %v7564 = vpop.f32.mrf.mxu0
        %v7565 = vadd.f32 %v7524, %v7564
        %v7566 = vpop.f32.mrf.mxu0
        %v7567 = vpop.f32.mrf.mxu0
        %7568 = vdwg.mxu0
        %7569 = vmatprep.subr.bf16.mxu0 %v6248
        %7570 = vmatpush1.bf16.msra.mxu0 %v6247
        %7571 = vmatprep.subr.bf16.mxu0 %v6244
        %7572 = vmatpush1.bf16.msra.mxu0 %v6243
        %7573 = vmatprep.subr.bf16.mxu0 %v6240
        %7574 = vmatpush1.bf16.msra.mxu0 %v6239
        %7575 = vmatprep.subr.bf16.mxu0 %v6236
        %7576 = vmatpush1.bf16.msra.mxu0 %v6235
        %7577 = vmatprep.subr.bf16.mxu0 %v6232
        %7578 = vmatpush1.bf16.msra.mxu0 %v6231
        %7579 = vmatprep.subr.bf16.mxu0 %v6228
        %7580 = vmatpush1.bf16.msra.mxu0 %v6227
        %7581 = vmatprep.subr.bf16.mxu0 %v6224
        %7582 = vmatpush1.bf16.msra.mxu0 %v6223
        %7583 = vmatprep.subr.bf16.mxu0 %v6220
        %7584 = vmatpush1.bf16.msra.mxu0 %v6219
        %7585 = vmatprep.subr.bf16.mxu0 %v6280
        %7586 = vmatpush2.bf16.msra.mxu0 %v6279
        %7587 = vmatprep.subr.bf16.mxu0 %v6276
        %7588 = vmatpush2.bf16.msra.mxu0 %v6275
        %7589 = vmatprep.subr.bf16.mxu0 %v6272
        %7590 = vmatpush2.bf16.msra.mxu0 %v6271
        %7591 = vmatprep.subr.bf16.mxu0 %v6268
        %7592 = vmatpush2.bf16.msra.mxu0 %v6267
        %7593 = vmatprep.subr.bf16.mxu0 %v6264
        %7594 = vmatpush2.bf16.msra.mxu0 %v6263
        %7595 = vmatprep.subr.bf16.mxu0 %v6260
        %7596 = vmatpush2.bf16.msra.mxu0 %v6259
        %7597 = vmatprep.subr.bf16.mxu0 %v6256
        %7598 = vmatpush2.bf16.msra.mxu0 %v6255
        %7599 = vmatprep.subr.bf16.mxu0 %v6252
        %7600 = vmatpush2.bf16.msra.mxu0 %v6251
        %7601 = vmatprep.mubr.bf16.mxu0 %v4132
        %7602 = vmatmul.mubr.bf16.gmra.mxu0 %v4131
        %v7603 = vpop.f32.mrf.mxu0
        %v7604 = vadd.f32 %v4672, %v7603
        %v7605 = vpop.f32.mrf.mxu0
        %v7606 = vadd.f32 %v4676, %v7605
        %v7607 = vpop.f32.mrf.mxu0
        %v7608 = vpop.f32.mrf.mxu0
        %7609 = vdwg.mxu0
        %7610 = vmatprep.subr.bf16.mxu0 %v6312
        %7611 = vmatpush1.bf16.msra.mxu0 %v6311
        %7612 = vmatprep.subr.bf16.mxu0 %v6308
        %7613 = vmatpush1.bf16.msra.mxu0 %v6307
        %7614 = vmatprep.subr.bf16.mxu0 %v6304
        %7615 = vmatpush1.bf16.msra.mxu0 %v6303
        %7616 = vmatprep.subr.bf16.mxu0 %v6300
        %7617 = vmatpush1.bf16.msra.mxu0 %v6299
        %7618 = vmatprep.subr.bf16.mxu0 %v6296
        %7619 = vmatpush1.bf16.msra.mxu0 %v6295
        %7620 = vmatprep.subr.bf16.mxu0 %v6292
        %7621 = vmatpush1.bf16.msra.mxu0 %v6291
        %7622 = vmatprep.subr.bf16.mxu0 %v6288
        %7623 = vmatpush1.bf16.msra.mxu0 %v6287
        %7624 = vmatprep.subr.bf16.mxu0 %v6284
        %7625 = vmatpush1.bf16.msra.mxu0 %v6283
        %7626 = vmatprep.subr.bf16.mxu0 %v6344
        %7627 = vmatpush2.bf16.msra.mxu0 %v6343
        %7628 = vmatprep.subr.bf16.mxu0 %v6340
        %7629 = vmatpush2.bf16.msra.mxu0 %v6339
        %7630 = vmatprep.subr.bf16.mxu0 %v6336
        %7631 = vmatpush2.bf16.msra.mxu0 %v6335
        %7632 = vmatprep.subr.bf16.mxu0 %v6332
        %7633 = vmatpush2.bf16.msra.mxu0 %v6331
        %7634 = vmatprep.subr.bf16.mxu0 %v6328
        %7635 = vmatpush2.bf16.msra.mxu0 %v6327
        %7636 = vmatprep.subr.bf16.mxu0 %v6324
        %7637 = vmatpush2.bf16.msra.mxu0 %v6323
        %7638 = vmatprep.subr.bf16.mxu0 %v6320
        %7639 = vmatpush2.bf16.msra.mxu0 %v6319
        %7640 = vmatprep.subr.bf16.mxu0 %v6316
        %7641 = vmatpush2.bf16.msra.mxu0 %v6315
        %7642 = vmatprep.mubr.bf16.mxu0 %v4134
        %7643 = vmatmul.mubr.bf16.gmra.mxu0 %v4133
        %v7644 = vpop.f32.mrf.mxu0
        %v7645 = vadd.f32 %v7604, %v7644
        %v7646 = vpop.f32.mrf.mxu0
        %v7647 = vadd.f32 %v7606, %v7646
        %v7648 = vpop.f32.mrf.mxu0
        %v7649 = vpop.f32.mrf.mxu0
        %7650 = vdwg.mxu0
        %7651 = vmatprep.subr.bf16.mxu0 %v6376
        %7652 = vmatpush1.bf16.msra.mxu0 %v6375
        %7653 = vmatprep.subr.bf16.mxu0 %v6372
        %7654 = vmatpush1.bf16.msra.mxu0 %v6371
        %7655 = vmatprep.subr.bf16.mxu0 %v6368
        %7656 = vmatpush1.bf16.msra.mxu0 %v6367
        %7657 = vmatprep.subr.bf16.mxu0 %v6364
        %7658 = vmatpush1.bf16.msra.mxu0 %v6363
        %7659 = vmatprep.subr.bf16.mxu0 %v6360
        %7660 = vmatpush1.bf16.msra.mxu0 %v6359
        %7661 = vmatprep.subr.bf16.mxu0 %v6356
        %7662 = vmatpush1.bf16.msra.mxu0 %v6355
        %7663 = vmatprep.subr.bf16.mxu0 %v6352
        %7664 = vmatpush1.bf16.msra.mxu0 %v6351
        %7665 = vmatprep.subr.bf16.mxu0 %v6348
        %7666 = vmatpush1.bf16.msra.mxu0 %v6347
        %7667 = vmatprep.subr.bf16.mxu0 %v6408
        %7668 = vmatpush2.bf16.msra.mxu0 %v6407
        %7669 = vmatprep.subr.bf16.mxu0 %v6404
        %7670 = vmatpush2.bf16.msra.mxu0 %v6403
        %7671 = vmatprep.subr.bf16.mxu0 %v6400
        %7672 = vmatpush2.bf16.msra.mxu0 %v6399
        %7673 = vmatprep.subr.bf16.mxu0 %v6396
        %7674 = vmatpush2.bf16.msra.mxu0 %v6395
        %7675 = vmatprep.subr.bf16.mxu0 %v6392
        %7676 = vmatpush2.bf16.msra.mxu0 %v6391
        %7677 = vmatprep.subr.bf16.mxu0 %v6388
        %7678 = vmatpush2.bf16.msra.mxu0 %v6387
        %7679 = vmatprep.subr.bf16.mxu0 %v6384
        %7680 = vmatpush2.bf16.msra.mxu0 %v6383
        %7681 = vmatprep.subr.bf16.mxu0 %v6380
        %7682 = vmatpush2.bf16.msra.mxu0 %v6379
        %7683 = vmatprep.mubr.bf16.mxu0 %v4136
        %7684 = vmatmul.mubr.bf16.gmra.mxu0 %v4135
        %v7685 = vpop.f32.mrf.mxu0
        %v7686 = vadd.f32 %v7645, %v7685
        %v7687 = vpop.f32.mrf.mxu0
        %v7688 = vadd.f32 %v7647, %v7687
        %v7689 = vpop.f32.mrf.mxu0
        %v7690 = vpop.f32.mrf.mxu0
        %7691 = vdwg.mxu0
        %7692 = vmatprep.subr.bf16.mxu0 %v6440
        %7693 = vmatpush1.bf16.msra.mxu0 %v6439
        %7694 = vmatprep.subr.bf16.mxu0 %v6436
        %7695 = vmatpush1.bf16.msra.mxu0 %v6435
        %7696 = vmatprep.subr.bf16.mxu0 %v6432
        %7697 = vmatpush1.bf16.msra.mxu0 %v6431
        %7698 = vmatprep.subr.bf16.mxu0 %v6428
        %7699 = vmatpush1.bf16.msra.mxu0 %v6427
        %7700 = vmatprep.subr.bf16.mxu0 %v6424
        %7701 = vmatpush1.bf16.msra.mxu0 %v6423
        %7702 = vmatprep.subr.bf16.mxu0 %v6420
        %7703 = vmatpush1.bf16.msra.mxu0 %v6419
        %7704 = vmatprep.subr.bf16.mxu0 %v6416
        %7705 = vmatpush1.bf16.msra.mxu0 %v6415
        %7706 = vmatprep.subr.bf16.mxu0 %v6412
        %7707 = vmatpush1.bf16.msra.mxu0 %v6411
        %7708 = vmatprep.subr.bf16.mxu0 %v6472
        %7709 = vmatpush2.bf16.msra.mxu0 %v6471
        %7710 = vmatprep.subr.bf16.mxu0 %v6468
        %7711 = vmatpush2.bf16.msra.mxu0 %v6467
        %7712 = vmatprep.subr.bf16.mxu0 %v6464
        %7713 = vmatpush2.bf16.msra.mxu0 %v6463
        %7714 = vmatprep.subr.bf16.mxu0 %v6460
        %7715 = vmatpush2.bf16.msra.mxu0 %v6459
        %7716 = vmatprep.subr.bf16.mxu0 %v6456
        %7717 = vmatpush2.bf16.msra.mxu0 %v6455
        %7718 = vmatprep.subr.bf16.mxu0 %v6452
        %7719 = vmatpush2.bf16.msra.mxu0 %v6451
        %7720 = vmatprep.subr.bf16.mxu0 %v6448
        %7721 = vmatpush2.bf16.msra.mxu0 %v6447
        %7722 = vmatprep.subr.bf16.mxu0 %v6444
        %7723 = vmatpush2.bf16.msra.mxu0 %v6443
        %7724 = vmatprep.mubr.bf16.mxu0 %v4138
        %7725 = vmatmul.mubr.bf16.gmra.mxu0 %v4137
        %v7726 = vpop.f32.mrf.mxu0
        %v7727 = vadd.f32 %v7686, %v7726
        %v7728 = vpop.f32.mrf.mxu0
        %v7729 = vadd.f32 %v7688, %v7728
        %v7730 = vpop.f32.mrf.mxu0
        %v7731 = vpop.f32.mrf.mxu0
        %7732 = vdwg.mxu0
        %7733 = vmatprep.subr.bf16.mxu0 %v6504
        %7734 = vmatpush1.bf16.msra.mxu0 %v6503
        %7735 = vmatprep.subr.bf16.mxu0 %v6500
        %7736 = vmatpush1.bf16.msra.mxu0 %v6499
        %7737 = vmatprep.subr.bf16.mxu0 %v6496
        %7738 = vmatpush1.bf16.msra.mxu0 %v6495
        %7739 = vmatprep.subr.bf16.mxu0 %v6492
        %7740 = vmatpush1.bf16.msra.mxu0 %v6491
        %7741 = vmatprep.subr.bf16.mxu0 %v6488
        %7742 = vmatpush1.bf16.msra.mxu0 %v6487
        %7743 = vmatprep.subr.bf16.mxu0 %v6484
        %7744 = vmatpush1.bf16.msra.mxu0 %v6483
        %7745 = vmatprep.subr.bf16.mxu0 %v6480
        %7746 = vmatpush1.bf16.msra.mxu0 %v6479
        %7747 = vmatprep.subr.bf16.mxu0 %v6476
        %7748 = vmatpush1.bf16.msra.mxu0 %v6475
        %7749 = vmatprep.subr.bf16.mxu0 %v6536
        %7750 = vmatpush2.bf16.msra.mxu0 %v6535
        %7751 = vmatprep.subr.bf16.mxu0 %v6532
        %7752 = vmatpush2.bf16.msra.mxu0 %v6531
        %7753 = vmatprep.subr.bf16.mxu0 %v6528
        %7754 = vmatpush2.bf16.msra.mxu0 %v6527
        %7755 = vmatprep.subr.bf16.mxu0 %v6524
        %7756 = vmatpush2.bf16.msra.mxu0 %v6523
        %7757 = vmatprep.subr.bf16.mxu0 %v6520
        %7758 = vmatpush2.bf16.msra.mxu0 %v6519
        %7759 = vmatprep.subr.bf16.mxu0 %v6516
        %7760 = vmatpush2.bf16.msra.mxu0 %v6515
        %7761 = vmatprep.subr.bf16.mxu0 %v6512
        %7762 = vmatpush2.bf16.msra.mxu0 %v6511
        %7763 = vmatprep.subr.bf16.mxu0 %v6508
        %7764 = vmatpush2.bf16.msra.mxu0 %v6507
        %7765 = vmatprep.mubr.bf16.mxu0 %v4140
        %7766 = vmatmul.mubr.bf16.gmra.mxu0 %v4139
        %v7767 = vpop.f32.mrf.mxu0
        %v7768 = vadd.f32 %v7727, %v7767
        %v7769 = vpop.f32.mrf.mxu0
        %v7770 = vadd.f32 %v7729, %v7769
        %v7771 = vpop.f32.mrf.mxu0
        %v7772 = vpop.f32.mrf.mxu0
        %7773 = vdwg.mxu0
        %7774 = vmatprep.subr.bf16.mxu0 %v6568
        %7775 = vmatpush1.bf16.msra.mxu0 %v6567
        %7776 = vmatprep.subr.bf16.mxu0 %v6564
        %7777 = vmatpush1.bf16.msra.mxu0 %v6563
        %7778 = vmatprep.subr.bf16.mxu0 %v6560
        %7779 = vmatpush1.bf16.msra.mxu0 %v6559
        %7780 = vmatprep.subr.bf16.mxu0 %v6556
        %7781 = vmatpush1.bf16.msra.mxu0 %v6555
        %7782 = vmatprep.subr.bf16.mxu0 %v6552
        %7783 = vmatpush1.bf16.msra.mxu0 %v6551
        %7784 = vmatprep.subr.bf16.mxu0 %v6548
        %7785 = vmatpush1.bf16.msra.mxu0 %v6547
        %7786 = vmatprep.subr.bf16.mxu0 %v6544
        %7787 = vmatpush1.bf16.msra.mxu0 %v6543
        %7788 = vmatprep.subr.bf16.mxu0 %v6540
        %7789 = vmatpush1.bf16.msra.mxu0 %v6539
        %7790 = vmatprep.subr.bf16.mxu0 %v6600
        %7791 = vmatpush2.bf16.msra.mxu0 %v6599
        %7792 = vmatprep.subr.bf16.mxu0 %v6596
        %7793 = vmatpush2.bf16.msra.mxu0 %v6595
        %7794 = vmatprep.subr.bf16.mxu0 %v6592
        %7795 = vmatpush2.bf16.msra.mxu0 %v6591
        %7796 = vmatprep.subr.bf16.mxu0 %v6588
        %7797 = vmatpush2.bf16.msra.mxu0 %v6587
        %7798 = vmatprep.subr.bf16.mxu0 %v6584
        %7799 = vmatpush2.bf16.msra.mxu0 %v6583
        %7800 = vmatprep.subr.bf16.mxu0 %v6580
        %7801 = vmatpush2.bf16.msra.mxu0 %v6579
        %7802 = vmatprep.subr.bf16.mxu0 %v6576
        %7803 = vmatpush2.bf16.msra.mxu0 %v6575
        %7804 = vmatprep.subr.bf16.mxu0 %v6572
        %7805 = vmatpush2.bf16.msra.mxu0 %v6571
        %7806 = vmatprep.mubr.bf16.mxu0 %v4142
        %7807 = vmatmul.mubr.bf16.gmra.mxu0 %v4141
        %v7808 = vpop.f32.mrf.mxu0
        %v7809 = vadd.f32 %v7768, %v7808
        %v7810 = vpop.f32.mrf.mxu0
        %v7811 = vadd.f32 %v7770, %v7810
        %v7812 = vpop.f32.mrf.mxu0
        %v7813 = vpop.f32.mrf.mxu0
        %7814 = vdwg.mxu0
        %7815 = vmatprep.subr.bf16.mxu0 %v6632
        %7816 = vmatpush1.bf16.msra.mxu0 %v6631
        %7817 = vmatprep.subr.bf16.mxu0 %v6628
        %7818 = vmatpush1.bf16.msra.mxu0 %v6627
        %7819 = vmatprep.subr.bf16.mxu0 %v6624
        %7820 = vmatpush1.bf16.msra.mxu0 %v6623
        %7821 = vmatprep.subr.bf16.mxu0 %v6620
        %7822 = vmatpush1.bf16.msra.mxu0 %v6619
        %7823 = vmatprep.subr.bf16.mxu0 %v6616
        %7824 = vmatpush1.bf16.msra.mxu0 %v6615
        %7825 = vmatprep.subr.bf16.mxu0 %v6612
        %7826 = vmatpush1.bf16.msra.mxu0 %v6611
        %7827 = vmatprep.subr.bf16.mxu0 %v6608
        %7828 = vmatpush1.bf16.msra.mxu0 %v6607
        %7829 = vmatprep.subr.bf16.mxu0 %v6604
        %7830 = vmatpush1.bf16.msra.mxu0 %v6603
        %7831 = vmatprep.subr.bf16.mxu0 %v6664
        %7832 = vmatpush2.bf16.msra.mxu0 %v6663
        %7833 = vmatprep.subr.bf16.mxu0 %v6660
        %7834 = vmatpush2.bf16.msra.mxu0 %v6659
        %7835 = vmatprep.subr.bf16.mxu0 %v6656
        %7836 = vmatpush2.bf16.msra.mxu0 %v6655
        %7837 = vmatprep.subr.bf16.mxu0 %v6652
        %7838 = vmatpush2.bf16.msra.mxu0 %v6651
        %7839 = vmatprep.subr.bf16.mxu0 %v6648
        %7840 = vmatpush2.bf16.msra.mxu0 %v6647
        %7841 = vmatprep.subr.bf16.mxu0 %v6644
        %7842 = vmatpush2.bf16.msra.mxu0 %v6643
        %7843 = vmatprep.subr.bf16.mxu0 %v6640
        %7844 = vmatpush2.bf16.msra.mxu0 %v6639
        %7845 = vmatprep.subr.bf16.mxu0 %v6636
        %7846 = vmatpush2.bf16.msra.mxu0 %v6635
        %7847 = vmatprep.mubr.bf16.mxu0 %v4144
        %7848 = vmatmul.mubr.bf16.gmra.mxu0 %v4143
        %v7849 = vpop.f32.mrf.mxu0
        %v7850 = vadd.f32 %v7809, %v7849
        %v7851 = vpop.f32.mrf.mxu0
        %v7852 = vadd.f32 %v7811, %v7851
        %v7853 = vpop.f32.mrf.mxu0
        %v7854 = vpop.f32.mrf.mxu0
        %7855 = vdwg.mxu0
        %7856 = vmatprep.subr.bf16.mxu0 %v6696
        %7857 = vmatpush1.bf16.msra.mxu0 %v6695
        %7858 = vmatprep.subr.bf16.mxu0 %v6692
        %7859 = vmatpush1.bf16.msra.mxu0 %v6691
        %7860 = vmatprep.subr.bf16.mxu0 %v6688
        %7861 = vmatpush1.bf16.msra.mxu0 %v6687
        %7862 = vmatprep.subr.bf16.mxu0 %v6684
        %7863 = vmatpush1.bf16.msra.mxu0 %v6683
        %7864 = vmatprep.subr.bf16.mxu0 %v6680
        %7865 = vmatpush1.bf16.msra.mxu0 %v6679
        %7866 = vmatprep.subr.bf16.mxu0 %v6676
        %7867 = vmatpush1.bf16.msra.mxu0 %v6675
        %7868 = vmatprep.subr.bf16.mxu0 %v6672
        %7869 = vmatpush1.bf16.msra.mxu0 %v6671
        %7870 = vmatprep.subr.bf16.mxu0 %v6668
        %7871 = vmatpush1.bf16.msra.mxu0 %v6667
        %7872 = vmatprep.subr.bf16.mxu0 %v6728
        %7873 = vmatpush2.bf16.msra.mxu0 %v6727
        %7874 = vmatprep.subr.bf16.mxu0 %v6724
        %7875 = vmatpush2.bf16.msra.mxu0 %v6723
        %7876 = vmatprep.subr.bf16.mxu0 %v6720
        %7877 = vmatpush2.bf16.msra.mxu0 %v6719
        %7878 = vmatprep.subr.bf16.mxu0 %v6716
        %7879 = vmatpush2.bf16.msra.mxu0 %v6715
        %7880 = vmatprep.subr.bf16.mxu0 %v6712
        %7881 = vmatpush2.bf16.msra.mxu0 %v6711
        %7882 = vmatprep.subr.bf16.mxu0 %v6708
        %7883 = vmatpush2.bf16.msra.mxu0 %v6707
        %7884 = vmatprep.subr.bf16.mxu0 %v6704
        %7885 = vmatpush2.bf16.msra.mxu0 %v6703
        %7886 = vmatprep.subr.bf16.mxu0 %v6700
        %7887 = vmatpush2.bf16.msra.mxu0 %v6699
        %7888 = vmatprep.mubr.bf16.mxu0 %v4146
        %7889 = vmatmul.mubr.bf16.gmra.mxu0 %v4145
        %v7890 = vpop.f32.mrf.mxu0
        %v7891 = vadd.f32 %v7850, %v7890
        %v7892 = vpop.f32.mrf.mxu0
        %v7893 = vadd.f32 %v7852, %v7892
        %v7894 = vpop.f32.mrf.mxu0
        %v7895 = vpop.f32.mrf.mxu0
        %7896 = vdwg.mxu0
        %7897 = vst [vmem:[%s294] sm:$0xff] %v7563
        %7898 = vst [vmem:[%s294 + $0x8] sm:$0xff] %v7565
        %7899 = vst [vmem:[%s294 + $0x10] sm:$0xff] %v7891
        %7900 = vst [vmem:[%s294 + $0x18] sm:$0xff] %v7893
        %s7901 = sand.u32 %s142, 1
        %s7902 = scalar_lea.sflag [#allocation4], %s7901
        %s7903 = sand.u32 %s142, 1
        %s7904 = smul.addr %s7903, 32
        %s7905 = scalar_lea.vmem [#allocation11], %s7904
        // Predicated region
        $region61: #{tpu_custom_call.1} parent=39 // pred_check
          %p7906 = pneg %p152
        $region62: #{tpu_custom_call.1} parent=39 // pred_check_branch
          %7908 = sbr.rel (%p7906) target = $region64
        $region63: #{tpu_custom_call.1} parent=39 // pred_region
          %s7910 = ssub.s32 512, 512
          %7911 = vsyncadd %s7902, %s7910
          %s7912 = smul.addr %s24, 4
          %s7913 = smul.addr %s7912, 128
          %s7914 = scalar_lea.hbm %s5, %s7913
          %s7916 = sshll.u32 %s7905, 4
          %s7917 = int_to_ptr.vmem [resolvable:$true] %s7916
          %7919 = dma.vmem_to_hbm [thread:$0]  %s7917, 512, %s7914, %s7902
        $region64: #{tpu_custom_call.1} parent=39 // pred_fallthru
          _
      $region40: #{tpu_custom_call.1} parent=5 // pred_fallthru
        _
      %p7920 = scmp.le.s32.totalorder 2, %s19
      // Predicated region
      $region65: #{tpu_custom_call.1} parent=5 // pred_check
        %p7921 = pneg %p7920
      $region66: #{tpu_custom_call.1} parent=5 // pred_check_branch
        %7923 = sbr.rel (%p7921) target = $region68
      $region67: #{tpu_custom_call.1} parent=5 // pred_region
        %s7924 = ssub.s32 %s19, 2
        // Predicated region
        $region69: #{tpu_custom_call.1} parent=67 // pred_check
          %p7925 = pneg %p158
        $region70: #{tpu_custom_call.1} parent=67 // pred_check_branch
          %7927 = sbr.rel (%p7925) target = $region72
        $region71: #{tpu_custom_call.1} parent=67 // pred_region
          %s7928 = sand.u32 %s143, 1
          %s7929 = scalar_lea.sflag [#allocation4], %s7928
          %s7930 = sand.u32 %s143, 1
          %s7931 = smul.addr %s7930, 32
          %s7932 = scalar_lea.vmem [#allocation11], %s7931
          %7933 = dma.done %s7929, 512
        $region72: #{tpu_custom_call.1} parent=67 // pred_fallthru
          _
      $region68: #{tpu_custom_call.1} parent=5 // pred_fallthru
        _
    $region6: #{tpu_custom_call.1} parent=1 // loop_footer
      %s23 = sadd.s32 1, %s19
    $region7: #{tpu_custom_call.1} parent=1 // loop_footer_branch
      %18 = sbr.rel target = $region3
    $region8: #{tpu_custom_call.1} parent=1 // loop_exit
      _
    %7934 = vsyncpa [#allocation3], 1
    %s7935 = scalar_lea.sflag [#allocation3], 1
    %7936 = vsyncpa %s7935, 1
    %7937 = vsyncpa [#allocation6], 1
    %7938 = vsyncpa [#allocation9], 1
    %7939 = vsyncpa [#allocation4], 1
    %s7940 = scalar_lea.sflag [#allocation4], 1
    %7941 = vsyncpa %s7940, 1

</llo_original>
